<compile_context>
chip_gen: v7x
topology: tpu7x:2x2x1
jax: 0.10.0
libtpu: 0.0.40
codegen_flags: <defaults>
</compile_context>

<pallas_src>
import functools

import jax
import jax.numpy as jnp
from jax.experimental import pallas as pl
from jax.experimental.pallas import tpu as pltpu


def encoder_layer_kernel(h_ref, adj_ref, wa_ref, w2_ref, p_ref, o_ref,
                         *, d_model: int, num_heads: int):
    eps = 1e-5
    D = d_model
    H = num_heads
    dh = D // H
    f32 = jnp.float32

    h_bf = h_ref[...]                          # [N, D] bf16 node features
    h_in1 = h_bf.astype(f32)                   # residual path in f32

    # ---- fused QKV projection: one [N, D] x [D, 3D] MXU matmul -------------
    # Weight columns are packed HEAD-MAJOR: [h0:(q|k|v) | h1:(q|k|v) | ...],
    # with the 1/sqrt(dh) score scale pre-folded into the q columns / bias.
    qkv = jnp.dot(h_bf, wa_ref[:, 0:3 * D], preferred_element_type=f32)
    qkv = (qkv + p_ref[0:1, 0:3 * D]).astype(jnp.bfloat16)        # [N, 3D]

    # ---- heads onto a leading (major) axis: no lane-sparse masked stores ---
    per_head = jnp.stack(
        [qkv[:, hd * 3 * dh:(hd + 1) * 3 * dh] for hd in range(H)], axis=0)  # [H,N,3dh]
    q = per_head[:, :, 0:dh]                   # [H, N, dh] bf16
    k = per_head[:, :, dh:2 * dh]
    v = per_head[:, :, 2 * dh:3 * dh]

    # additive graph mask bias (head-invariant); adjacency ships as bf16 0/1
    bias = (adj_ref[...].astype(f32) - 1.0) * 1e9                 # [N, N]

    # ---- batched masked attention (all heads in one dot_general) -----------
    # TODO(synk): for N >~ 2K (v7x 64 MiB VMEM) tile the KV axis with a second
    # grid dim + online softmax instead of keeping the full [N, N] bias tile.
    s = jnp.einsum('hnd,hmd->hnm', q, k, preferred_element_type=f32)   # [H,N,N]
    s = s + bias[None, :, :]
    m = jnp.max(s, axis=-1, keepdims=True)
    p = jnp.exp(s - m)
    inv = pl.reciprocal(jnp.sum(p, axis=-1, keepdims=True), approx=True)   # EUP slot
    p = (p * inv).astype(jnp.bfloat16)
    att = jnp.einsum('hnm,hmd->hnd', p, v, preferred_element_type=f32)  # [H,N,dh]

    # lane-dense [N, D] slab (== attn_out.view(-1, d_model)); no VMEM scratch
    attn = jnp.concatenate([att[hd] for hd in range(H)], axis=-1)       # [N, D] f32

    # dropout1: identity (p = 0.0 / eval mode)
    # ---- W_o projection + residual + LayerNorm (norm_part1) ----------------
    h1 = jnp.dot(attn.astype(jnp.bfloat16), wa_ref[:, 3 * D:4 * D],
                 preferred_element_type=f32) + p_ref[1:2, 0:D]
    x = h_in1 + h1
    mu = jnp.mean(x, axis=-1, keepdims=True)
    xc = x - mu
    var = jnp.mean(xc * xc, axis=-1, keepdims=True)        # two-pass variance
    x = xc * jax.lax.rsqrt(var + eps) * p_ref[4:5, 0:D] + p_ref[5:6, 0:D]

    # ---- FFN: Linear(D->2D) -> ReLU -> (dropout2 identity) -> Linear(2D->D) -
    f = jnp.dot(x.astype(jnp.bfloat16), wa_ref[:, 4 * D:6 * D],
                preferred_element_type=f32) + p_ref[2:3, 0:2 * D]
    f = jnp.maximum(f, 0.0)
    f = jnp.dot(f.astype(jnp.bfloat16), w2_ref[...],
                preferred_element_type=f32) + p_ref[3:4, 0:D]

    # ---- residual + LayerNorm (norm_part2) ----------------------------------
    y = x + f
    mu2 = jnp.mean(y, axis=-1, keepdims=True)
    yc = y - mu2
    var2 = jnp.mean(yc * yc, axis=-1, keepdims=True)
    y = yc * jax.lax.rsqrt(var2 + eps) * p_ref[6:7, 0:D] + p_ref[7:8, 0:D]

    o_ref[...] = y.astype(o_ref.dtype)


def pack_encoder_params(params, *, d_model: int, num_heads: int):
    """One-time weight packing (hoisted out of the per-call hot path)."""
    D = d_model
    H = num_heads
    dh = D // H
    scale = 1.0 / (dh ** 0.5)

    def t(w):   # PyTorch [out, in] -> [in, out]
        return jnp.asarray(w, jnp.float32).T

    wq_t = t(params['wq']) * scale          # fold score scale into Wq (and bq)
    wk_t = t(params['wk'])
    wv_t = t(params['wv'])

    # head-major QKV column order: [h0:(q|k|v) | h1:(q|k|v) | ...]
    qkv_cols = []
    for hd in range(H):
        sl = slice(hd * dh, (hd + 1) * dh)
        qkv_cols += [wq_t[:, sl], wk_t[:, sl], wv_t[:, sl]]
    wa = jnp.concatenate(qkv_cols + [t(params['wo']), t(params['w1'])], axis=1)  # [D, 6D]
    w2 = t(params['w2'])                                                         # [2D, D]

    bq = jnp.asarray(params['bq'], jnp.float32) * scale
    bk = jnp.asarray(params['bk'], jnp.float32)
    bv = jnp.asarray(params['bv'], jnp.float32)
    bqkv = jnp.concatenate(
        [jnp.concatenate([bq[hd * dh:(hd + 1) * dh],
                          bk[hd * dh:(hd + 1) * dh],
                          bv[hd * dh:(hd + 1) * dh]]) for hd in range(H)])       # [3D]

    W = 3 * D

    def row(v):
        v = jnp.asarray(v, jnp.float32).reshape(-1)
        return jnp.pad(v, (0, W - v.shape[0]))

    pslab = jnp.stack([
        row(bqkv),                                # row 0: head-major qkv bias (q pre-scaled)
        row(params['bo']),                        # row 1
        row(params['b1']),                        # row 2
        row(params['b2']),                        # row 3
        row(params['ln1_g']), row(params['ln1_b']),   # rows 4,5
        row(params['ln2_g']), row(params['ln2_b']),   # rows 6,7
    ])                                            # [8, 3D] f32 (biases/LN stay f32)

    return (wa.astype(jnp.bfloat16), w2.astype(jnp.bfloat16), pslab)


def make_encoder_layer(packed, *, d_model: int, num_heads: int):
    """Returns a jitted apply(h, adj) -> [B, N, D] using pre-packed weights."""
    wa, w2, pslab = packed
    D = d_model
    kernel = functools.partial(encoder_layer_kernel, d_model=D, num_heads=num_heads)

    @jax.jit
    def apply(h, adj):
        # h: [B, N, D] bf16 node features; adj: [B, N, N] bf16 0/1 (with self-loops)
        B, N, _ = h.shape
        flops = int(B * (16 * N * D * D + 4 * N * N * D))
        transcendentals = int(B * (num_heads * N * N + num_heads * N + 2 * N))
        bytes_accessed = int(2 * (h.size + adj.size + wa.size + w2.size)
                             + 4 * pslab.size + 4 * B * N * D)
        return pl.pallas_call(
            kernel,
            out_shape=jax.ShapeDtypeStruct((B, N, D), jnp.float32),
            grid=(B,),
            in_specs=[
                pl.BlockSpec((None, N, D), lambda b: (b, 0, 0)),   # node features
                pl.BlockSpec((None, N, N), lambda b: (b, 0, 0)),   # adjacency (bf16 0/1)
                pl.BlockSpec((D, 6 * D), lambda b: (0, 0)),        # Wq|Wk|Wv|Wo|W1 slab
                pl.BlockSpec((2 * D, D), lambda b: (0, 0)),        # W2
                pl.BlockSpec((8, 3 * D), lambda b: (0, 0)),        # biases / LayerNorm
            ],
            out_specs=pl.BlockSpec((None, N, D), lambda b: (b, 0, 0)),
            compiler_params=pltpu.CompilerParams(
                dimension_semantics=("parallel",),     # shard graphs over v7x's 2 TCs
                vmem_limit_bytes=32 * 1024 * 1024),
            cost_estimate=pl.CostEstimate(flops=flops,
                                          transcendentals=transcendentals,
                                          bytes_accessed=bytes_accessed),
        )(h, adj, wa, w2, pslab)

    return apply


def _reference(h, adj, params, *, d_model, num_heads):
    """Pure-JAX f32 reference of the same forward pass (sanity check)."""
    eps = 1e-5
    dh = d_model // num_heads
    B, N, _ = h.shape
    q = h @ params['wq'].T + params['bq']
    k = h @ params['wk'].T + params['bk']
    v = h @ params['wv'].T + params['bv']
    qh = q.reshape(B, N, num_heads, dh).transpose(0, 2, 1, 3)
    kh = k.reshape(B, N, num_heads, dh).transpose(0, 2, 1, 3)
    vh = v.reshape(B, N, num_heads, dh).transpose(0, 2, 1, 3)
    s = jnp.einsum('bhnd,bhmd->bhnm', qh, kh) / (dh ** 0.5)
    s = jnp.where(adj[:, None] > 0, s, -1e9)
    p = jax.nn.softmax(s, axis=-1)
    attn = jnp.einsum('bhnm,bhmd->bhnd', p, vh).transpose(0, 2, 1, 3).reshape(B, N, d_model)
    h1 = attn @ params['wo'].T + params['bo']
    x = h + h1
    mu = x.mean(-1, keepdims=True)
    var = ((x - mu) ** 2).mean(-1, keepdims=True)
    x = (x - mu) / jnp.sqrt(var + eps) * params['ln1_g'] + params['ln1_b']
    f = jnp.maximum(x @ params['w1'].T + params['b1'], 0.0)
    f = f @ params['w2'].T + params['b2']
    y = x + f
    mu2 = y.mean(-1, keepdims=True)
    var2 = ((y - mu2) ** 2).mean(-1, keepdims=True)
    return (y - mu2) / jnp.sqrt(var2 + eps) * params['ln2_g'] + params['ln2_b']


if __name__ == "__main__":
    # Small but MXU/lane-friendly: B=2 graphs, N=128 nodes, d_model=128, 4 heads.
    B, N, D, H = 2, 128, 128, 4

    key = jax.random.PRNGKey(0)
    keys = jax.random.split(key, 16)

    def lin(kk, out_dim, in_dim):
        s = 1.0 / (in_dim ** 0.5)
        kw, kb = jax.random.split(kk)
        w = jax.random.uniform(kw, (out_dim, in_dim), jnp.float32, -s, s)
        b = jax.random.uniform(kb, (out_dim,), jnp.float32, -s, s)
        return w, b

    wq, bq = lin(keys[0], D, D)
    wk, bk = lin(keys[1], D, D)
    wv, bv = lin(keys[2], D, D)
    wo, bo = lin(keys[3], D, D)
    w1, b1 = lin(keys[4], 2 * D, D)
    w2, b2 = lin(keys[5], D, 2 * D)
    params = dict(
        wq=wq, bq=bq, wk=wk, bk=bk, wv=wv, bv=bv, wo=wo, bo=bo,
        w1=w1, b1=b1, w2=w2, b2=b2,
        ln1_g=jnp.ones((D,), jnp.float32), ln1_b=jnp.zeros((D,), jnp.float32),
        ln2_g=jnp.ones((D,), jnp.float32), ln2_b=jnp.zeros((D,), jnp.float32),
    )

    # Node features and random sparse graphs (self-loops REQUIRED by the kernel).
    h = jax.random.normal(keys[6], (B, N, D), jnp.float32)
    adj = (jax.random.uniform(keys[7], (B, N, N)) < 0.15).astype(jnp.float32)
    adj = jnp.maximum(adj, jnp.eye(N, dtype=jnp.float32)[None])

    packed = pack_encoder_params(params, d_model=D, num_heads=H)   # pack ONCE
    encoder = make_encoder_layer(packed, d_model=D, num_heads=H)

    out = jax.block_until_ready(encoder(h.astype(jnp.bfloat16),
                                        adj.astype(jnp.bfloat16)))

    # Reference in f32, fed the same bf16-rounded matmul operands as the kernel.
    def bf32(x):
        return jnp.asarray(x, jnp.bfloat16).astype(jnp.float32)

    params_ref = dict(params)
    for name in ('wq', 'wk', 'wv', 'wo', 'w1', 'w2'):
        params_ref[name] = bf32(params[name])
    ref = _reference(bf32(h), adj, params_ref, d_model=D, num_heads=H)

    assert out.shape == (B, N, D)
    err = float(jnp.max(jnp.abs(out - ref)))
    # bf16 matmul operands + approximate EUP reciprocal in softmax -> relaxed tol.
    assert jnp.allclose(out, ref, atol=2e-2, rtol=2e-2), f"mismatch vs ref: {err:.3e}"

    # TODO(synk): the original MultiHeadAttention class (DGL-based) was not
    # provided; it is realized here as dense per-head scaled-dot-product
    # attention masked by the graph adjacency (equivalent dense formulation).
    print("KERNEL_OK")
</pallas_src>

<mosaic_0001>
module attributes {stable_mosaic.version = 11 : i64} {
  func.func @encoder_layer_kernel(%arg0: i32, %arg1: memref<1x128x128xbf16, #tpu.memory_space<vmem>>, %arg2: memref<1x128x128xbf16, #tpu.memory_space<vmem>>, %arg3: memref<128x768xbf16, #tpu.memory_space<vmem>>, %arg4: memref<256x128xbf16, #tpu.memory_space<vmem>>, %arg5: memref<8x384xf32, #tpu.memory_space<vmem>>, %arg6: memref<1x128x128xf32, #tpu.memory_space<vmem>>) attributes {dimension_semantics = [#tpu.dimension_semantics<parallel>], iteration_bounds = array<i64: 2>, scalar_prefetch = 0 : i64, scratch_operands = 0 : i64, tpu.core_type = #tpu.core_type<tc>, window_params = [{transform_indices = @transform_0, window_bounds = array<i64: 1, 128, 128>}, {transform_indices = @transform_1, window_bounds = array<i64: 1, 128, 128>}, {pipeline_mode = #tpu.pipeline_mode<synchronous>, transform_indices = @transform_2, window_bounds = array<i64: 128, 768>}, {pipeline_mode = #tpu.pipeline_mode<synchronous>, transform_indices = @transform_3, window_bounds = array<i64: 256, 128>}, {pipeline_mode = #tpu.pipeline_mode<synchronous>, transform_indices = @transform_4, window_bounds = array<i64: 8, 384>}, {transform_indices = @transform_5, window_bounds = array<i64: 1, 128, 128>}]} {
    %c0 = arith.constant 0 : index
    %c0_0 = arith.constant 0 : index
    %c0_1 = arith.constant 0 : index
    %0 = vector.load %arg1[%c0, %c0_0, %c0_1] : memref<1x128x128xbf16, #tpu.memory_space<vmem>>, vector<1x128x128xbf16>
    %1 = vector.shape_cast %0 : vector<1x128x128xbf16> to vector<128x128xbf16>
    %2 = arith.extf %1 : vector<128x128xbf16> to vector<128x128xf32>
    %c0_2 = arith.constant 0 : index
    %c0_3 = arith.constant 0 : index
    %3 = vector.load %arg3[%c0_2, %c0_3] : memref<128x768xbf16, #tpu.memory_space<vmem>>, vector<128x384xbf16>
    %cst = arith.constant dense<0.000000e+00> : vector<128x384xf32>
    %4 = tpu.matmul %1, %3, %cst {dimension_numbers = #tpu.dot_dimension_numbers<[1], [0], [0], [1], [0, 0, 1, 1], [], []>} : vector<128x128xbf16>, vector<128x384xbf16>, vector<128x384xf32> -> vector<128x384xf32>
    %c0_4 = arith.constant 0 : index
    %c0_5 = arith.constant 0 : index
    %5 = vector.load %arg5[%c0_4, %c0_5] : memref<8x384xf32, #tpu.memory_space<vmem>>, vector<1x384xf32>
    %6 = vector.broadcast %5 : vector<1x384xf32> to vector<128x384xf32>
    %7 = arith.addf %4, %6 : vector<128x384xf32>
    %8 = arith.truncf %7 : vector<128x384xf32> to vector<128x384xbf16>
    %9 = vector.extract_strided_slice %8 {offsets = [0, 0], sizes = [128, 96], strides = [1, 1]} : vector<128x384xbf16> to vector<128x96xbf16>
    %10 = vector.extract_strided_slice %8 {offsets = [0, 96], sizes = [128, 96], strides = [1, 1]} : vector<128x384xbf16> to vector<128x96xbf16>
    %11 = vector.extract_strided_slice %8 {offsets = [0, 192], sizes = [128, 96], strides = [1, 1]} : vector<128x384xbf16> to vector<128x96xbf16>
    %12 = vector.extract_strided_slice %8 {offsets = [0, 288], sizes = [128, 96], strides = [1, 1]} : vector<128x384xbf16> to vector<128x96xbf16>
    %13 = vector.shape_cast %9 : vector<128x96xbf16> to vector<1x128x96xbf16>
    %14 = vector.shape_cast %10 : vector<128x96xbf16> to vector<1x128x96xbf16>
    %15 = vector.shape_cast %11 : vector<128x96xbf16> to vector<1x128x96xbf16>
    %16 = vector.shape_cast %12 : vector<128x96xbf16> to vector<1x128x96xbf16>
    %17 = tpu.concatenate %13, %14, %15, %16 in 0 : vector<1x128x96xbf16>, vector<1x128x96xbf16>, vector<1x128x96xbf16>, vector<1x128x96xbf16> -> vector<4x128x96xbf16>
    %18 = vector.extract_strided_slice %17 {offsets = [0, 0, 0], sizes = [4, 128, 32], strides = [1, 1, 1]} : vector<4x128x96xbf16> to vector<4x128x32xbf16>
    %19 = vector.extract_strided_slice %17 {offsets = [0, 0, 32], sizes = [4, 128, 32], strides = [1, 1, 1]} : vector<4x128x96xbf16> to vector<4x128x32xbf16>
    %20 = vector.extract_strided_slice %17 {offsets = [0, 0, 64], sizes = [4, 128, 32], strides = [1, 1, 1]} : vector<4x128x96xbf16> to vector<4x128x32xbf16>
    %c0_6 = arith.constant 0 : index
    %c0_7 = arith.constant 0 : index
    %c0_8 = arith.constant 0 : index
    %21 = vector.load %arg2[%c0_6, %c0_7, %c0_8] : memref<1x128x128xbf16, #tpu.memory_space<vmem>>, vector<1x128x128xbf16>
    %22 = vector.shape_cast %21 : vector<1x128x128xbf16> to vector<128x128xbf16>
    %23 = arith.extf %22 : vector<128x128xbf16> to vector<128x128xf32>
    %cst_9 = arith.constant 1.000000e+00 : f32
    %24 = vector.broadcast %cst_9 : f32 to vector<128x128xf32>
    %25 = arith.subf %23, %24 : vector<128x128xf32>
    %cst_10 = arith.constant 1.000000e+09 : f32
    %26 = vector.broadcast %cst_10 : f32 to vector<128x128xf32>
    %27 = arith.mulf %25, %26 : vector<128x128xf32>
    "tpu.trace_start"() <{level = 10 : i32, message = "hnd,hmd->hnm"}> : () -> ()
    %cst_11 = arith.constant dense<0.000000e+00> : vector<4x128x128xf32>
    %28 = tpu.matmul %18, %19, %cst_11 {dimension_numbers = #tpu.dot_dimension_numbers<[2], [2], [1], [1], [0, 0, 0, 1, 1, 1], [0], [0]>} : vector<4x128x32xbf16>, vector<4x128x32xbf16>, vector<4x128x128xf32> -> vector<4x128x128xf32>
    "tpu.trace_stop"() : () -> ()
    %29 = vector.shape_cast %27 : vector<128x128xf32> to vector<1x128x128xf32>
    %30 = vector.broadcast %29 : vector<1x128x128xf32> to vector<4x128x128xf32>
    %31 = arith.addf %28, %30 : vector<4x128x128xf32>
    %cst_12 = arith.constant dense<0xFF800000> : vector<4x128xf32>
    %32 = vector.multi_reduction <maximumf>, %31, %cst_12 [2] : vector<4x128x128xf32> to vector<4x128xf32>
    %33 = vector.shape_cast %32 : vector<4x128xf32> to vector<4x128x1xf32>
    %34 = vector.broadcast %33 : vector<4x128x1xf32> to vector<4x128x128xf32>
    %35 = arith.subf %31, %34 : vector<4x128x128xf32>
    %36 = math.exp %35 : vector<4x128x128xf32>
    %cst_13 = arith.constant dense<0.000000e+00> : vector<4x128xf32>
    %37 = vector.multi_reduction <add>, %36, %cst_13 [2] : vector<4x128x128xf32> to vector<4x128xf32>
    %38 = vector.shape_cast %37 : vector<4x128xf32> to vector<4x128x1xf32>
    %39 = tpu.reciprocal %38 {approx = true} : vector<4x128x1xf32> -> vector<4x128x1xf32>
    %40 = vector.broadcast %39 : vector<4x128x1xf32> to vector<4x128x128xf32>
    %41 = arith.mulf %36, %40 : vector<4x128x128xf32>
    %42 = arith.truncf %41 : vector<4x128x128xf32> to vector<4x128x128xbf16>
    "tpu.trace_start"() <{level = 10 : i32, message = "hnm,hmd->hnd"}> : () -> ()
    %cst_14 = arith.constant dense<0.000000e+00> : vector<4x128x32xf32>
    %43 = tpu.matmul %42, %20, %cst_14 {dimension_numbers = #tpu.dot_dimension_numbers<[2], [1], [1], [2], [0, 0, 0, 1, 1, 2], [0], [0]>} : vector<4x128x128xbf16>, vector<4x128x32xbf16>, vector<4x128x32xf32> -> vector<4x128x32xf32>
    "tpu.trace_stop"() : () -> ()
    %44 = vector.extract_strided_slice %43 {offsets = [0, 0, 0], sizes = [1, 128, 32], strides = [1, 1, 1]} : vector<4x128x32xf32> to vector<1x128x32xf32>
    %45 = vector.shape_cast %44 : vector<1x128x32xf32> to vector<128x32xf32>
    %46 = vector.extract_strided_slice %43 {offsets = [1, 0, 0], sizes = [1, 128, 32], strides = [1, 1, 1]} : vector<4x128x32xf32> to vector<1x128x32xf32>
    %47 = vector.shape_cast %46 : vector<1x128x32xf32> to vector<128x32xf32>
    %48 = vector.extract_strided_slice %43 {offsets = [2, 0, 0], sizes = [1, 128, 32], strides = [1, 1, 1]} : vector<4x128x32xf32> to vector<1x128x32xf32>
    %49 = vector.shape_cast %48 : vector<1x128x32xf32> to vector<128x32xf32>
    %50 = vector.extract_strided_slice %43 {offsets = [3, 0, 0], sizes = [1, 128, 32], strides = [1, 1, 1]} : vector<4x128x32xf32> to vector<1x128x32xf32>
    %51 = vector.shape_cast %50 : vector<1x128x32xf32> to vector<128x32xf32>
    %52 = tpu.concatenate %45, %47, %49, %51 in 1 : vector<128x32xf32>, vector<128x32xf32>, vector<128x32xf32>, vector<128x32xf32> -> vector<128x128xf32>
    %53 = arith.truncf %52 : vector<128x128xf32> to vector<128x128xbf16>
    %c0_15 = arith.constant 0 : index
    %c384 = arith.constant 384 : index
    %54 = vector.load %arg3[%c0_15, %c384] : memref<128x768xbf16, #tpu.memory_space<vmem>>, vector<128x128xbf16>
    %cst_16 = arith.constant dense<0.000000e+00> : vector<128x128xf32>
    %55 = tpu.matmul %53, %54, %cst_16 {dimension_numbers = #tpu.dot_dimension_numbers<[1], [0], [0], [1], [0, 0, 1, 1], [], []>} : vector<128x128xbf16>, vector<128x128xbf16>, vector<128x128xf32> -> vector<128x128xf32>
    %c1 = arith.constant 1 : index
    %c0_17 = arith.constant 0 : index
    %56 = vector.load %arg5[%c1, %c0_17] : memref<8x384xf32, #tpu.memory_space<vmem>>, vector<1x128xf32>
    %57 = vector.broadcast %56 : vector<1x128xf32> to vector<128x128xf32>
    %58 = arith.addf %55, %57 : vector<128x128xf32>
    %59 = arith.addf %2, %58 : vector<128x128xf32>
    %cst_18 = arith.constant dense<0.000000e+00> : vector<128xf32>
    %60 = vector.multi_reduction <add>, %59, %cst_18 [1] : vector<128x128xf32> to vector<128xf32>
    %61 = vector.shape_cast %60 : vector<128xf32> to vector<128x1xf32>
    %cst_19 = arith.constant 1.280000e+02 : f32
    %62 = vector.broadcast %cst_19 : f32 to vector<128x1xf32>
    %63 = arith.divf %61, %62 : vector<128x1xf32>
    %64 = vector.broadcast %63 : vector<128x1xf32> to vector<128x128xf32>
    %65 = arith.subf %59, %64 : vector<128x128xf32>
    %66 = arith.mulf %65, %65 : vector<128x128xf32>
    %cst_20 = arith.constant dense<0.000000e+00> : vector<128xf32>
    %67 = vector.multi_reduction <add>, %66, %cst_20 [1] : vector<128x128xf32> to vector<128xf32>
    %68 = vector.shape_cast %67 : vector<128xf32> to vector<128x1xf32>
    %cst_21 = arith.constant 1.280000e+02 : f32
    %69 = vector.broadcast %cst_21 : f32 to vector<128x1xf32>
    %70 = arith.divf %68, %69 : vector<128x1xf32>
    %cst_22 = arith.constant 9.99999974E-6 : f32
    %71 = vector.broadcast %cst_22 : f32 to vector<128x1xf32>
    %72 = arith.addf %70, %71 : vector<128x1xf32>
    %73 = math.rsqrt %72 : vector<128x1xf32>
    %74 = vector.broadcast %73 : vector<128x1xf32> to vector<128x128xf32>
    %75 = arith.mulf %65, %74 : vector<128x128xf32>
    %c4 = arith.constant 4 : index
    %c0_23 = arith.constant 0 : index
    %76 = vector.load %arg5[%c4, %c0_23] : memref<8x384xf32, #tpu.memory_space<vmem>>, vector<1x128xf32>
    %77 = vector.broadcast %76 : vector<1x128xf32> to vector<128x128xf32>
    %78 = arith.mulf %75, %77 : vector<128x128xf32>
    %c5 = arith.constant 5 : index
    %c0_24 = arith.constant 0 : index
    %79 = vector.load %arg5[%c5, %c0_24] : memref<8x384xf32, #tpu.memory_space<vmem>>, vector<1x128xf32>
    %80 = vector.broadcast %79 : vector<1x128xf32> to vector<128x128xf32>
    %81 = arith.addf %78, %80 : vector<128x128xf32>
    %82 = arith.truncf %81 : vector<128x128xf32> to vector<128x128xbf16>
    %c0_25 = arith.constant 0 : index
    %c512 = arith.constant 512 : index
    %83 = vector.load %arg3[%c0_25, %c512] : memref<128x768xbf16, #tpu.memory_space<vmem>>, vector<128x256xbf16>
    %cst_26 = arith.constant dense<0.000000e+00> : vector<128x256xf32>
    %84 = tpu.matmul %82, %83, %cst_26 {dimension_numbers = #tpu.dot_dimension_numbers<[1], [0], [0], [1], [0, 0, 1, 1], [], []>} : vector<128x128xbf16>, vector<128x256xbf16>, vector<128x256xf32> -> vector<128x256xf32>
    %c2 = arith.constant 2 : index
    %c0_27 = arith.constant 0 : index
    %85 = vector.load %arg5[%c2, %c0_27] : memref<8x384xf32, #tpu.memory_space<vmem>>, vector<1x256xf32>
    %86 = vector.broadcast %85 : vector<1x256xf32> to vector<128x256xf32>
    %87 = arith.addf %84, %86 : vector<128x256xf32>
    %cst_28 = arith.constant 0.000000e+00 : f32
    %88 = vector.broadcast %cst_28 : f32 to vector<128x256xf32>
    %89 = arith.maximumf %87, %88 : vector<128x256xf32>
    %90 = arith.truncf %89 : vector<128x256xf32> to vector<128x256xbf16>
    %c0_29 = arith.constant 0 : index
    %c0_30 = arith.constant 0 : index
    %91 = vector.load %arg4[%c0_29, %c0_30] : memref<256x128xbf16, #tpu.memory_space<vmem>>, vector<256x128xbf16>
    %cst_31 = arith.constant dense<0.000000e+00> : vector<128x128xf32>
    %92 = tpu.matmul %90, %91, %cst_31 {dimension_numbers = #tpu.dot_dimension_numbers<[1], [0], [0], [1], [0, 0, 1, 1], [], []>} : vector<128x256xbf16>, vector<256x128xbf16>, vector<128x128xf32> -> vector<128x128xf32>
    %c3 = arith.constant 3 : index
    %c0_32 = arith.constant 0 : index
    %93 = vector.load %arg5[%c3, %c0_32] : memref<8x384xf32, #tpu.memory_space<vmem>>, vector<1x128xf32>
    %94 = vector.broadcast %93 : vector<1x128xf32> to vector<128x128xf32>
    %95 = arith.addf %92, %94 : vector<128x128xf32>
    %96 = arith.addf %81, %95 : vector<128x128xf32>
    %cst_33 = arith.constant dense<0.000000e+00> : vector<128xf32>
    %97 = vector.multi_reduction <add>, %96, %cst_33 [1] : vector<128x128xf32> to vector<128xf32>
    %98 = vector.shape_cast %97 : vector<128xf32> to vector<128x1xf32>
    %cst_34 = arith.constant 1.280000e+02 : f32
    %99 = vector.broadcast %cst_34 : f32 to vector<128x1xf32>
    %100 = arith.divf %98, %99 : vector<128x1xf32>
    %101 = vector.broadcast %100 : vector<128x1xf32> to vector<128x128xf32>
    %102 = arith.subf %96, %101 : vector<128x128xf32>
    %103 = arith.mulf %102, %102 : vector<128x128xf32>
    %cst_35 = arith.constant dense<0.000000e+00> : vector<128xf32>
    %104 = vector.multi_reduction <add>, %103, %cst_35 [1] : vector<128x128xf32> to vector<128xf32>
    %105 = vector.shape_cast %104 : vector<128xf32> to vector<128x1xf32>
    %cst_36 = arith.constant 1.280000e+02 : f32
    %106 = vector.broadcast %cst_36 : f32 to vector<128x1xf32>
    %107 = arith.divf %105, %106 : vector<128x1xf32>
    %cst_37 = arith.constant 9.99999974E-6 : f32
    %108 = vector.broadcast %cst_37 : f32 to vector<128x1xf32>
    %109 = arith.addf %107, %108 : vector<128x1xf32>
    %110 = math.rsqrt %109 : vector<128x1xf32>
    %111 = vector.broadcast %110 : vector<128x1xf32> to vector<128x128xf32>
    %112 = arith.mulf %102, %111 : vector<128x128xf32>
    %c6 = arith.constant 6 : index
    %c0_38 = arith.constant 0 : index
    %113 = vector.load %arg5[%c6, %c0_38] : memref<8x384xf32, #tpu.memory_space<vmem>>, vector<1x128xf32>
    %114 = vector.broadcast %113 : vector<1x128xf32> to vector<128x128xf32>
    %115 = arith.mulf %112, %114 : vector<128x128xf32>
    %c7 = arith.constant 7 : index
    %c0_39 = arith.constant 0 : index
    %116 = vector.load %arg5[%c7, %c0_39] : memref<8x384xf32, #tpu.memory_space<vmem>>, vector<1x128xf32>
    %117 = vector.broadcast %116 : vector<1x128xf32> to vector<128x128xf32>
    %118 = arith.addf %115, %117 : vector<128x128xf32>
    %c0_40 = arith.constant 0 : index
    %c0_41 = arith.constant 0 : index
    %c0_42 = arith.constant 0 : index
    %119 = vector.load %arg6[%c0_40, %c0_41, %c0_42] : memref<1x128x128xf32, #tpu.memory_space<vmem>>, vector<1x128x128xf32>
    %120 = vector.shape_cast %119 : vector<1x128x128xf32> to vector<128x128xf32>
    %121 = vector.shape_cast %118 : vector<128x128xf32> to vector<1x128x128xf32>
    tpu.vector_store %arg6[%c0_40, %c0_41, %c0_42], %121 {strides = array<i32>} : memref<1x128x128xf32, #tpu.memory_space<vmem>>, vector<1x128x128xf32>,
    return
  }
  func.func @transform_0(%arg0: i32) -> (i32, i32, i32) {
    %c0_i32 = arith.constant 0 : i32
    %c0_i32_0 = arith.constant 0 : i32
    %c0_i32_1 = arith.constant 0 : i32
    return %arg0, %c0_i32, %c0_i32_0 : i32, i32, i32
  }
  func.func @transform_1(%arg0: i32) -> (i32, i32, i32) {
    %c0_i32 = arith.constant 0 : i32
    %c0_i32_0 = arith.constant 0 : i32
    %c0_i32_1 = arith.constant 0 : i32
    return %arg0, %c0_i32, %c0_i32_0 : i32, i32, i32
  }
  func.func @transform_2(%arg0: i32) -> (i32, i32) {
    %c0_i32 = arith.constant 0 : i32
    %c0_i32_0 = arith.constant 0 : i32
    %c0_i32_1 = arith.constant 0 : i32
    return %c0_i32, %c0_i32_0 : i32, i32
  }
  func.func @transform_3(%arg0: i32) -> (i32, i32) {
    %c0_i32 = arith.constant 0 : i32
    %c0_i32_0 = arith.constant 0 : i32
    %c0_i32_1 = arith.constant 0 : i32
    return %c0_i32, %c0_i32_0 : i32, i32
  }
  func.func @transform_4(%arg0: i32) -> (i32, i32) {
    %c0_i32 = arith.constant 0 : i32
    %c0_i32_0 = arith.constant 0 : i32
    %c0_i32_1 = arith.constant 0 : i32
    return %c0_i32, %c0_i32_0 : i32, i32
  }
  func.func @transform_5(%arg0: i32) -> (i32, i32, i32) {
    %c0_i32 = arith.constant 0 : i32
    %c0_i32_0 = arith.constant 0 : i32
    %c0_i32_1 = arith.constant 0 : i32
    return %arg0, %c0_i32, %c0_i32_0 : i32, i32, i32
  }
}

</mosaic_0001>

<llo_original>
// kernel: apply.1
$region0: #{apply.1}
  #allocation0 [shape = 'u32[]', space=smem, size = 0x4, offset = 0x4, fixed_abs, tag = 'smem constant byte address 0x4 - core index']
  #allocation1 [shape = 'u32[144,128]{1,0:T(1,128)}', space=vmem, size = 0x12000, scoped, tag = 'internal scratch']
  %s0 = inlined_call_operand.vmem [shape: bf16[2,128,128], index: 0, kind: input, shape index: {}]
  %s1 = inlined_call_operand.vmem [shape: bf16[2,128,128], index: 1, kind: input, shape index: {}]
  %s2 = inlined_call_operand.vmem [shape: bf16[128,768], index: 2, kind: input, shape index: {}]
  %s3 = inlined_call_operand.vmem [shape: bf16[256,128], index: 3, kind: input, shape index: {}]
  %s4 = inlined_call_operand.vmem [shape: f32[8,384], index: 4, kind: input, shape index: {}]
  %s5 = inlined_call_operand.hbm [shape: f32[2,128,128], index: 5, kind: output, shape index: {}]
  %s6 = sld [smem:[#allocation0]]
  $region53: #{apply.1} parent=0
    _
  %s8 = ssub.s32 1, %s6
  %s9 = scalar_select 0, %s8, %s6
  $region1: #{apply.1} parent=0
    #allocation2 [shape = 'u8[131072]{0}', space=vmem, size = 0x20000, scoped, tag = 'output window, operand 0']
    #allocation3 [shape = 's32[2]{0}', space=sflag, size = 0x8, scoped, tag = 'scoped memory for apply.1']
    %10 = vsyncpa [#allocation3], 0
    %s11 = scalar_lea.sflag [#allocation3], 1
    %12 = vsyncpa %s11, 0
    loop: start=0, step=1, limit=4
    $region2: #{apply.1} parent=1 // loop_pre_header
      _
    $region3: #{apply.1} parent=1 // loop_header
      %s14 = sphi 0, %s18
      %p15 = scmp.ge.s32.totalorder %s14, 4
      %s24 = sphi 0, %s26
      %s27 = sphi 0, %s24
      %s28 = sphi 0, %s27
      %s44 = sphi 0, %s28
      %s50 = sphi 0, %s52
      %s53 = sphi 0, %s50
      %s54 = sphi 0, %s53
      %s70 = sphi 0, %s54
      %s74 = sphi 0, %s74
      %s76 = sphi 0, %s74
      %s77 = sphi 0, %s76
      %s91 = sphi 0, %s77
      %s95 = sphi 0, %s95
      %s97 = sphi 0, %s95
      %s98 = sphi 0, %s97
      %s112 = sphi 0, %s98
      %s116 = sphi 0, %s116
      %s118 = sphi 0, %s116
      %s119 = sphi 0, %s118
      %s133 = sphi 0, %s119
      %s139 = sphi 0, %s141
      %s142 = sphi 0, %s139
      %s143 = sphi 0, %s142
      %s159 = sphi 0, %s143
    $region4: #{apply.1} parent=1 // loop_header_branch
      %17 = sbr.rel (%p15) target = $region8
    $region5: #{apply.1} parent=1 // loop_body
      %s19 = ssub.s32 %s14, 1
      %s20 = ssub.s32 %s14, 2
      %s21 = sadd.s32 %s14, 1
      %s22 = ssub.s32 %s14, %s21
      %p23 = scmp.eq.s32.totalorder %s22, 0
      %s25 = sadd.s32 %s24, 1
      %s26 = scalar_select %p23, %s24, %s25
      %p29 = pneg %p23
      %p30 = scmp.eq.s32.totalorder %s14, 1
      %p31 = por %p29, %p30
      %p32 = scmp.ne.s32.totalorder %s24, %s27
      %p33 = scmp.eq.s32.totalorder %s14, 0
      %p34 = por %p32, %p33
      %p35 = scmp.ne.s32.totalorder %s24, %s27
      %p36 = scmp.eq.s32.totalorder %s19, 1
      %p37 = por %p35, %p36
      %p38 = scmp.ne.s32.totalorder %s27, %s28
      %p39 = scmp.eq.s32.totalorder %s19, 0
      %p40 = por %p38, %p39
      %p41 = scmp.ne.s32.totalorder %s27, %s28
      %p42 = scmp.eq.s32.totalorder %s20, 1
      %p43 = por %p41, %p42
      %p45 = scmp.ne.s32.totalorder %s28, %s44
      %p46 = scmp.eq.s32.totalorder %s20, 0
      %p47 = por %p45, %p46
      %s48 = ssub.s32 %s14, %s21
      %p49 = scmp.eq.s32.totalorder %s48, 0
      %s51 = sadd.s32 %s50, 1
      %s52 = scalar_select %p49, %s50, %s51
      %p55 = pneg %p49
      %p56 = scmp.eq.s32.totalorder %s14, 1
      %p57 = por %p55, %p56
      %p58 = scmp.ne.s32.totalorder %s50, %s53
      %p59 = scmp.eq.s32.totalorder %s14, 0
      %p60 = por %p58, %p59
      %p61 = scmp.ne.s32.totalorder %s50, %s53
      %p62 = scmp.eq.s32.totalorder %s19, 1
      %p63 = por %p61, %p62
      %p64 = scmp.ne.s32.totalorder %s53, %s54
      %p65 = scmp.eq.s32.totalorder %s19, 0
      %p66 = por %p64, %p65
      %p67 = scmp.ne.s32.totalorder %s53, %s54
      %p68 = scmp.eq.s32.totalorder %s20, 1
      %p69 = por %p67, %p68
      %p71 = scmp.ne.s32.totalorder %s54, %s70
      %p72 = scmp.eq.s32.totalorder %s20, 0
      %p73 = por %p71, %p72
      %s75 = sadd.s32 %s74, 1
      %p78 = scmp.eq.s32.totalorder %s14, 1
      %p79 = scmp.ne.s32.totalorder %s74, %s76
      %p80 = scmp.eq.s32.totalorder %s14, 0
      %p81 = por %p79, %p80
      %p82 = scmp.ne.s32.totalorder %s74, %s76
      %p83 = scmp.eq.s32.totalorder %s19, 1
      %p84 = por %p82, %p83
      %p85 = scmp.ne.s32.totalorder %s76, %s77
      %p86 = scmp.eq.s32.totalorder %s19, 0
      %p87 = por %p85, %p86
      %p88 = scmp.ne.s32.totalorder %s76, %s77
      %p89 = scmp.eq.s32.totalorder %s20, 1
      %p90 = por %p88, %p89
      %p92 = scmp.ne.s32.totalorder %s77, %s91
      %p93 = scmp.eq.s32.totalorder %s20, 0
      %p94 = por %p92, %p93
      %s96 = sadd.s32 %s95, 1
      %p99 = scmp.eq.s32.totalorder %s14, 1
      %p100 = scmp.ne.s32.totalorder %s95, %s97
      %p101 = scmp.eq.s32.totalorder %s14, 0
      %p102 = por %p100, %p101
      %p103 = scmp.ne.s32.totalorder %s95, %s97
      %p104 = scmp.eq.s32.totalorder %s19, 1
      %p105 = por %p103, %p104
      %p106 = scmp.ne.s32.totalorder %s97, %s98
      %p107 = scmp.eq.s32.totalorder %s19, 0
      %p108 = por %p106, %p107
      %p109 = scmp.ne.s32.totalorder %s97, %s98
      %p110 = scmp.eq.s32.totalorder %s20, 1
      %p111 = por %p109, %p110
      %p113 = scmp.ne.s32.totalorder %s98, %s112
      %p114 = scmp.eq.s32.totalorder %s20, 0
      %p115 = por %p113, %p114
      %s117 = sadd.s32 %s116, 1
      %p120 = scmp.eq.s32.totalorder %s14, 1
      %p121 = scmp.ne.s32.totalorder %s116, %s118
      %p122 = scmp.eq.s32.totalorder %s14, 0
      %p123 = por %p121, %p122
      %p124 = scmp.ne.s32.totalorder %s116, %s118
      %p125 = scmp.eq.s32.totalorder %s19, 1
      %p126 = por %p124, %p125
      %p127 = scmp.ne.s32.totalorder %s118, %s119
      %p128 = scmp.eq.s32.totalorder %s19, 0
      %p129 = por %p127, %p128
      %p130 = scmp.ne.s32.totalorder %s118, %s119
      %p131 = scmp.eq.s32.totalorder %s20, 1
      %p132 = por %p130, %p131
      %p134 = scmp.ne.s32.totalorder %s119, %s133
      %p135 = scmp.eq.s32.totalorder %s20, 0
      %p136 = por %p134, %p135
      %s137 = ssub.s32 %s14, %s21
      %p138 = scmp.eq.s32.totalorder %s137, 0
      %s140 = sadd.s32 %s139, 1
      %s141 = scalar_select %p138, %s139, %s140
      %p144 = pneg %p138
      %p145 = scmp.eq.s32.totalorder %s14, 1
      %p146 = por %p144, %p145
      %p147 = scmp.ne.s32.totalorder %s139, %s142
      %p148 = scmp.eq.s32.totalorder %s14, 0
      %p149 = por %p147, %p148
      %p150 = scmp.ne.s32.totalorder %s139, %s142
      %p151 = scmp.eq.s32.totalorder %s19, 1
      %p152 = por %p150, %p151
      %p153 = scmp.ne.s32.totalorder %s142, %s143
      %p154 = scmp.eq.s32.totalorder %s19, 0
      %p155 = por %p153, %p154
      %p156 = scmp.ne.s32.totalorder %s142, %s143
      %p157 = scmp.eq.s32.totalorder %s20, 1
      %p158 = por %p156, %p157
      %p160 = scmp.ne.s32.totalorder %s143, %s159
      %p161 = scmp.eq.s32.totalorder %s20, 0
      %p162 = por %p160, %p161
      %p163 = scmp.le.s32.totalorder 1, %s14
      %p164 = scmp.lt.s32.totalorder %s14, 3
      %p165 = pnand %p163, %p164
      %p166 = pneg %p165
      // Predicated region
      $region9: #{apply.1} parent=5 // pred_check
        _
      $region10: #{apply.1} parent=5 // pred_check_branch
        %168 = sbr.rel (%p165) target = $region12
      $region11: #{apply.1} parent=5 // pred_region
        %s169 = ssub.s32 %s14, 1
        // Predicated region
        $region13: #{apply.1} parent=11 // pred_check
          %p170 = pneg %p87
        $region14: #{apply.1} parent=11 // pred_check_branch
          %172 = sbr.rel (%p170) target = $region16
        $region15: #{apply.1} parent=11 // pred_region
          _
        $region16: #{apply.1} parent=11 // pred_fallthru
          _
        // Predicated region
        $region17: #{apply.1} parent=11 // pred_check
          %p173 = pneg %p108
        $region18: #{apply.1} parent=11 // pred_check_branch
          %175 = sbr.rel (%p173) target = $region20
        $region19: #{apply.1} parent=11 // pred_region
          _
        $region20: #{apply.1} parent=11 // pred_fallthru
          _
        // Predicated region
        $region21: #{apply.1} parent=11 // pred_check
          %p176 = pneg %p129
        $region22: #{apply.1} parent=11 // pred_check_branch
          %178 = sbr.rel (%p176) target = $region24
        $region23: #{apply.1} parent=11 // pred_region
          _
        $region24: #{apply.1} parent=11 // pred_fallthru
          _
      $region12: #{apply.1} parent=5 // pred_fallthru
        _
      %p179 = scmp.lt.s32.totalorder %s14, 2
      // Predicated region
      $region25: #{apply.1} parent=5 // pred_check
        %p180 = pneg %p179
      $region26: #{apply.1} parent=5 // pred_check_branch
        %182 = sbr.rel (%p180) target = $region28
      $region27: #{apply.1} parent=5 // pred_region
        // Predicated region
        $region29: #{apply.1} parent=27 // pred_check
          %p183 = pneg %p34
        $region30: #{apply.1} parent=27 // pred_check_branch
          %185 = sbr.rel (%p183) target = $region32
        $region31: #{apply.1} parent=27 // pred_region
          %p186 = scmp.lt.s32.totalorder %s14, 1
          %s187 = scalar_select %p186, %s14, 1
          %s188 = smul.addr %s187, 16
          %s189 = smul.addr %s188, 4
          %s190 = scalar_lea.vmem %s0, %s189
        $region32: #{apply.1} parent=27 // pred_fallthru
          _
        // Predicated region
        $region33: #{apply.1} parent=27 // pred_check
          %p191 = pneg %p60
        $region34: #{apply.1} parent=27 // pred_check_branch
          %193 = sbr.rel (%p191) target = $region36
        $region35: #{apply.1} parent=27 // pred_region
          %p194 = scmp.lt.s32.totalorder %s14, 1
          %s195 = scalar_select %p194, %s14, 1
          %s196 = smul.addr %s195, 16
          %s197 = smul.addr %s196, 4
          %s198 = scalar_lea.vmem %s1, %s197
        $region36: #{apply.1} parent=27 // pred_fallthru
          _
      $region28: #{apply.1} parent=5 // pred_fallthru
        _
      %p199 = scmp.le.s32.totalorder 1, %s14
      %p200 = scmp.lt.s32.totalorder %s14, 3
      %p201 = pnand %p199, %p200
      %p202 = pneg %p201
      // Predicated region
      $region37: #{apply.1} parent=5 // pred_check
        _
      $region38: #{apply.1} parent=5 // pred_check_branch
        %204 = sbr.rel (%p201) target = $region40
      $region39: #{apply.1} parent=5 // pred_region
        %s205 = ssub.s32 %s14, 1
        %p206 = scmp.lt.s32.totalorder %s19, 1
        %s207 = scalar_select %p206, %s19, 1
        %s208 = smul.addr %s207, 16
        %s209 = smul.addr %s208, 4
        %s210 = scalar_lea.vmem %s0, %s209
        %p211 = pneg %p40
        %p212 = pneg %p37
        %p213 = scmp.lt.s32.totalorder %s19, 1
        %s214 = scalar_select %p213, %s19, 1
        %s215 = smul.addr %s214, 16
        %s216 = smul.addr %s215, 4
        %s217 = scalar_lea.vmem %s1, %s216
        %p218 = pneg %p66
        %p219 = pneg %p63
        %p220 = pneg %p87
        %p221 = pneg %p84
        %p222 = pneg %p108
        %p223 = pneg %p105
        %p224 = pneg %p129
        %p225 = pneg %p126
        %p226 = pneg %p155
        %p227 = pneg %p152
        %s228 = sand.u32 %s142, 1
        %s229 = scalar_lea.sflag [#allocation3], %s228
        %s230 = sand.u32 %s142, 1
        %s231 = smul.addr %s230, 128
        %s232 = scalar_lea.vmem [#allocation2], %s231
        %p233 = scmp.lt.s32.totalorder %s19, 1
        %s234 = scalar_select %p233, %s19, 1
        %s235 = smul.addr %s234, 16
        %s236 = smul.addr %s235, 4
        %s237 = scalar_lea.vmem %s0, %s236
        %p238 = scmp.lt.s32.totalorder %s19, 1
        %s239 = scalar_select %p238, %s19, 1
        %s240 = smul.addr %s239, 16
        %s241 = smul.addr %s240, 4
        %s242 = scalar_lea.vmem %s1, %s241
        %v244 = vld [vmem:[%s237] sm:$0xf]
        %v245 = vld [vmem:[%s237 + $0x4] sm:$0xf]
        %v246 = vld [vmem:[%s237 + $0x8] sm:$0xf]
        %v247 = vld [vmem:[%s237 + $0xc] sm:$0xf]
        %v248 = vld [vmem:[%s237 + $0x10] sm:$0xf]
        %v249 = vld [vmem:[%s237 + $0x14] sm:$0xf]
        %v250 = vld [vmem:[%s237 + $0x18] sm:$0xf]
        %v251 = vld [vmem:[%s237 + $0x1c] sm:$0xf]
        %v252 = vld [vmem:[%s237 + $0x20] sm:$0xf]
        %v253 = vld [vmem:[%s237 + $0x24] sm:$0xf]
        %v254 = vld [vmem:[%s237 + $0x28] sm:$0xf]
        %v255 = vld [vmem:[%s237 + $0x2c] sm:$0xf]
        %v256 = vld [vmem:[%s237 + $0x30] sm:$0xf]
        %v257 = vld [vmem:[%s237 + $0x34] sm:$0xf]
        %v258 = vld [vmem:[%s237 + $0x38] sm:$0xf]
        %v259 = vld [vmem:[%s237 + $0x3c] sm:$0xf]
        %v260 = vunpack.c.l.bf16 %v244
        %v261 = vunpack.c.l.bf16 %v245
        %v262 = vunpack.c.l.bf16 %v246
        %v263 = vunpack.c.l.bf16 %v247
        %v264 = vunpack.c.l.bf16 %v248
        %v265 = vunpack.c.l.bf16 %v249
        %v266 = vunpack.c.l.bf16 %v250
        %v267 = vunpack.c.l.bf16 %v251
        %v268 = vunpack.c.l.bf16 %v252
        %v269 = vunpack.c.l.bf16 %v253
        %v270 = vunpack.c.l.bf16 %v254
        %v271 = vunpack.c.l.bf16 %v255
        %v272 = vunpack.c.l.bf16 %v256
        %v273 = vunpack.c.l.bf16 %v257
        %v274 = vunpack.c.l.bf16 %v258
        %v275 = vunpack.c.l.bf16 %v259
        %v276 = vld [vmem:[%s2] sm:$0xff]
        %v277 = vld [vmem:[%s2 + $0x8] sm:$0xf]
        %v278 = vld [vmem:[%s2 + $0x18] sm:$0xff]
        %v279 = vld [vmem:[%s2 + $0x20] sm:$0xf]
        %v280 = vld [vmem:[%s2 + $0x30] sm:$0xff]
        %v281 = vld [vmem:[%s2 + $0x38] sm:$0xf]
        %v282 = vld [vmem:[%s2 + $0x48] sm:$0xff]
        %v283 = vld [vmem:[%s2 + $0x50] sm:$0xf]
        %v284 = vld [vmem:[%s2 + $0x60] sm:$0xff]
        %v285 = vld [vmem:[%s2 + $0x68] sm:$0xf]
        %v286 = vld [vmem:[%s2 + $0x78] sm:$0xff]
        %v287 = vld [vmem:[%s2 + $0x80] sm:$0xf]
        %v288 = vld [vmem:[%s2 + $0x90] sm:$0xff]
        %v289 = vld [vmem:[%s2 + $0x98] sm:$0xf]
        %v290 = vld [vmem:[%s2 + $0xa8] sm:$0xff]
        %v291 = vld [vmem:[%s2 + $0xb0] sm:$0xf]
        %v292 = vld [vmem:[%s2 + $0xc0] sm:$0xff]
        %v293 = vld [vmem:[%s2 + $0xc8] sm:$0xf]
        %v294 = vld [vmem:[%s2 + $0xd8] sm:$0xff]
        %v295 = vld [vmem:[%s2 + $0xe0] sm:$0xf]
        %v296 = vld [vmem:[%s2 + $0xf0] sm:$0xff]
        %v297 = vld [vmem:[%s2 + $0xf8] sm:$0xf]
        %v298 = vld [vmem:[%s2 + $0x108] sm:$0xff]
        %v299 = vld [vmem:[%s2 + $0x110] sm:$0xf]
        %v300 = vld [vmem:[%s2 + $0x120] sm:$0xff]
        %v301 = vld [vmem:[%s2 + $0x128] sm:$0xf]
        %v302 = vld [vmem:[%s2 + $0x138] sm:$0xff]
        %v303 = vld [vmem:[%s2 + $0x140] sm:$0xf]
        %v304 = vld [vmem:[%s2 + $0x150] sm:$0xff]
        %v305 = vld [vmem:[%s2 + $0x158] sm:$0xf]
        %v306 = vld [vmem:[%s2 + $0x168] sm:$0xff]
        %v307 = vld [vmem:[%s2 + $0x170] sm:$0xf]
        %v308 = vld [vmem:[%s4] ss:$8 sm:$0x7]
        %v310 = vlaneseq
        %v311 = vshrl.u32 %v310, 7
        %v312 = vsub.s32 0, %v311
        %v313 = vrot.slane %v308, %v312
        %v314 = vlaneseq
        %v315 = vshrl.u32 %v314, 7
        %v316 = vsub.s32 1, %v315
        %v317 = vrot.slane %v308, %v316
        %v318 = vlaneseq
        %v319 = vshrl.u32 %v318, 7
        %v320 = vsub.s32 2, %v319
        %v321 = vrot.slane %v308, %v320
        %v341 = vunpack.c.l.b16 %v244
        %v342 = vunpack.c.l.b16 %v245
        %v343 = vunpack.c.l.b16 %v246
        %v344 = vunpack.c.l.b16 %v247
        %v345 = vunpack.c.l.b16 %v248
        %v346 = vunpack.c.l.b16 %v249
        %v347 = vunpack.c.l.b16 %v250
        %v348 = vunpack.c.l.b16 %v251
        %v349 = vunpack.c.l.b16 %v252
        %v350 = vunpack.c.l.b16 %v253
        %v351 = vunpack.c.l.b16 %v254
        %v352 = vunpack.c.l.b16 %v255
        %v353 = vunpack.c.l.b16 %v256
        %v354 = vunpack.c.l.b16 %v257
        %v355 = vunpack.c.l.b16 %v258
        %v356 = vunpack.c.l.b16 %v259
        %v357 = vpack.c.b16 %v342, %v341
        %v358 = vpack.c.b16 %v344, %v343
        %v359 = vpack.c.b16 %v346, %v345
        %v360 = vpack.c.b16 %v348, %v347
        %v361 = vpack.c.b16 %v350, %v349
        %v362 = vpack.c.b16 %v352, %v351
        %v363 = vpack.c.b16 %v354, %v353
        %v364 = vpack.c.b16 %v356, %v355
        %v405 = vunpack.c.l.b16 %v276
        %v406 = vunpack.c.h.b16 %v276
        %v407 = vunpack.c.l.b16 %v277
        %v408 = vunpack.c.l.b16 %v278
        %v409 = vunpack.c.h.b16 %v278
        %v410 = vunpack.c.l.b16 %v279
        %v411 = vunpack.c.l.b16 %v280
        %v412 = vunpack.c.h.b16 %v280
        %v413 = vunpack.c.l.b16 %v281
        %v414 = vunpack.c.l.b16 %v282
        %v415 = vunpack.c.h.b16 %v282
        %v416 = vunpack.c.l.b16 %v283
        %v417 = vunpack.c.l.b16 %v284
        %v418 = vunpack.c.h.b16 %v284
        %v419 = vunpack.c.l.b16 %v285
        %v420 = vunpack.c.l.b16 %v286
        %v421 = vunpack.c.h.b16 %v286
        %v422 = vunpack.c.l.b16 %v287
        %v423 = vunpack.c.l.b16 %v288
        %v424 = vunpack.c.h.b16 %v288
        %v425 = vunpack.c.l.b16 %v289
        %v426 = vunpack.c.l.b16 %v290
        %v427 = vunpack.c.h.b16 %v290
        %v428 = vunpack.c.l.b16 %v291
        %v429 = vunpack.c.l.b16 %v292
        %v430 = vunpack.c.h.b16 %v292
        %v431 = vunpack.c.l.b16 %v293
        %v432 = vunpack.c.l.b16 %v294
        %v433 = vunpack.c.h.b16 %v294
        %v434 = vunpack.c.l.b16 %v295
        %v435 = vunpack.c.l.b16 %v296
        %v436 = vunpack.c.h.b16 %v296
        %v437 = vunpack.c.l.b16 %v297
        %v438 = vunpack.c.l.b16 %v298
        %v439 = vunpack.c.h.b16 %v298
        %v440 = vunpack.c.l.b16 %v299
        %v441 = vunpack.c.l.b16 %v300
        %v442 = vunpack.c.h.b16 %v300
        %v443 = vunpack.c.l.b16 %v301
        %v444 = vunpack.c.l.b16 %v302
        %v445 = vunpack.c.h.b16 %v302
        %v446 = vunpack.c.l.b16 %v303
        %v447 = vunpack.c.l.b16 %v304
        %v448 = vunpack.c.h.b16 %v304
        %v449 = vunpack.c.l.b16 %v305
        %v450 = vunpack.c.l.b16 %v306
        %v451 = vunpack.c.h.b16 %v306
        %v452 = vunpack.c.l.b16 %v307
        %v453 = vpack.c.b16 %v408, %v405
        %v454 = vpack.c.b16 %v409, %v406
        %v455 = vpack.c.b16 %v410, %v407
        %v456 = vpack.c.b16 %v414, %v411
        %v457 = vpack.c.b16 %v415, %v412
        %v458 = vpack.c.b16 %v416, %v413
        %v459 = vpack.c.b16 %v420, %v417
        %v460 = vpack.c.b16 %v421, %v418
        %v461 = vpack.c.b16 %v422, %v419
        %v462 = vpack.c.b16 %v426, %v423
        %v463 = vpack.c.b16 %v427, %v424
        %v464 = vpack.c.b16 %v428, %v425
        %v465 = vpack.c.b16 %v432, %v429
        %v466 = vpack.c.b16 %v433, %v430
        %v467 = vpack.c.b16 %v434, %v431
        %v468 = vpack.c.b16 %v438, %v435
        %v469 = vpack.c.b16 %v439, %v436
        %v470 = vpack.c.b16 %v440, %v437
        %v471 = vpack.c.b16 %v444, %v441
        %v472 = vpack.c.b16 %v445, %v442
        %v473 = vpack.c.b16 %v446, %v443
        %v474 = vpack.c.b16 %v450, %v447
        %v475 = vpack.c.b16 %v451, %v448
        %v476 = vpack.c.b16 %v452, %v449
        %501 = vmatprep.subr.bf16.mxu0 %v454
        %502 = vmatpush1.bf16.msra.mxu0 %v453
        %503 = vmatprep.subr.bf16.mxu0 %v457
        %504 = vmatpush1.bf16.msra.mxu0 %v456
        %505 = vmatprep.subr.bf16.mxu0 %v460
        %506 = vmatpush1.bf16.msra.mxu0 %v459
        %507 = vmatprep.subr.bf16.mxu0 %v463
        %508 = vmatpush1.bf16.msra.mxu0 %v462
        %509 = vmatprep.subr.bf16.mxu0 %v466
        %510 = vmatpush1.bf16.msra.mxu0 %v465
        %511 = vmatprep.subr.bf16.mxu0 %v469
        %512 = vmatpush1.bf16.msra.mxu0 %v468
        %513 = vmatprep.subr.bf16.mxu0 %v472
        %514 = vmatpush1.bf16.msra.mxu0 %v471
        %515 = vmatprep.subr.bf16.mxu0 %v475
        %516 = vmatpush1.bf16.msra.mxu0 %v474
        %517 = vmatprep.subr.bf16.mxu0 0
        %518 = vmatpush1.bf16.msra.mxu0 0
        %519 = vmatprep.subr.bf16.mxu0 0
        %520 = vmatpush1.bf16.msra.mxu0 0
        %521 = vmatprep.subr.bf16.mxu0 0
        %522 = vmatpush1.bf16.msra.mxu0 0
        %523 = vmatprep.subr.bf16.mxu0 0
        %524 = vmatpush1.bf16.msra.mxu0 0
        %525 = vmatprep.subr.bf16.mxu0 0
        %526 = vmatpush1.bf16.msra.mxu0 0
        %527 = vmatprep.subr.bf16.mxu0 0
        %528 = vmatpush1.bf16.msra.mxu0 0
        %529 = vmatprep.subr.bf16.mxu0 0
        %530 = vmatpush1.bf16.msra.mxu0 0
        %531 = vmatprep.subr.bf16.mxu0 0
        %532 = vmatpush1.bf16.msra.mxu0 0
        %533 = vmatprep.mubr.bf16.mxu0 0
        %534 = vmatmul.mubr.bf16.gmra.mrb[0].mxu0 %v357
        %v535 = vpop.f32.mrb[0].mxu0
        %v536 = vadd.f32 %v313, %v535
        %v537 = vpop.f32.mrb[0].mxu0
        %v538 = vadd.f32 %v317, %v537
        %v539 = vpop.f32.mrb[0].mxu0
        %v540 = vadd.f32 %v313, %v539
        %v541 = vpop.f32.mrb[0].mxu0
        %v542 = vadd.f32 %v317, %v541
        %543 = vmatprep.mubr.bf16.mxu0 0
        %544 = vmatmul.mubr.bf16.gmra.mrb[0].mxu0 %v358
        %v545 = vpop.f32.mrb[0].mxu0
        %v546 = vadd.f32 %v313, %v545
        %v547 = vpop.f32.mrb[0].mxu0
        %v548 = vadd.f32 %v317, %v547
        %v549 = vpop.f32.mrb[0].mxu0
        %v550 = vadd.f32 %v313, %v549
        %v551 = vpop.f32.mrb[0].mxu0
        %v552 = vadd.f32 %v317, %v551
        %553 = vmatprep.mubr.bf16.mxu0 0
        %554 = vmatmul.mubr.bf16.gmra.mrb[0].mxu0 %v359
        %v555 = vpop.f32.mrb[0].mxu0
        %v556 = vadd.f32 %v313, %v555
        %v557 = vpop.f32.mrb[0].mxu0
        %v558 = vadd.f32 %v317, %v557
        %v559 = vpop.f32.mrb[0].mxu0
        %v560 = vadd.f32 %v313, %v559
        %v561 = vpop.f32.mrb[0].mxu0
        %v562 = vadd.f32 %v317, %v561
        %563 = vmatprep.mubr.bf16.mxu0 0
        %564 = vmatmul.mubr.bf16.gmra.mrb[0].mxu0 %v360
        %v565 = vpop.f32.mrb[0].mxu0
        %v566 = vadd.f32 %v313, %v565
        %v567 = vpop.f32.mrb[0].mxu0
        %v568 = vadd.f32 %v317, %v567
        %v569 = vpop.f32.mrb[0].mxu0
        %v570 = vadd.f32 %v313, %v569
        %v571 = vpop.f32.mrb[0].mxu0
        %v572 = vadd.f32 %v317, %v571
        %573 = vmatprep.mubr.bf16.mxu0 0
        %574 = vmatmul.mubr.bf16.gmra.mrb[0].mxu0 %v361
        %v575 = vpop.f32.mrb[0].mxu0
        %v576 = vadd.f32 %v313, %v575
        %v577 = vpop.f32.mrb[0].mxu0
        %v578 = vadd.f32 %v317, %v577
        %v579 = vpop.f32.mrb[0].mxu0
        %v580 = vadd.f32 %v313, %v579
        %v581 = vpop.f32.mrb[0].mxu0
        %v582 = vadd.f32 %v317, %v581
        %583 = vmatprep.mubr.bf16.mxu0 0
        %584 = vmatmul.mubr.bf16.gmra.mrb[0].mxu0 %v362
        %v585 = vpop.f32.mrb[0].mxu0
        %v586 = vadd.f32 %v313, %v585
        %v587 = vpop.f32.mrb[0].mxu0
        %v588 = vadd.f32 %v317, %v587
        %v589 = vpop.f32.mrb[0].mxu0
        %v590 = vadd.f32 %v313, %v589
        %v591 = vpop.f32.mrb[0].mxu0
        %v592 = vadd.f32 %v317, %v591
        %593 = vmatprep.mubr.bf16.mxu0 0
        %594 = vmatmul.mubr.bf16.gmra.mrb[0].mxu0 %v363
        %v595 = vpop.f32.mrb[0].mxu0
        %v596 = vadd.f32 %v313, %v595
        %v597 = vpop.f32.mrb[0].mxu0
        %v598 = vadd.f32 %v317, %v597
        %v599 = vpop.f32.mrb[0].mxu0
        %v600 = vadd.f32 %v313, %v599
        %v601 = vpop.f32.mrb[0].mxu0
        %v602 = vadd.f32 %v317, %v601
        %603 = vmatprep.mubr.bf16.mxu0 0
        %604 = vmatmul.mubr.bf16.gmra.mrb[0].mxu0 %v364
        %v605 = vpop.f32.mrb[0].mxu0
        %v606 = vadd.f32 %v313, %v605
        %v607 = vpop.f32.mrb[0].mxu0
        %v608 = vadd.f32 %v317, %v607
        %v609 = vpop.f32.mrb[0].mxu0
        %v610 = vadd.f32 %v313, %v609
        %v611 = vpop.f32.mrb[0].mxu0
        %v612 = vadd.f32 %v317, %v611
        %613 = vdwg.mxu0
        %614 = vmatprep.subr.bf16.mxu0 0
        %615 = vmatpush1.bf16.msra.mxu0 %v455
        %616 = vmatprep.subr.bf16.mxu0 0
        %617 = vmatpush1.bf16.msra.mxu0 %v458
        %618 = vmatprep.subr.bf16.mxu0 0
        %619 = vmatpush1.bf16.msra.mxu0 %v461
        %620 = vmatprep.subr.bf16.mxu0 0
        %621 = vmatpush1.bf16.msra.mxu0 %v464
        %622 = vmatprep.subr.bf16.mxu0 0
        %623 = vmatpush1.bf16.msra.mxu0 %v467
        %624 = vmatprep.subr.bf16.mxu0 0
        %625 = vmatpush1.bf16.msra.mxu0 %v470
        %626 = vmatprep.subr.bf16.mxu0 0
        %627 = vmatpush1.bf16.msra.mxu0 %v473
        %628 = vmatprep.subr.bf16.mxu0 0
        %629 = vmatpush1.bf16.msra.mxu0 %v476
        %630 = vmatprep.subr.bf16.mxu0 0
        %631 = vmatpush1.bf16.msra.mxu0 0
        %632 = vmatprep.subr.bf16.mxu0 0
        %633 = vmatpush1.bf16.msra.mxu0 0
        %634 = vmatprep.subr.bf16.mxu0 0
        %635 = vmatpush1.bf16.msra.mxu0 0
        %636 = vmatprep.subr.bf16.mxu0 0
        %637 = vmatpush1.bf16.msra.mxu0 0
        %638 = vmatprep.subr.bf16.mxu0 0
        %639 = vmatpush1.bf16.msra.mxu0 0
        %640 = vmatprep.subr.bf16.mxu0 0
        %641 = vmatpush1.bf16.msra.mxu0 0
        %642 = vmatprep.subr.bf16.mxu0 0
        %643 = vmatpush1.bf16.msra.mxu0 0
        %644 = vmatprep.subr.bf16.mxu0 0
        %645 = vmatpush1.bf16.msra.mxu0 0
        %646 = vmatprep.mubr.bf16.mxu0 0
        %647 = vmatmul.mubr.bf16.gmra.mrb[0].mxu0 %v357
        %v648 = vpop.f32.mrb[0].mxu0
        %v649 = vadd.f32 %v321, %v648
        %v650 = vpop.f32.mrb[0].mxu0
        %v651 = vpop.f32.mrb[0].mxu0
        %v652 = vadd.f32 %v321, %v651
        %v653 = vpop.f32.mrb[0].mxu0
        %654 = vmatprep.mubr.bf16.mxu0 0
        %655 = vmatmul.mubr.bf16.gmra.mrb[0].mxu0 %v358
        %v656 = vpop.f32.mrb[0].mxu0
        %v657 = vadd.f32 %v321, %v656
        %v658 = vpop.f32.mrb[0].mxu0
        %v659 = vpop.f32.mrb[0].mxu0
        %v660 = vadd.f32 %v321, %v659
        %v661 = vpop.f32.mrb[0].mxu0
        %662 = vmatprep.mubr.bf16.mxu0 0
        %663 = vmatmul.mubr.bf16.gmra.mrb[0].mxu0 %v359
        %v664 = vpop.f32.mrb[0].mxu0
        %v665 = vadd.f32 %v321, %v664
        %v666 = vpop.f32.mrb[0].mxu0
        %v667 = vpop.f32.mrb[0].mxu0
        %v668 = vadd.f32 %v321, %v667
        %v669 = vpop.f32.mrb[0].mxu0
        %670 = vmatprep.mubr.bf16.mxu0 0
        %671 = vmatmul.mubr.bf16.gmra.mrb[0].mxu0 %v360
        %v672 = vpop.f32.mrb[0].mxu0
        %v673 = vadd.f32 %v321, %v672
        %v674 = vpop.f32.mrb[0].mxu0
        %v675 = vpop.f32.mrb[0].mxu0
        %v676 = vadd.f32 %v321, %v675
        %v677 = vpop.f32.mrb[0].mxu0
        %678 = vmatprep.mubr.bf16.mxu0 0
        %679 = vmatmul.mubr.bf16.gmra.mrb[0].mxu0 %v361
        %v680 = vpop.f32.mrb[0].mxu0
        %v681 = vadd.f32 %v321, %v680
        %v682 = vpop.f32.mrb[0].mxu0
        %v683 = vpop.f32.mrb[0].mxu0
        %v684 = vadd.f32 %v321, %v683
        %v685 = vpop.f32.mrb[0].mxu0
        %686 = vmatprep.mubr.bf16.mxu0 0
        %687 = vmatmul.mubr.bf16.gmra.mrb[0].mxu0 %v362
        %v688 = vpop.f32.mrb[0].mxu0
        %v689 = vadd.f32 %v321, %v688
        %v690 = vpop.f32.mrb[0].mxu0
        %v691 = vpop.f32.mrb[0].mxu0
        %v692 = vadd.f32 %v321, %v691
        %v693 = vpop.f32.mrb[0].mxu0
        %694 = vmatprep.mubr.bf16.mxu0 0
        %695 = vmatmul.mubr.bf16.gmra.mrb[0].mxu0 %v363
        %v696 = vpop.f32.mrb[0].mxu0
        %v697 = vadd.f32 %v321, %v696
        %v698 = vpop.f32.mrb[0].mxu0
        %v699 = vpop.f32.mrb[0].mxu0
        %v700 = vadd.f32 %v321, %v699
        %v701 = vpop.f32.mrb[0].mxu0
        %702 = vmatprep.mubr.bf16.mxu0 0
        %703 = vmatmul.mubr.bf16.gmra.mrb[0].mxu0 %v364
        %v704 = vpop.f32.mrb[0].mxu0
        %v705 = vadd.f32 %v321, %v704
        %v706 = vpop.f32.mrb[0].mxu0
        %v707 = vpop.f32.mrb[0].mxu0
        %v708 = vadd.f32 %v321, %v707
        %v709 = vpop.f32.mrb[0].mxu0
        %710 = vdwg.mxu0
        %v711 = vpack.c.bf16 %v540, %v536
        %v712 = vpack.c.bf16 %v542, %v538
        %v713 = vpack.c.bf16 %v652, %v649
        %v714 = vpack.c.bf16 %v550, %v546
        %v715 = vpack.c.bf16 %v552, %v548
        %v716 = vpack.c.bf16 %v660, %v657
        %v717 = vpack.c.bf16 %v560, %v556
        %v718 = vpack.c.bf16 %v562, %v558
        %v719 = vpack.c.bf16 %v668, %v665
        %v720 = vpack.c.bf16 %v570, %v566
        %v721 = vpack.c.bf16 %v572, %v568
        %v722 = vpack.c.bf16 %v676, %v673
        %v723 = vpack.c.bf16 %v580, %v576
        %v724 = vpack.c.bf16 %v582, %v578
        %v725 = vpack.c.bf16 %v684, %v681
        %v726 = vpack.c.bf16 %v590, %v586
        %v727 = vpack.c.bf16 %v592, %v588
        %v728 = vpack.c.bf16 %v692, %v689
        %v729 = vpack.c.bf16 %v600, %v596
        %v730 = vpack.c.bf16 %v602, %v598
        %v731 = vpack.c.bf16 %v700, %v697
        %v732 = vpack.c.bf16 %v610, %v606
        %v733 = vpack.c.bf16 %v612, %v608
        %v734 = vpack.c.bf16 %v708, %v705
        %751 = vrot.lane.b32.xlu0 %v711, 32
        %v752 = vpop.permute.xlu0 %751
        %753 = vrot.lane.b32.xlu0 %v712, 32
        %v754 = vpop.permute.xlu0 %753
        %755 = vrot.lane.b32.xlu0 %v714, 32
        %v756 = vpop.permute.xlu0 %755
        %757 = vrot.lane.b32.xlu0 %v715, 32
        %v758 = vpop.permute.xlu0 %757
        %759 = vrot.lane.b32.xlu0 %v717, 32
        %v760 = vpop.permute.xlu0 %759
        %761 = vrot.lane.b32.xlu0 %v718, 32
        %v762 = vpop.permute.xlu0 %761
        %763 = vrot.lane.b32.xlu0 %v720, 32
        %v764 = vpop.permute.xlu0 %763
        %765 = vrot.lane.b32.xlu0 %v721, 32
        %v766 = vpop.permute.xlu0 %765
        %767 = vrot.lane.b32.xlu0 %v723, 32
        %v768 = vpop.permute.xlu0 %767
        %769 = vrot.lane.b32.xlu0 %v724, 32
        %v770 = vpop.permute.xlu0 %769
        %771 = vrot.lane.b32.xlu0 %v726, 32
        %v772 = vpop.permute.xlu0 %771
        %773 = vrot.lane.b32.xlu0 %v727, 32
        %v774 = vpop.permute.xlu0 %773
        %775 = vrot.lane.b32.xlu0 %v729, 32
        %v776 = vpop.permute.xlu0 %775
        %777 = vrot.lane.b32.xlu0 %v730, 32
        %v778 = vpop.permute.xlu0 %777
        %779 = vrot.lane.b32.xlu0 %v732, 32
        %v780 = vpop.permute.xlu0 %779
        %781 = vrot.lane.b32.xlu0 %v733, 32
        %v782 = vpop.permute.xlu0 %781
        %vm783 = vcmask 261120
        %v784 = vsel %vm783, %v752, %v754
        %v785 = vsel %vm783, %v756, %v758
        %v786 = vsel %vm783, %v760, %v762
        %v787 = vsel %vm783, %v764, %v766
        %v788 = vsel %vm783, %v768, %v770
        %v789 = vsel %vm783, %v772, %v774
        %v790 = vsel %vm783, %v776, %v778
        %v791 = vsel %vm783, %v780, %v782
        %800 = vrot.lane.b32.xlu0 %v712, 64
        %v801 = vpop.permute.xlu0 %800
        %802 = vrot.lane.b32.xlu0 %v713, 64
        %v803 = vpop.permute.xlu0 %802
        %804 = vrot.lane.b32.xlu0 %v715, 64
        %v805 = vpop.permute.xlu0 %804
        %806 = vrot.lane.b32.xlu0 %v716, 64
        %v807 = vpop.permute.xlu0 %806
        %808 = vrot.lane.b32.xlu0 %v718, 64
        %v809 = vpop.permute.xlu0 %808
        %810 = vrot.lane.b32.xlu0 %v719, 64
        %v811 = vpop.permute.xlu0 %810
        %812 = vrot.lane.b32.xlu0 %v721, 64
        %v813 = vpop.permute.xlu0 %812
        %814 = vrot.lane.b32.xlu0 %v722, 64
        %v815 = vpop.permute.xlu0 %814
        %816 = vrot.lane.b32.xlu0 %v724, 64
        %v817 = vpop.permute.xlu0 %816
        %818 = vrot.lane.b32.xlu0 %v725, 64
        %v819 = vpop.permute.xlu0 %818
        %820 = vrot.lane.b32.xlu0 %v727, 64
        %v821 = vpop.permute.xlu0 %820
        %822 = vrot.lane.b32.xlu0 %v728, 64
        %v823 = vpop.permute.xlu0 %822
        %824 = vrot.lane.b32.xlu0 %v730, 64
        %v825 = vpop.permute.xlu0 %824
        %826 = vrot.lane.b32.xlu0 %v731, 64
        %v827 = vpop.permute.xlu0 %826
        %828 = vrot.lane.b32.xlu0 %v733, 64
        %v829 = vpop.permute.xlu0 %828
        %830 = vrot.lane.b32.xlu0 %v734, 64
        %v831 = vpop.permute.xlu0 %830
        %vm832 = vcmask 523264
        %v833 = vsel %vm832, %v801, %v803
        %v834 = vsel %vm832, %v805, %v807
        %v835 = vsel %vm832, %v809, %v811
        %v836 = vsel %vm832, %v813, %v815
        %v837 = vsel %vm832, %v817, %v819
        %v838 = vsel %vm832, %v821, %v823
        %v839 = vsel %vm832, %v825, %v827
        %v840 = vsel %vm832, %v829, %v831
        %841 = vrot.lane.b32.xlu0 %v713, 96
        %v842 = vpop.permute.xlu0 %841
        %843 = vrot.lane.b32.xlu0 %v716, 96
        %v844 = vpop.permute.xlu0 %843
        %845 = vrot.lane.b32.xlu0 %v719, 96
        %v846 = vpop.permute.xlu0 %845
        %847 = vrot.lane.b32.xlu0 %v722, 96
        %v848 = vpop.permute.xlu0 %847
        %849 = vrot.lane.b32.xlu0 %v725, 96
        %v850 = vpop.permute.xlu0 %849
        %851 = vrot.lane.b32.xlu0 %v728, 96
        %v852 = vpop.permute.xlu0 %851
        %853 = vrot.lane.b32.xlu0 %v731, 96
        %v854 = vpop.permute.xlu0 %853
        %855 = vrot.lane.b32.xlu0 %v734, 96
        %v856 = vpop.permute.xlu0 %855
        %v857 = vld [vmem:[%s242] sm:$0xf]
        %v858 = vld [vmem:[%s242 + $0x4] sm:$0xf]
        %v859 = vld [vmem:[%s242 + $0x8] sm:$0xf]
        %v860 = vld [vmem:[%s242 + $0xc] sm:$0xf]
        %v861 = vld [vmem:[%s242 + $0x10] sm:$0xf]
        %v862 = vld [vmem:[%s242 + $0x14] sm:$0xf]
        %v863 = vld [vmem:[%s242 + $0x18] sm:$0xf]
        %v864 = vld [vmem:[%s242 + $0x1c] sm:$0xf]
        %v865 = vld [vmem:[%s242 + $0x20] sm:$0xf]
        %v866 = vld [vmem:[%s242 + $0x24] sm:$0xf]
        %v867 = vld [vmem:[%s242 + $0x28] sm:$0xf]
        %v868 = vld [vmem:[%s242 + $0x2c] sm:$0xf]
        %v869 = vld [vmem:[%s242 + $0x30] sm:$0xf]
        %v870 = vld [vmem:[%s242 + $0x34] sm:$0xf]
        %v871 = vld [vmem:[%s242 + $0x38] sm:$0xf]
        %v872 = vld [vmem:[%s242 + $0x3c] sm:$0xf]
        %v873 = vunpack.c.l.bf16 %v857
        %v874 = vunpack.c.l.bf16 %v858
        %v875 = vunpack.c.l.bf16 %v859
        %v876 = vunpack.c.l.bf16 %v860
        %v877 = vunpack.c.l.bf16 %v861
        %v878 = vunpack.c.l.bf16 %v862
        %v879 = vunpack.c.l.bf16 %v863
        %v880 = vunpack.c.l.bf16 %v864
        %v881 = vunpack.c.l.bf16 %v865
        %v882 = vunpack.c.l.bf16 %v866
        %v883 = vunpack.c.l.bf16 %v867
        %v884 = vunpack.c.l.bf16 %v868
        %v885 = vunpack.c.l.bf16 %v869
        %v886 = vunpack.c.l.bf16 %v870
        %v887 = vunpack.c.l.bf16 %v871
        %v888 = vunpack.c.l.bf16 %v872
        %v889 = vsub.f32 %v873, 1.0
        %v890 = vsub.f32 %v874, 1.0
        %v891 = vsub.f32 %v875, 1.0
        %v892 = vsub.f32 %v876, 1.0
        %v893 = vsub.f32 %v877, 1.0
        %v894 = vsub.f32 %v878, 1.0
        %v895 = vsub.f32 %v879, 1.0
        %v896 = vsub.f32 %v880, 1.0
        %v897 = vsub.f32 %v881, 1.0
        %v898 = vsub.f32 %v882, 1.0
        %v899 = vsub.f32 %v883, 1.0
        %v900 = vsub.f32 %v884, 1.0
        %v901 = vsub.f32 %v885, 1.0
        %v902 = vsub.f32 %v886, 1.0
        %v903 = vsub.f32 %v887, 1.0
        %v904 = vsub.f32 %v888, 1.0
        %v905 = vmul.f32 %v889, 1e+09
        %v906 = vmul.f32 %v890, 1e+09
        %v907 = vmul.f32 %v891, 1e+09
        %v908 = vmul.f32 %v892, 1e+09
        %v909 = vmul.f32 %v893, 1e+09
        %v910 = vmul.f32 %v894, 1e+09
        %v911 = vmul.f32 %v895, 1e+09
        %v912 = vmul.f32 %v896, 1e+09
        %v913 = vmul.f32 %v897, 1e+09
        %v914 = vmul.f32 %v898, 1e+09
        %v915 = vmul.f32 %v899, 1e+09
        %v916 = vmul.f32 %v900, 1e+09
        %v917 = vmul.f32 %v901, 1e+09
        %v918 = vmul.f32 %v902, 1e+09
        %v919 = vmul.f32 %v903, 1e+09
        %v920 = vmul.f32 %v904, 1e+09
        %921 = vrot.lane.b32.xlu0 %v711, 96
        %v922 = vpop.permute.xlu0 %921
        %923 = vrot.lane.b32.xlu0 %v714, 96
        %v924 = vpop.permute.xlu0 %923
        %925 = vrot.lane.b32.xlu0 %v717, 96
        %v926 = vpop.permute.xlu0 %925
        %927 = vrot.lane.b32.xlu0 %v720, 96
        %v928 = vpop.permute.xlu0 %927
        %929 = vrot.lane.b32.xlu0 %v723, 96
        %v930 = vpop.permute.xlu0 %929
        %931 = vrot.lane.b32.xlu0 %v726, 96
        %v932 = vpop.permute.xlu0 %931
        %933 = vrot.lane.b32.xlu0 %v729, 96
        %v934 = vpop.permute.xlu0 %933
        %935 = vrot.lane.b32.xlu0 %v732, 96
        %v936 = vpop.permute.xlu0 %935
        %vm937 = vcmask 261120
        %v939 = vsel %vm937, %v711, 0
        %v942 = vsel %vm937, %v714, 0
        %v945 = vsel %vm937, %v717, 0
        %v948 = vsel %vm937, %v720, 0
        %v951 = vsel %vm937, %v723, 0
        %v954 = vsel %vm937, %v726, 0
        %v957 = vsel %vm937, %v729, 0
        %v960 = vsel %vm937, %v732, 0
        %v963 = vsel %vm937, %v922, 0
        %v966 = vsel %vm937, %v924, 0
        %v969 = vsel %vm937, %v926, 0
        %v972 = vsel %vm937, %v928, 0
        %v975 = vsel %vm937, %v930, 0
        %v978 = vsel %vm937, %v932, 0
        %v981 = vsel %vm937, %v934, 0
        %v984 = vsel %vm937, %v936, 0
        %986 = vmatprep.subr.bf16.mxu0 0
        %987 = vmatpush1.bf16.xpose.msra.mxu0 %v963
        %988 = vmatprep.subr.bf16.mxu0 0
        %989 = vmatpush1.bf16.xpose.msra.mxu0 %v966
        %990 = vmatprep.subr.bf16.mxu0 0
        %991 = vmatpush1.bf16.xpose.msra.mxu0 %v969
        %992 = vmatprep.subr.bf16.mxu0 0
        %993 = vmatpush1.bf16.xpose.msra.mxu0 %v972
        %994 = vmatprep.subr.bf16.mxu0 0
        %995 = vmatpush1.bf16.xpose.msra.mxu0 %v975
        %996 = vmatprep.subr.bf16.mxu0 0
        %997 = vmatpush1.bf16.xpose.msra.mxu0 %v978
        %998 = vmatprep.subr.bf16.mxu0 0
        %999 = vmatpush1.bf16.xpose.msra.mxu0 %v981
        %1000 = vmatprep.subr.bf16.mxu0 0
        %1001 = vmatpush1.bf16.xpose.msra.mxu0 %v984
        %1002 = vmatprep.subr.bf16.mxu0 0
        %1003 = vmatpush1.bf16.xpose.msra.mxu0 0
        %1004 = vmatprep.subr.bf16.mxu0 0
        %1005 = vmatpush1.bf16.xpose.msra.mxu0 0
        %1006 = vmatprep.subr.bf16.mxu0 0
        %1007 = vmatpush1.bf16.xpose.msra.mxu0 0
        %1008 = vmatprep.subr.bf16.mxu0 0
        %1009 = vmatpush1.bf16.xpose.msra.mxu0 0
        %1010 = vmatprep.subr.bf16.mxu0 0
        %1011 = vmatpush1.bf16.xpose.msra.mxu0 0
        %1012 = vmatprep.subr.bf16.mxu0 0
        %1013 = vmatpush1.bf16.xpose.msra.mxu0 0
        %1014 = vmatprep.subr.bf16.mxu0 0
        %1015 = vmatpush1.bf16.xpose.msra.mxu0 0
        %1016 = vmatprep.subr.bf16.mxu0 0
        %1017 = vmatpush1.bf16.xpose.msra.mxu0 0
        %1018 = vmatprep.mubr.bf16.mxu0 0
        %1019 = vmatmul.mubr.bf16.gmra.mrb[0].mxu0 %v939
        %v1020 = vpop.f32.mrb[0].mxu0
        %v1021 = vadd.f32 %v905, %v1020
        %v1022 = vpop.f32.mrb[0].mxu0
        %v1023 = vpop.f32.mrb[0].mxu0
        %v1024 = vadd.f32 %v906, %v1023
        %v1025 = vpop.f32.mrb[0].mxu0
        %1026 = vmatprep.mubr.bf16.mxu0 0
        %1027 = vmatmul.mubr.bf16.gmra.mrb[0].mxu0 %v942
        %v1028 = vpop.f32.mrb[0].mxu0
        %v1029 = vadd.f32 %v907, %v1028
        %v1030 = vpop.f32.mrb[0].mxu0
        %v1031 = vpop.f32.mrb[0].mxu0
        %v1032 = vadd.f32 %v908, %v1031
        %v1033 = vpop.f32.mrb[0].mxu0
        %1034 = vmatprep.mubr.bf16.mxu0 0
        %1035 = vmatmul.mubr.bf16.gmra.mrb[0].mxu0 %v945
        %v1036 = vpop.f32.mrb[0].mxu0
        %v1037 = vadd.f32 %v909, %v1036
        %v1038 = vpop.f32.mrb[0].mxu0
        %v1039 = vpop.f32.mrb[0].mxu0
        %v1040 = vadd.f32 %v910, %v1039
        %v1041 = vpop.f32.mrb[0].mxu0
        %1042 = vmatprep.mubr.bf16.mxu0 0
        %1043 = vmatmul.mubr.bf16.gmra.mrb[0].mxu0 %v948
        %v1044 = vpop.f32.mrb[0].mxu0
        %v1045 = vadd.f32 %v911, %v1044
        %v1046 = vpop.f32.mrb[0].mxu0
        %v1047 = vpop.f32.mrb[0].mxu0
        %v1048 = vadd.f32 %v912, %v1047
        %v1049 = vpop.f32.mrb[0].mxu0
        %1050 = vmatprep.mubr.bf16.mxu0 0
        %1051 = vmatmul.mubr.bf16.gmra.mrb[0].mxu0 %v951
        %v1052 = vpop.f32.mrb[0].mxu0
        %v1053 = vadd.f32 %v913, %v1052
        %v1054 = vpop.f32.mrb[0].mxu0
        %v1055 = vpop.f32.mrb[0].mxu0
        %v1056 = vadd.f32 %v914, %v1055
        %v1057 = vpop.f32.mrb[0].mxu0
        %1058 = vmatprep.mubr.bf16.mxu0 0
        %1059 = vmatmul.mubr.bf16.gmra.mrb[0].mxu0 %v954
        %v1060 = vpop.f32.mrb[0].mxu0
        %v1061 = vadd.f32 %v915, %v1060
        %v1062 = vpop.f32.mrb[0].mxu0
        %v1063 = vpop.f32.mrb[0].mxu0
        %v1064 = vadd.f32 %v916, %v1063
        %v1065 = vpop.f32.mrb[0].mxu0
        %1066 = vmatprep.mubr.bf16.mxu0 0
        %1067 = vmatmul.mubr.bf16.gmra.mrb[0].mxu0 %v957
        %v1068 = vpop.f32.mrb[0].mxu0
        %v1069 = vadd.f32 %v917, %v1068
        %v1070 = vpop.f32.mrb[0].mxu0
        %v1071 = vpop.f32.mrb[0].mxu0
        %v1072 = vadd.f32 %v918, %v1071
        %v1073 = vpop.f32.mrb[0].mxu0
        %1074 = vmatprep.mubr.bf16.mxu0 0
        %1075 = vmatmul.mubr.bf16.gmra.mrb[0].mxu0 %v960
        %v1076 = vpop.f32.mrb[0].mxu0
        %v1077 = vadd.f32 %v919, %v1076
        %v1078 = vpop.f32.mrb[0].mxu0
        %v1079 = vpop.f32.mrb[0].mxu0
        %v1080 = vadd.f32 %v920, %v1079
        %v1081 = vpop.f32.mrb[0].mxu0
        %1082 = vdwg.mxu0
        %1083 = vrot.lane.b32.xlu0 %v784, 96
        %v1084 = vpop.permute.xlu0 %1083
        %1085 = vrot.lane.b32.xlu0 %v785, 96
        %v1086 = vpop.permute.xlu0 %1085
        %1087 = vrot.lane.b32.xlu0 %v786, 96
        %v1088 = vpop.permute.xlu0 %1087
        %1089 = vrot.lane.b32.xlu0 %v787, 96
        %v1090 = vpop.permute.xlu0 %1089
        %1091 = vrot.lane.b32.xlu0 %v788, 96
        %v1092 = vpop.permute.xlu0 %1091
        %1093 = vrot.lane.b32.xlu0 %v789, 96
        %v1094 = vpop.permute.xlu0 %1093
        %1095 = vrot.lane.b32.xlu0 %v790, 96
        %v1096 = vpop.permute.xlu0 %1095
        %1097 = vrot.lane.b32.xlu0 %v791, 96
        %v1098 = vpop.permute.xlu0 %1097
        %v1100 = vsel %vm937, %v784, 0
        %v1103 = vsel %vm937, %v785, 0
        %v1106 = vsel %vm937, %v786, 0
        %v1109 = vsel %vm937, %v787, 0
        %v1112 = vsel %vm937, %v788, 0
        %v1115 = vsel %vm937, %v789, 0
        %v1118 = vsel %vm937, %v790, 0
        %v1121 = vsel %vm937, %v791, 0
        %v1124 = vsel %vm937, %v1084, 0
        %v1127 = vsel %vm937, %v1086, 0
        %v1130 = vsel %vm937, %v1088, 0
        %v1133 = vsel %vm937, %v1090, 0
        %v1136 = vsel %vm937, %v1092, 0
        %v1139 = vsel %vm937, %v1094, 0
        %v1142 = vsel %vm937, %v1096, 0
        %v1145 = vsel %vm937, %v1098, 0
        %1147 = vmatprep.subr.bf16.mxu0 0
        %1148 = vmatpush1.bf16.xpose.msra.mxu0 %v1124
        %1149 = vmatprep.subr.bf16.mxu0 0
        %1150 = vmatpush1.bf16.xpose.msra.mxu0 %v1127
        %1151 = vmatprep.subr.bf16.mxu0 0
        %1152 = vmatpush1.bf16.xpose.msra.mxu0 %v1130
        %1153 = vmatprep.subr.bf16.mxu0 0
        %1154 = vmatpush1.bf16.xpose.msra.mxu0 %v1133
        %1155 = vmatprep.subr.bf16.mxu0 0
        %1156 = vmatpush1.bf16.xpose.msra.mxu0 %v1136
        %1157 = vmatprep.subr.bf16.mxu0 0
        %1158 = vmatpush1.bf16.xpose.msra.mxu0 %v1139
        %1159 = vmatprep.subr.bf16.mxu0 0
        %1160 = vmatpush1.bf16.xpose.msra.mxu0 %v1142
        %1161 = vmatprep.subr.bf16.mxu0 0
        %1162 = vmatpush1.bf16.xpose.msra.mxu0 %v1145
        %1163 = vmatprep.subr.bf16.mxu0 0
        %1164 = vmatpush1.bf16.xpose.msra.mxu0 0
        %1165 = vmatprep.subr.bf16.mxu0 0
        %1166 = vmatpush1.bf16.xpose.msra.mxu0 0
        %1167 = vmatprep.subr.bf16.mxu0 0
        %1168 = vmatpush1.bf16.xpose.msra.mxu0 0
        %1169 = vmatprep.subr.bf16.mxu0 0
        %1170 = vmatpush1.bf16.xpose.msra.mxu0 0
        %1171 = vmatprep.subr.bf16.mxu0 0
        %1172 = vmatpush1.bf16.xpose.msra.mxu0 0
        %1173 = vmatprep.subr.bf16.mxu0 0
        %1174 = vmatpush1.bf16.xpose.msra.mxu0 0
        %1175 = vmatprep.subr.bf16.mxu0 0
        %1176 = vmatpush1.bf16.xpose.msra.mxu0 0
        %1177 = vmatprep.subr.bf16.mxu0 0
        %1178 = vmatpush1.bf16.xpose.msra.mxu0 0
        %1179 = vmatprep.mubr.bf16.mxu0 0
        %1180 = vmatmul.mubr.bf16.gmra.mrb[0].mxu0 %v1100
        %v1181 = vpop.f32.mrb[0].mxu0
        %v1182 = vadd.f32 %v905, %v1181
        %v1183 = vpop.f32.mrb[0].mxu0
        %v1184 = vpop.f32.mrb[0].mxu0
        %v1185 = vadd.f32 %v906, %v1184
        %v1186 = vpop.f32.mrb[0].mxu0
        %1187 = vmatprep.mubr.bf16.mxu0 0
        %1188 = vmatmul.mubr.bf16.gmra.mrb[0].mxu0 %v1103
        %v1189 = vpop.f32.mrb[0].mxu0
        %v1190 = vadd.f32 %v907, %v1189
        %v1191 = vpop.f32.mrb[0].mxu0
        %v1192 = vpop.f32.mrb[0].mxu0
        %v1193 = vadd.f32 %v908, %v1192
        %v1194 = vpop.f32.mrb[0].mxu0
        %1195 = vmatprep.mubr.bf16.mxu0 0
        %1196 = vmatmul.mubr.bf16.gmra.mrb[0].mxu0 %v1106
        %v1197 = vpop.f32.mrb[0].mxu0
        %v1198 = vadd.f32 %v909, %v1197
        %v1199 = vpop.f32.mrb[0].mxu0
        %v1200 = vpop.f32.mrb[0].mxu0
        %v1201 = vadd.f32 %v910, %v1200
        %v1202 = vpop.f32.mrb[0].mxu0
        %1203 = vmatprep.mubr.bf16.mxu0 0
        %1204 = vmatmul.mubr.bf16.gmra.mrb[0].mxu0 %v1109
        %v1205 = vpop.f32.mrb[0].mxu0
        %v1206 = vadd.f32 %v911, %v1205
        %v1207 = vpop.f32.mrb[0].mxu0
        %v1208 = vpop.f32.mrb[0].mxu0
        %v1209 = vadd.f32 %v912, %v1208
        %v1210 = vpop.f32.mrb[0].mxu0
        %1211 = vmatprep.mubr.bf16.mxu0 0
        %1212 = vmatmul.mubr.bf16.gmra.mrb[0].mxu0 %v1112
        %v1213 = vpop.f32.mrb[0].mxu0
        %v1214 = vadd.f32 %v913, %v1213
        %v1215 = vpop.f32.mrb[0].mxu0
        %v1216 = vpop.f32.mrb[0].mxu0
        %v1217 = vadd.f32 %v914, %v1216
        %v1218 = vpop.f32.mrb[0].mxu0
        %1219 = vmatprep.mubr.bf16.mxu0 0
        %1220 = vmatmul.mubr.bf16.gmra.mrb[0].mxu0 %v1115
        %v1221 = vpop.f32.mrb[0].mxu0
        %v1222 = vadd.f32 %v915, %v1221
        %v1223 = vpop.f32.mrb[0].mxu0
        %v1224 = vpop.f32.mrb[0].mxu0
        %v1225 = vadd.f32 %v916, %v1224
        %v1226 = vpop.f32.mrb[0].mxu0
        %1227 = vmatprep.mubr.bf16.mxu0 0
        %1228 = vmatmul.mubr.bf16.gmra.mrb[0].mxu0 %v1118
        %v1229 = vpop.f32.mrb[0].mxu0
        %v1230 = vadd.f32 %v917, %v1229
        %v1231 = vpop.f32.mrb[0].mxu0
        %v1232 = vpop.f32.mrb[0].mxu0
        %v1233 = vadd.f32 %v918, %v1232
        %v1234 = vpop.f32.mrb[0].mxu0
        %1235 = vmatprep.mubr.bf16.mxu0 0
        %1236 = vmatmul.mubr.bf16.gmra.mrb[0].mxu0 %v1121
        %v1237 = vpop.f32.mrb[0].mxu0
        %v1238 = vadd.f32 %v919, %v1237
        %v1239 = vpop.f32.mrb[0].mxu0
        %v1240 = vpop.f32.mrb[0].mxu0
        %v1241 = vadd.f32 %v920, %v1240
        %v1242 = vpop.f32.mrb[0].mxu0
        %1243 = vdwg.mxu0
        %1244 = vrot.lane.b32.xlu0 %v833, 96
        %v1245 = vpop.permute.xlu0 %1244
        %1246 = vrot.lane.b32.xlu0 %v834, 96
        %v1247 = vpop.permute.xlu0 %1246
        %1248 = vrot.lane.b32.xlu0 %v835, 96
        %v1249 = vpop.permute.xlu0 %1248
        %1250 = vrot.lane.b32.xlu0 %v836, 96
        %v1251 = vpop.permute.xlu0 %1250
        %1252 = vrot.lane.b32.xlu0 %v837, 96
        %v1253 = vpop.permute.xlu0 %1252
        %1254 = vrot.lane.b32.xlu0 %v838, 96
        %v1255 = vpop.permute.xlu0 %1254
        %1256 = vrot.lane.b32.xlu0 %v839, 96
        %v1257 = vpop.permute.xlu0 %1256
        %1258 = vrot.lane.b32.xlu0 %v840, 96
        %v1259 = vpop.permute.xlu0 %1258
        %v1261 = vsel %vm937, %v833, 0
        %v1264 = vsel %vm937, %v834, 0
        %v1267 = vsel %vm937, %v835, 0
        %v1270 = vsel %vm937, %v836, 0
        %v1273 = vsel %vm937, %v837, 0
        %v1276 = vsel %vm937, %v838, 0
        %v1279 = vsel %vm937, %v839, 0
        %v1282 = vsel %vm937, %v840, 0
        %v1285 = vsel %vm937, %v1245, 0
        %v1288 = vsel %vm937, %v1247, 0
        %v1291 = vsel %vm937, %v1249, 0
        %v1294 = vsel %vm937, %v1251, 0
        %v1297 = vsel %vm937, %v1253, 0
        %v1300 = vsel %vm937, %v1255, 0
        %v1303 = vsel %vm937, %v1257, 0
        %v1306 = vsel %vm937, %v1259, 0
        %1308 = vmatprep.subr.bf16.mxu0 0
        %1309 = vmatpush1.bf16.xpose.msra.mxu0 %v1285
        %1310 = vmatprep.subr.bf16.mxu0 0
        %1311 = vmatpush1.bf16.xpose.msra.mxu0 %v1288
        %1312 = vmatprep.subr.bf16.mxu0 0
        %1313 = vmatpush1.bf16.xpose.msra.mxu0 %v1291
        %1314 = vmatprep.subr.bf16.mxu0 0
        %1315 = vmatpush1.bf16.xpose.msra.mxu0 %v1294
        %1316 = vmatprep.subr.bf16.mxu0 0
        %1317 = vmatpush1.bf16.xpose.msra.mxu0 %v1297
        %1318 = vmatprep.subr.bf16.mxu0 0
        %1319 = vmatpush1.bf16.xpose.msra.mxu0 %v1300
        %1320 = vmatprep.subr.bf16.mxu0 0
        %1321 = vmatpush1.bf16.xpose.msra.mxu0 %v1303
        %1322 = vmatprep.subr.bf16.mxu0 0
        %1323 = vmatpush1.bf16.xpose.msra.mxu0 %v1306
        %1324 = vmatprep.subr.bf16.mxu0 0
        %1325 = vmatpush1.bf16.xpose.msra.mxu0 0
        %1326 = vmatprep.subr.bf16.mxu0 0
        %1327 = vmatpush1.bf16.xpose.msra.mxu0 0
        %1328 = vmatprep.subr.bf16.mxu0 0
        %1329 = vmatpush1.bf16.xpose.msra.mxu0 0
        %1330 = vmatprep.subr.bf16.mxu0 0
        %1331 = vmatpush1.bf16.xpose.msra.mxu0 0
        %1332 = vmatprep.subr.bf16.mxu0 0
        %1333 = vmatpush1.bf16.xpose.msra.mxu0 0
        %1334 = vmatprep.subr.bf16.mxu0 0
        %1335 = vmatpush1.bf16.xpose.msra.mxu0 0
        %1336 = vmatprep.subr.bf16.mxu0 0
        %1337 = vmatpush1.bf16.xpose.msra.mxu0 0
        %1338 = vmatprep.subr.bf16.mxu0 0
        %1339 = vmatpush1.bf16.xpose.msra.mxu0 0
        %1340 = vmatprep.mubr.bf16.mxu0 0
        %1341 = vmatmul.mubr.bf16.gmra.mrb[0].mxu0 %v1261
        %v1342 = vpop.f32.mrb[0].mxu0
        %v1343 = vadd.f32 %v905, %v1342
        %v1344 = vpop.f32.mrb[0].mxu0
        %v1345 = vpop.f32.mrb[0].mxu0
        %v1346 = vadd.f32 %v906, %v1345
        %v1347 = vpop.f32.mrb[0].mxu0
        %1348 = vmatprep.mubr.bf16.mxu0 0
        %1349 = vmatmul.mubr.bf16.gmra.mrb[0].mxu0 %v1264
        %v1350 = vpop.f32.mrb[0].mxu0
        %v1351 = vadd.f32 %v907, %v1350
        %v1352 = vpop.f32.mrb[0].mxu0
        %v1353 = vpop.f32.mrb[0].mxu0
        %v1354 = vadd.f32 %v908, %v1353
        %v1355 = vpop.f32.mrb[0].mxu0
        %1356 = vmatprep.mubr.bf16.mxu0 0
        %1357 = vmatmul.mubr.bf16.gmra.mrb[0].mxu0 %v1267
        %v1358 = vpop.f32.mrb[0].mxu0
        %v1359 = vadd.f32 %v909, %v1358
        %v1360 = vpop.f32.mrb[0].mxu0
        %v1361 = vpop.f32.mrb[0].mxu0
        %v1362 = vadd.f32 %v910, %v1361
        %v1363 = vpop.f32.mrb[0].mxu0
        %1364 = vmatprep.mubr.bf16.mxu0 0
        %1365 = vmatmul.mubr.bf16.gmra.mrb[0].mxu0 %v1270
        %v1366 = vpop.f32.mrb[0].mxu0
        %v1367 = vadd.f32 %v911, %v1366
        %v1368 = vpop.f32.mrb[0].mxu0
        %v1369 = vpop.f32.mrb[0].mxu0
        %v1370 = vadd.f32 %v912, %v1369
        %v1371 = vpop.f32.mrb[0].mxu0
        %1372 = vmatprep.mubr.bf16.mxu0 0
        %1373 = vmatmul.mubr.bf16.gmra.mrb[0].mxu0 %v1273
        %v1374 = vpop.f32.mrb[0].mxu0
        %v1375 = vadd.f32 %v913, %v1374
        %v1376 = vpop.f32.mrb[0].mxu0
        %v1377 = vpop.f32.mrb[0].mxu0
        %v1378 = vadd.f32 %v914, %v1377
        %v1379 = vpop.f32.mrb[0].mxu0
        %1380 = vmatprep.mubr.bf16.mxu0 0
        %1381 = vmatmul.mubr.bf16.gmra.mrb[0].mxu0 %v1276
        %v1382 = vpop.f32.mrb[0].mxu0
        %v1383 = vadd.f32 %v915, %v1382
        %v1384 = vpop.f32.mrb[0].mxu0
        %v1385 = vpop.f32.mrb[0].mxu0
        %v1386 = vadd.f32 %v916, %v1385
        %v1387 = vpop.f32.mrb[0].mxu0
        %1388 = vmatprep.mubr.bf16.mxu0 0
        %1389 = vmatmul.mubr.bf16.gmra.mrb[0].mxu0 %v1279
        %v1390 = vpop.f32.mrb[0].mxu0
        %v1391 = vadd.f32 %v917, %v1390
        %v1392 = vpop.f32.mrb[0].mxu0
        %v1393 = vpop.f32.mrb[0].mxu0
        %v1394 = vadd.f32 %v918, %v1393
        %v1395 = vpop.f32.mrb[0].mxu0
        %1396 = vmatprep.mubr.bf16.mxu0 0
        %1397 = vmatmul.mubr.bf16.gmra.mrb[0].mxu0 %v1282
        %v1398 = vpop.f32.mrb[0].mxu0
        %v1399 = vadd.f32 %v919, %v1398
        %v1400 = vpop.f32.mrb[0].mxu0
        %v1401 = vpop.f32.mrb[0].mxu0
        %v1402 = vadd.f32 %v920, %v1401
        %v1403 = vpop.f32.mrb[0].mxu0
        %1404 = vdwg.mxu0
        %1405 = vrot.lane.b32.xlu0 %v842, 96
        %v1406 = vpop.permute.xlu0 %1405
        %1407 = vrot.lane.b32.xlu0 %v844, 96
        %v1408 = vpop.permute.xlu0 %1407
        %1409 = vrot.lane.b32.xlu0 %v846, 96
        %v1410 = vpop.permute.xlu0 %1409
        %1411 = vrot.lane.b32.xlu0 %v848, 96
        %v1412 = vpop.permute.xlu0 %1411
        %1413 = vrot.lane.b32.xlu0 %v850, 96
        %v1414 = vpop.permute.xlu0 %1413
        %1415 = vrot.lane.b32.xlu0 %v852, 96
        %v1416 = vpop.permute.xlu0 %1415
        %1417 = vrot.lane.b32.xlu0 %v854, 96
        %v1418 = vpop.permute.xlu0 %1417
        %1419 = vrot.lane.b32.xlu0 %v856, 96
        %v1420 = vpop.permute.xlu0 %1419
        %v1422 = vsel %vm937, %v842, 0
        %v1425 = vsel %vm937, %v844, 0
        %v1428 = vsel %vm937, %v846, 0
        %v1431 = vsel %vm937, %v848, 0
        %v1434 = vsel %vm937, %v850, 0
        %v1437 = vsel %vm937, %v852, 0
        %v1440 = vsel %vm937, %v854, 0
        %v1443 = vsel %vm937, %v856, 0
        %v1446 = vsel %vm937, %v1406, 0
        %v1449 = vsel %vm937, %v1408, 0
        %v1452 = vsel %vm937, %v1410, 0
        %v1455 = vsel %vm937, %v1412, 0
        %v1458 = vsel %vm937, %v1414, 0
        %v1461 = vsel %vm937, %v1416, 0
        %v1464 = vsel %vm937, %v1418, 0
        %v1467 = vsel %vm937, %v1420, 0
        %1469 = vmatprep.subr.bf16.mxu0 0
        %1470 = vmatpush1.bf16.xpose.msra.mxu0 %v1446
        %1471 = vmatprep.subr.bf16.mxu0 0
        %1472 = vmatpush1.bf16.xpose.msra.mxu0 %v1449
        %1473 = vmatprep.subr.bf16.mxu0 0
        %1474 = vmatpush1.bf16.xpose.msra.mxu0 %v1452
        %1475 = vmatprep.subr.bf16.mxu0 0
        %1476 = vmatpush1.bf16.xpose.msra.mxu0 %v1455
        %1477 = vmatprep.subr.bf16.mxu0 0
        %1478 = vmatpush1.bf16.xpose.msra.mxu0 %v1458
        %1479 = vmatprep.subr.bf16.mxu0 0
        %1480 = vmatpush1.bf16.xpose.msra.mxu0 %v1461
        %1481 = vmatprep.subr.bf16.mxu0 0
        %1482 = vmatpush1.bf16.xpose.msra.mxu0 %v1464
        %1483 = vmatprep.subr.bf16.mxu0 0
        %1484 = vmatpush1.bf16.xpose.msra.mxu0 %v1467
        %1485 = vmatprep.subr.bf16.mxu0 0
        %1486 = vmatpush1.bf16.xpose.msra.mxu0 0
        %1487 = vmatprep.subr.bf16.mxu0 0
        %1488 = vmatpush1.bf16.xpose.msra.mxu0 0
        %1489 = vmatprep.subr.bf16.mxu0 0
        %1490 = vmatpush1.bf16.xpose.msra.mxu0 0
        %1491 = vmatprep.subr.bf16.mxu0 0
        %1492 = vmatpush1.bf16.xpose.msra.mxu0 0
        %1493 = vmatprep.subr.bf16.mxu0 0
        %1494 = vmatpush1.bf16.xpose.msra.mxu0 0
        %1495 = vmatprep.subr.bf16.mxu0 0
        %1496 = vmatpush1.bf16.xpose.msra.mxu0 0
        %1497 = vmatprep.subr.bf16.mxu0 0
        %1498 = vmatpush1.bf16.xpose.msra.mxu0 0
        %1499 = vmatprep.subr.bf16.mxu0 0
        %1500 = vmatpush1.bf16.xpose.msra.mxu0 0
        %1501 = vmatprep.mubr.bf16.mxu0 0
        %1502 = vmatmul.mubr.bf16.gmra.mrb[0].mxu0 %v1422
        %v1503 = vpop.f32.mrb[0].mxu0
        %v1504 = vadd.f32 %v905, %v1503
        %v1505 = vpop.f32.mrb[0].mxu0
        %v1506 = vpop.f32.mrb[0].mxu0
        %v1507 = vadd.f32 %v906, %v1506
        %v1508 = vpop.f32.mrb[0].mxu0
        %1509 = vmatprep.mubr.bf16.mxu0 0
        %1510 = vmatmul.mubr.bf16.gmra.mrb[0].mxu0 %v1425
        %v1511 = vpop.f32.mrb[0].mxu0
        %v1512 = vadd.f32 %v907, %v1511
        %v1513 = vpop.f32.mrb[0].mxu0
        %v1514 = vpop.f32.mrb[0].mxu0
        %v1515 = vadd.f32 %v908, %v1514
        %v1516 = vpop.f32.mrb[0].mxu0
        %1517 = vmatprep.mubr.bf16.mxu0 0
        %1518 = vmatmul.mubr.bf16.gmra.mrb[0].mxu0 %v1428
        %v1519 = vpop.f32.mrb[0].mxu0
        %v1520 = vadd.f32 %v909, %v1519
        %v1521 = vpop.f32.mrb[0].mxu0
        %v1522 = vpop.f32.mrb[0].mxu0
        %v1523 = vadd.f32 %v910, %v1522
        %v1524 = vpop.f32.mrb[0].mxu0
        %1525 = vmatprep.mubr.bf16.mxu0 0
        %1526 = vmatmul.mubr.bf16.gmra.mrb[0].mxu0 %v1431
        %v1527 = vpop.f32.mrb[0].mxu0
        %v1528 = vadd.f32 %v911, %v1527
        %v1529 = vpop.f32.mrb[0].mxu0
        %v1530 = vpop.f32.mrb[0].mxu0
        %v1531 = vadd.f32 %v912, %v1530
        %v1532 = vpop.f32.mrb[0].mxu0
        %1533 = vmatprep.mubr.bf16.mxu0 0
        %1534 = vmatmul.mubr.bf16.gmra.mrb[0].mxu0 %v1434
        %v1535 = vpop.f32.mrb[0].mxu0
        %v1536 = vadd.f32 %v913, %v1535
        %v1537 = vpop.f32.mrb[0].mxu0
        %v1538 = vpop.f32.mrb[0].mxu0
        %v1539 = vadd.f32 %v914, %v1538
        %v1540 = vpop.f32.mrb[0].mxu0
        %1541 = vmatprep.mubr.bf16.mxu0 0
        %1542 = vmatmul.mubr.bf16.gmra.mrb[0].mxu0 %v1437
        %v1543 = vpop.f32.mrb[0].mxu0
        %v1544 = vadd.f32 %v915, %v1543
        %v1545 = vpop.f32.mrb[0].mxu0
        %v1546 = vpop.f32.mrb[0].mxu0
        %v1547 = vadd.f32 %v916, %v1546
        %v1548 = vpop.f32.mrb[0].mxu0
        %1549 = vmatprep.mubr.bf16.mxu0 0
        %1550 = vmatmul.mubr.bf16.gmra.mrb[0].mxu0 %v1440
        %v1551 = vpop.f32.mrb[0].mxu0
        %v1552 = vadd.f32 %v917, %v1551
        %v1553 = vpop.f32.mrb[0].mxu0
        %v1554 = vpop.f32.mrb[0].mxu0
        %v1555 = vadd.f32 %v918, %v1554
        %v1556 = vpop.f32.mrb[0].mxu0
        %1557 = vmatprep.mubr.bf16.mxu0 0
        %1558 = vmatmul.mubr.bf16.gmra.mrb[0].mxu0 %v1443
        %v1559 = vpop.f32.mrb[0].mxu0
        %v1560 = vadd.f32 %v919, %v1559
        %v1561 = vpop.f32.mrb[0].mxu0
        %v1562 = vpop.f32.mrb[0].mxu0
        %v1563 = vadd.f32 %v920, %v1562
        %v1564 = vpop.f32.mrb[0].mxu0
        %1565 = vdwg.mxu0
        %1566 = vmax.xlane.f32.xlu0 %v1021
        %v1567 = vpop.xlane.xlu0 %1566
        %1568 = vmax.xlane.f32.xlu0 %v1024
        %v1569 = vpop.xlane.xlu0 %1568
        %1570 = vmax.xlane.f32.xlu0 %v1029
        %v1571 = vpop.xlane.xlu0 %1570
        %1572 = vmax.xlane.f32.xlu0 %v1032
        %v1573 = vpop.xlane.xlu0 %1572
        %1574 = vmax.xlane.f32.xlu0 %v1037
        %v1575 = vpop.xlane.xlu0 %1574
        %1576 = vmax.xlane.f32.xlu0 %v1040
        %v1577 = vpop.xlane.xlu0 %1576
        %1578 = vmax.xlane.f32.xlu0 %v1045
        %v1579 = vpop.xlane.xlu0 %1578
        %1580 = vmax.xlane.f32.xlu0 %v1048
        %v1581 = vpop.xlane.xlu0 %1580
        %1582 = vmax.xlane.f32.xlu0 %v1053
        %v1583 = vpop.xlane.xlu0 %1582
        %1584 = vmax.xlane.f32.xlu0 %v1056
        %v1585 = vpop.xlane.xlu0 %1584
        %1586 = vmax.xlane.f32.xlu0 %v1061
        %v1587 = vpop.xlane.xlu0 %1586
        %1588 = vmax.xlane.f32.xlu0 %v1064
        %v1589 = vpop.xlane.xlu0 %1588
        %1590 = vmax.xlane.f32.xlu0 %v1069
        %v1591 = vpop.xlane.xlu0 %1590
        %1592 = vmax.xlane.f32.xlu0 %v1072
        %v1593 = vpop.xlane.xlu0 %1592
        %1594 = vmax.xlane.f32.xlu0 %v1077
        %v1595 = vpop.xlane.xlu0 %1594
        %1596 = vmax.xlane.f32.xlu0 %v1080
        %v1597 = vpop.xlane.xlu0 %1596
        %1598 = vmax.xlane.f32.xlu0 %v1182
        %v1599 = vpop.xlane.xlu0 %1598
        %1600 = vmax.xlane.f32.xlu0 %v1185
        %v1601 = vpop.xlane.xlu0 %1600
        %1602 = vmax.xlane.f32.xlu0 %v1190
        %v1603 = vpop.xlane.xlu0 %1602
        %1604 = vmax.xlane.f32.xlu0 %v1193
        %v1605 = vpop.xlane.xlu0 %1604
        %1606 = vmax.xlane.f32.xlu0 %v1198
        %v1607 = vpop.xlane.xlu0 %1606
        %1608 = vmax.xlane.f32.xlu0 %v1201
        %v1609 = vpop.xlane.xlu0 %1608
        %1610 = vmax.xlane.f32.xlu0 %v1206
        %v1611 = vpop.xlane.xlu0 %1610
        %1612 = vmax.xlane.f32.xlu0 %v1209
        %v1613 = vpop.xlane.xlu0 %1612
        %1614 = vmax.xlane.f32.xlu0 %v1214
        %v1615 = vpop.xlane.xlu0 %1614
        %1616 = vmax.xlane.f32.xlu0 %v1217
        %v1617 = vpop.xlane.xlu0 %1616
        %1618 = vmax.xlane.f32.xlu0 %v1222
        %v1619 = vpop.xlane.xlu0 %1618
        %1620 = vmax.xlane.f32.xlu0 %v1225
        %v1621 = vpop.xlane.xlu0 %1620
        %1622 = vmax.xlane.f32.xlu0 %v1230
        %v1623 = vpop.xlane.xlu0 %1622
        %1624 = vmax.xlane.f32.xlu0 %v1233
        %v1625 = vpop.xlane.xlu0 %1624
        %1626 = vmax.xlane.f32.xlu0 %v1238
        %v1627 = vpop.xlane.xlu0 %1626
        %1628 = vmax.xlane.f32.xlu0 %v1241
        %v1629 = vpop.xlane.xlu0 %1628
        %1630 = vmax.xlane.f32.xlu0 %v1343
        %v1631 = vpop.xlane.xlu0 %1630
        %1632 = vmax.xlane.f32.xlu0 %v1346
        %v1633 = vpop.xlane.xlu0 %1632
        %1634 = vmax.xlane.f32.xlu0 %v1351
        %v1635 = vpop.xlane.xlu0 %1634
        %1636 = vmax.xlane.f32.xlu0 %v1354
        %v1637 = vpop.xlane.xlu0 %1636
        %1638 = vmax.xlane.f32.xlu0 %v1359
        %v1639 = vpop.xlane.xlu0 %1638
        %1640 = vmax.xlane.f32.xlu0 %v1362
        %v1641 = vpop.xlane.xlu0 %1640
        %1642 = vmax.xlane.f32.xlu0 %v1367
        %v1643 = vpop.xlane.xlu0 %1642
        %1644 = vmax.xlane.f32.xlu0 %v1370
        %v1645 = vpop.xlane.xlu0 %1644
        %1646 = vmax.xlane.f32.xlu0 %v1375
        %v1647 = vpop.xlane.xlu0 %1646
        %1648 = vmax.xlane.f32.xlu0 %v1378
        %v1649 = vpop.xlane.xlu0 %1648
        %1650 = vmax.xlane.f32.xlu0 %v1383
        %v1651 = vpop.xlane.xlu0 %1650
        %1652 = vmax.xlane.f32.xlu0 %v1386
        %v1653 = vpop.xlane.xlu0 %1652
        %1654 = vmax.xlane.f32.xlu0 %v1391
        %v1655 = vpop.xlane.xlu0 %1654
        %1656 = vmax.xlane.f32.xlu0 %v1394
        %v1657 = vpop.xlane.xlu0 %1656
        %1658 = vmax.xlane.f32.xlu0 %v1399
        %v1659 = vpop.xlane.xlu0 %1658
        %1660 = vmax.xlane.f32.xlu0 %v1402
        %v1661 = vpop.xlane.xlu0 %1660
        %1662 = vmax.xlane.f32.xlu0 %v1504
        %v1663 = vpop.xlane.xlu0 %1662
        %1664 = vmax.xlane.f32.xlu0 %v1507
        %v1665 = vpop.xlane.xlu0 %1664
        %1666 = vmax.xlane.f32.xlu0 %v1512
        %v1667 = vpop.xlane.xlu0 %1666
        %1668 = vmax.xlane.f32.xlu0 %v1515
        %v1669 = vpop.xlane.xlu0 %1668
        %1670 = vmax.xlane.f32.xlu0 %v1520
        %v1671 = vpop.xlane.xlu0 %1670
        %1672 = vmax.xlane.f32.xlu0 %v1523
        %v1673 = vpop.xlane.xlu0 %1672
        %1674 = vmax.xlane.f32.xlu0 %v1528
        %v1675 = vpop.xlane.xlu0 %1674
        %1676 = vmax.xlane.f32.xlu0 %v1531
        %v1677 = vpop.xlane.xlu0 %1676
        %1678 = vmax.xlane.f32.xlu0 %v1536
        %v1679 = vpop.xlane.xlu0 %1678
        %1680 = vmax.xlane.f32.xlu0 %v1539
        %v1681 = vpop.xlane.xlu0 %1680
        %1682 = vmax.xlane.f32.xlu0 %v1544
        %v1683 = vpop.xlane.xlu0 %1682
        %1684 = vmax.xlane.f32.xlu0 %v1547
        %v1685 = vpop.xlane.xlu0 %1684
        %1686 = vmax.xlane.f32.xlu0 %v1552
        %v1687 = vpop.xlane.xlu0 %1686
        %1688 = vmax.xlane.f32.xlu0 %v1555
        %v1689 = vpop.xlane.xlu0 %1688
        %1690 = vmax.xlane.f32.xlu0 %v1560
        %v1691 = vpop.xlane.xlu0 %1690
        %1692 = vmax.xlane.f32.xlu0 %v1563
        %v1693 = vpop.xlane.xlu0 %1692
        %v1694 = vsub.f32 %v1021, %v1567
        %v1695 = vsub.f32 %v1024, %v1569
        %v1696 = vsub.f32 %v1029, %v1571
        %v1697 = vsub.f32 %v1032, %v1573
        %v1698 = vsub.f32 %v1037, %v1575
        %v1699 = vsub.f32 %v1040, %v1577
        %v1700 = vsub.f32 %v1045, %v1579
        %v1701 = vsub.f32 %v1048, %v1581
        %v1702 = vsub.f32 %v1053, %v1583
        %v1703 = vsub.f32 %v1056, %v1585
        %v1704 = vsub.f32 %v1061, %v1587
        %v1705 = vsub.f32 %v1064, %v1589
        %v1706 = vsub.f32 %v1069, %v1591
        %v1707 = vsub.f32 %v1072, %v1593
        %v1708 = vsub.f32 %v1077, %v1595
        %v1709 = vsub.f32 %v1080, %v1597
        %v1710 = vsub.f32 %v1182, %v1599
        %v1711 = vsub.f32 %v1185, %v1601
        %v1712 = vsub.f32 %v1190, %v1603
        %v1713 = vsub.f32 %v1193, %v1605
        %v1714 = vsub.f32 %v1198, %v1607
        %v1715 = vsub.f32 %v1201, %v1609
        %v1716 = vsub.f32 %v1206, %v1611
        %v1717 = vsub.f32 %v1209, %v1613
        %v1718 = vsub.f32 %v1214, %v1615
        %v1719 = vsub.f32 %v1217, %v1617
        %v1720 = vsub.f32 %v1222, %v1619
        %v1721 = vsub.f32 %v1225, %v1621
        %v1722 = vsub.f32 %v1230, %v1623
        %v1723 = vsub.f32 %v1233, %v1625
        %v1724 = vsub.f32 %v1238, %v1627
        %v1725 = vsub.f32 %v1241, %v1629
        %v1726 = vsub.f32 %v1343, %v1631
        %v1727 = vsub.f32 %v1346, %v1633
        %v1728 = vsub.f32 %v1351, %v1635
        %v1729 = vsub.f32 %v1354, %v1637
        %v1730 = vsub.f32 %v1359, %v1639
        %v1731 = vsub.f32 %v1362, %v1641
        %v1732 = vsub.f32 %v1367, %v1643
        %v1733 = vsub.f32 %v1370, %v1645
        %v1734 = vsub.f32 %v1375, %v1647
        %v1735 = vsub.f32 %v1378, %v1649
        %v1736 = vsub.f32 %v1383, %v1651
        %v1737 = vsub.f32 %v1386, %v1653
        %v1738 = vsub.f32 %v1391, %v1655
        %v1739 = vsub.f32 %v1394, %v1657
        %v1740 = vsub.f32 %v1399, %v1659
        %v1741 = vsub.f32 %v1402, %v1661
        %v1742 = vsub.f32 %v1504, %v1663
        %v1743 = vsub.f32 %v1507, %v1665
        %v1744 = vsub.f32 %v1512, %v1667
        %v1745 = vsub.f32 %v1515, %v1669
        %v1746 = vsub.f32 %v1520, %v1671
        %v1747 = vsub.f32 %v1523, %v1673
        %v1748 = vsub.f32 %v1528, %v1675
        %v1749 = vsub.f32 %v1531, %v1677
        %v1750 = vsub.f32 %v1536, %v1679
        %v1751 = vsub.f32 %v1539, %v1681
        %v1752 = vsub.f32 %v1544, %v1683
        %v1753 = vsub.f32 %v1547, %v1685
        %v1754 = vsub.f32 %v1552, %v1687
        %v1755 = vsub.f32 %v1555, %v1689
        %v1756 = vsub.f32 %v1560, %v1691
        %v1757 = vsub.f32 %v1563, %v1693
        %v1758 = vmul.f32 %v1694, 1.442695
        %v1759 = vpow.pop %v1758
        %v1760 = vmul.f32 %v1695, 1.442695
        %v1761 = vpow.pop %v1760
        %v1762 = vmul.f32 %v1696, 1.442695
        %v1763 = vpow.pop %v1762
        %v1764 = vmul.f32 %v1697, 1.442695
        %v1765 = vpow.pop %v1764
        %v1766 = vmul.f32 %v1698, 1.442695
        %v1767 = vpow.pop %v1766
        %v1768 = vmul.f32 %v1699, 1.442695
        %v1769 = vpow.pop %v1768
        %v1770 = vmul.f32 %v1700, 1.442695
        %v1771 = vpow.pop %v1770
        %v1772 = vmul.f32 %v1701, 1.442695
        %v1773 = vpow.pop %v1772
        %v1774 = vmul.f32 %v1702, 1.442695
        %v1775 = vpow.pop %v1774
        %v1776 = vmul.f32 %v1703, 1.442695
        %v1777 = vpow.pop %v1776
        %v1778 = vmul.f32 %v1704, 1.442695
        %v1779 = vpow.pop %v1778
        %v1780 = vmul.f32 %v1705, 1.442695
        %v1781 = vpow.pop %v1780
        %v1782 = vmul.f32 %v1706, 1.442695
        %v1783 = vpow.pop %v1782
        %v1784 = vmul.f32 %v1707, 1.442695
        %v1785 = vpow.pop %v1784
        %v1786 = vmul.f32 %v1708, 1.442695
        %v1787 = vpow.pop %v1786
        %v1788 = vmul.f32 %v1709, 1.442695
        %v1789 = vpow.pop %v1788
        %v1790 = vmul.f32 %v1710, 1.442695
        %v1791 = vpow.pop %v1790
        %v1792 = vmul.f32 %v1711, 1.442695
        %v1793 = vpow.pop %v1792
        %v1794 = vmul.f32 %v1712, 1.442695
        %v1795 = vpow.pop %v1794
        %v1796 = vmul.f32 %v1713, 1.442695
        %v1797 = vpow.pop %v1796
        %v1798 = vmul.f32 %v1714, 1.442695
        %v1799 = vpow.pop %v1798
        %v1800 = vmul.f32 %v1715, 1.442695
        %v1801 = vpow.pop %v1800
        %v1802 = vmul.f32 %v1716, 1.442695
        %v1803 = vpow.pop %v1802
        %v1804 = vmul.f32 %v1717, 1.442695
        %v1805 = vpow.pop %v1804
        %v1806 = vmul.f32 %v1718, 1.442695
        %v1807 = vpow.pop %v1806
        %v1808 = vmul.f32 %v1719, 1.442695
        %v1809 = vpow.pop %v1808
        %v1810 = vmul.f32 %v1720, 1.442695
        %v1811 = vpow.pop %v1810
        %v1812 = vmul.f32 %v1721, 1.442695
        %v1813 = vpow.pop %v1812
        %v1814 = vmul.f32 %v1722, 1.442695
        %v1815 = vpow.pop %v1814
        %v1816 = vmul.f32 %v1723, 1.442695
        %v1817 = vpow.pop %v1816
        %v1818 = vmul.f32 %v1724, 1.442695
        %v1819 = vpow.pop %v1818
        %v1820 = vmul.f32 %v1725, 1.442695
        %v1821 = vpow.pop %v1820
        %v1822 = vmul.f32 %v1726, 1.442695
        %v1823 = vpow.pop %v1822
        %v1824 = vmul.f32 %v1727, 1.442695
        %v1825 = vpow.pop %v1824
        %v1826 = vmul.f32 %v1728, 1.442695
        %v1827 = vpow.pop %v1826
        %v1828 = vmul.f32 %v1729, 1.442695
        %v1829 = vpow.pop %v1828
        %v1830 = vmul.f32 %v1730, 1.442695
        %v1831 = vpow.pop %v1830
        %v1832 = vmul.f32 %v1731, 1.442695
        %v1833 = vpow.pop %v1832
        %v1834 = vmul.f32 %v1732, 1.442695
        %v1835 = vpow.pop %v1834
        %v1836 = vmul.f32 %v1733, 1.442695
        %v1837 = vpow.pop %v1836
        %v1838 = vmul.f32 %v1734, 1.442695
        %v1839 = vpow.pop %v1838
        %v1840 = vmul.f32 %v1735, 1.442695
        %v1841 = vpow.pop %v1840
        %v1842 = vmul.f32 %v1736, 1.442695
        %v1843 = vpow.pop %v1842
        %v1844 = vmul.f32 %v1737, 1.442695
        %v1845 = vpow.pop %v1844
        %v1846 = vmul.f32 %v1738, 1.442695
        %v1847 = vpow.pop %v1846
        %v1848 = vmul.f32 %v1739, 1.442695
        %v1849 = vpow.pop %v1848
        %v1850 = vmul.f32 %v1740, 1.442695
        %v1851 = vpow.pop %v1850
        %v1852 = vmul.f32 %v1741, 1.442695
        %v1853 = vpow.pop %v1852
        %v1854 = vmul.f32 %v1742, 1.442695
        %v1855 = vpow.pop %v1854
        %v1856 = vmul.f32 %v1743, 1.442695
        %v1857 = vpow.pop %v1856
        %v1858 = vmul.f32 %v1744, 1.442695
        %v1859 = vpow.pop %v1858
        %v1860 = vmul.f32 %v1745, 1.442695
        %v1861 = vpow.pop %v1860
        %v1862 = vmul.f32 %v1746, 1.442695
        %v1863 = vpow.pop %v1862
        %v1864 = vmul.f32 %v1747, 1.442695
        %v1865 = vpow.pop %v1864
        %v1866 = vmul.f32 %v1748, 1.442695
        %v1867 = vpow.pop %v1866
        %v1868 = vmul.f32 %v1749, 1.442695
        %v1869 = vpow.pop %v1868
        %v1870 = vmul.f32 %v1750, 1.442695
        %v1871 = vpow.pop %v1870
        %v1872 = vmul.f32 %v1751, 1.442695
        %v1873 = vpow.pop %v1872
        %v1874 = vmul.f32 %v1752, 1.442695
        %v1875 = vpow.pop %v1874
        %v1876 = vmul.f32 %v1753, 1.442695
        %v1877 = vpow.pop %v1876
        %v1878 = vmul.f32 %v1754, 1.442695
        %v1879 = vpow.pop %v1878
        %v1880 = vmul.f32 %v1755, 1.442695
        %v1881 = vpow.pop %v1880
        %v1882 = vmul.f32 %v1756, 1.442695
        %v1883 = vpow.pop %v1882
        %v1884 = vmul.f32 %v1757, 1.442695
        %v1885 = vpow.pop %v1884
        %1886 = vadd.xlane.f32.xlu0 %v1759
        %v1887 = vpop.xlane.xlu0 %1886
        %1888 = vadd.xlane.f32.xlu0 %v1761
        %v1889 = vpop.xlane.xlu0 %1888
        %1890 = vadd.xlane.f32.xlu0 %v1763
        %v1891 = vpop.xlane.xlu0 %1890
        %1892 = vadd.xlane.f32.xlu0 %v1765
        %v1893 = vpop.xlane.xlu0 %1892
        %1894 = vadd.xlane.f32.xlu0 %v1767
        %v1895 = vpop.xlane.xlu0 %1894
        %1896 = vadd.xlane.f32.xlu0 %v1769
        %v1897 = vpop.xlane.xlu0 %1896
        %1898 = vadd.xlane.f32.xlu0 %v1771
        %v1899 = vpop.xlane.xlu0 %1898
        %1900 = vadd.xlane.f32.xlu0 %v1773
        %v1901 = vpop.xlane.xlu0 %1900
        %1902 = vadd.xlane.f32.xlu0 %v1775
        %v1903 = vpop.xlane.xlu0 %1902
        %1904 = vadd.xlane.f32.xlu0 %v1777
        %v1905 = vpop.xlane.xlu0 %1904
        %1906 = vadd.xlane.f32.xlu0 %v1779
        %v1907 = vpop.xlane.xlu0 %1906
        %1908 = vadd.xlane.f32.xlu0 %v1781
        %v1909 = vpop.xlane.xlu0 %1908
        %1910 = vadd.xlane.f32.xlu0 %v1783
        %v1911 = vpop.xlane.xlu0 %1910
        %1912 = vadd.xlane.f32.xlu0 %v1785
        %v1913 = vpop.xlane.xlu0 %1912
        %1914 = vadd.xlane.f32.xlu0 %v1787
        %v1915 = vpop.xlane.xlu0 %1914
        %1916 = vadd.xlane.f32.xlu0 %v1789
        %v1917 = vpop.xlane.xlu0 %1916
        %1918 = vadd.xlane.f32.xlu0 %v1791
        %v1919 = vpop.xlane.xlu0 %1918
        %1920 = vadd.xlane.f32.xlu0 %v1793
        %v1921 = vpop.xlane.xlu0 %1920
        %1922 = vadd.xlane.f32.xlu0 %v1795
        %v1923 = vpop.xlane.xlu0 %1922
        %1924 = vadd.xlane.f32.xlu0 %v1797
        %v1925 = vpop.xlane.xlu0 %1924
        %1926 = vadd.xlane.f32.xlu0 %v1799
        %v1927 = vpop.xlane.xlu0 %1926
        %1928 = vadd.xlane.f32.xlu0 %v1801
        %v1929 = vpop.xlane.xlu0 %1928
        %1930 = vadd.xlane.f32.xlu0 %v1803
        %v1931 = vpop.xlane.xlu0 %1930
        %1932 = vadd.xlane.f32.xlu0 %v1805
        %v1933 = vpop.xlane.xlu0 %1932
        %1934 = vadd.xlane.f32.xlu0 %v1807
        %v1935 = vpop.xlane.xlu0 %1934
        %1936 = vadd.xlane.f32.xlu0 %v1809
        %v1937 = vpop.xlane.xlu0 %1936
        %1938 = vadd.xlane.f32.xlu0 %v1811
        %v1939 = vpop.xlane.xlu0 %1938
        %1940 = vadd.xlane.f32.xlu0 %v1813
        %v1941 = vpop.xlane.xlu0 %1940
        %1942 = vadd.xlane.f32.xlu0 %v1815
        %v1943 = vpop.xlane.xlu0 %1942
        %1944 = vadd.xlane.f32.xlu0 %v1817
        %v1945 = vpop.xlane.xlu0 %1944
        %1946 = vadd.xlane.f32.xlu0 %v1819
        %v1947 = vpop.xlane.xlu0 %1946
        %1948 = vadd.xlane.f32.xlu0 %v1821
        %v1949 = vpop.xlane.xlu0 %1948
        %1950 = vadd.xlane.f32.xlu0 %v1823
        %v1951 = vpop.xlane.xlu0 %1950
        %1952 = vadd.xlane.f32.xlu0 %v1825
        %v1953 = vpop.xlane.xlu0 %1952
        %1954 = vadd.xlane.f32.xlu0 %v1827
        %v1955 = vpop.xlane.xlu0 %1954
        %1956 = vadd.xlane.f32.xlu0 %v1829
        %v1957 = vpop.xlane.xlu0 %1956
        %1958 = vadd.xlane.f32.xlu0 %v1831
        %v1959 = vpop.xlane.xlu0 %1958
        %1960 = vadd.xlane.f32.xlu0 %v1833
        %v1961 = vpop.xlane.xlu0 %1960
        %1962 = vadd.xlane.f32.xlu0 %v1835
        %v1963 = vpop.xlane.xlu0 %1962
        %1964 = vadd.xlane.f32.xlu0 %v1837
        %v1965 = vpop.xlane.xlu0 %1964
        %1966 = vadd.xlane.f32.xlu0 %v1839
        %v1967 = vpop.xlane.xlu0 %1966
        %1968 = vadd.xlane.f32.xlu0 %v1841
        %v1969 = vpop.xlane.xlu0 %1968
        %1970 = vadd.xlane.f32.xlu0 %v1843
        %v1971 = vpop.xlane.xlu0 %1970
        %1972 = vadd.xlane.f32.xlu0 %v1845
        %v1973 = vpop.xlane.xlu0 %1972
        %1974 = vadd.xlane.f32.xlu0 %v1847
        %v1975 = vpop.xlane.xlu0 %1974
        %1976 = vadd.xlane.f32.xlu0 %v1849
        %v1977 = vpop.xlane.xlu0 %1976
        %1978 = vadd.xlane.f32.xlu0 %v1851
        %v1979 = vpop.xlane.xlu0 %1978
        %1980 = vadd.xlane.f32.xlu0 %v1853
        %v1981 = vpop.xlane.xlu0 %1980
        %1982 = vadd.xlane.f32.xlu0 %v1855
        %v1983 = vpop.xlane.xlu0 %1982
        %1984 = vadd.xlane.f32.xlu0 %v1857
        %v1985 = vpop.xlane.xlu0 %1984
        %1986 = vadd.xlane.f32.xlu0 %v1859
        %v1987 = vpop.xlane.xlu0 %1986
        %1988 = vadd.xlane.f32.xlu0 %v1861
        %v1989 = vpop.xlane.xlu0 %1988
        %1990 = vadd.xlane.f32.xlu0 %v1863
        %v1991 = vpop.xlane.xlu0 %1990
        %1992 = vadd.xlane.f32.xlu0 %v1865
        %v1993 = vpop.xlane.xlu0 %1992
        %1994 = vadd.xlane.f32.xlu0 %v1867
        %v1995 = vpop.xlane.xlu0 %1994
        %1996 = vadd.xlane.f32.xlu0 %v1869
        %v1997 = vpop.xlane.xlu0 %1996
        %1998 = vadd.xlane.f32.xlu0 %v1871
        %v1999 = vpop.xlane.xlu0 %1998
        %2000 = vadd.xlane.f32.xlu0 %v1873
        %v2001 = vpop.xlane.xlu0 %2000
        %2002 = vadd.xlane.f32.xlu0 %v1875
        %v2003 = vpop.xlane.xlu0 %2002
        %2004 = vadd.xlane.f32.xlu0 %v1877
        %v2005 = vpop.xlane.xlu0 %2004
        %2006 = vadd.xlane.f32.xlu0 %v1879
        %v2007 = vpop.xlane.xlu0 %2006
        %2008 = vadd.xlane.f32.xlu0 %v1881
        %v2009 = vpop.xlane.xlu0 %2008
        %2010 = vadd.xlane.f32.xlu0 %v1883
        %v2011 = vpop.xlane.xlu0 %2010
        %2012 = vadd.xlane.f32.xlu0 %v1885
        %v2013 = vpop.xlane.xlu0 %2012
        %v2014 = vrcp.pop %v1887
        %v2015 = vrcp.pop %v1889
        %v2016 = vrcp.pop %v1891
        %v2017 = vrcp.pop %v1893
        %v2018 = vrcp.pop %v1895
        %v2019 = vrcp.pop %v1897
        %v2020 = vrcp.pop %v1899
        %v2021 = vrcp.pop %v1901
        %v2022 = vrcp.pop %v1903
        %v2023 = vrcp.pop %v1905
        %v2024 = vrcp.pop %v1907
        %v2025 = vrcp.pop %v1909
        %v2026 = vrcp.pop %v1911
        %v2027 = vrcp.pop %v1913
        %v2028 = vrcp.pop %v1915
        %v2029 = vrcp.pop %v1917
        %v2030 = vrcp.pop %v1919
        %v2031 = vrcp.pop %v1921
        %v2032 = vrcp.pop %v1923
        %v2033 = vrcp.pop %v1925
        %v2034 = vrcp.pop %v1927
        %v2035 = vrcp.pop %v1929
        %v2036 = vrcp.pop %v1931
        %v2037 = vrcp.pop %v1933
        %v2038 = vrcp.pop %v1935
        %v2039 = vrcp.pop %v1937
        %v2040 = vrcp.pop %v1939
        %v2041 = vrcp.pop %v1941
        %v2042 = vrcp.pop %v1943
        %v2043 = vrcp.pop %v1945
        %v2044 = vrcp.pop %v1947
        %v2045 = vrcp.pop %v1949
        %v2046 = vrcp.pop %v1951
        %v2047 = vrcp.pop %v1953
        %v2048 = vrcp.pop %v1955
        %v2049 = vrcp.pop %v1957
        %v2050 = vrcp.pop %v1959
        %v2051 = vrcp.pop %v1961
        %v2052 = vrcp.pop %v1963
        %v2053 = vrcp.pop %v1965
        %v2054 = vrcp.pop %v1967
        %v2055 = vrcp.pop %v1969
        %v2056 = vrcp.pop %v1971
        %v2057 = vrcp.pop %v1973
        %v2058 = vrcp.pop %v1975
        %v2059 = vrcp.pop %v1977
        %v2060 = vrcp.pop %v1979
        %v2061 = vrcp.pop %v1981
        %v2062 = vrcp.pop %v1983
        %v2063 = vrcp.pop %v1985
        %v2064 = vrcp.pop %v1987
        %v2065 = vrcp.pop %v1989
        %v2066 = vrcp.pop %v1991
        %v2067 = vrcp.pop %v1993
        %v2068 = vrcp.pop %v1995
        %v2069 = vrcp.pop %v1997
        %v2070 = vrcp.pop %v1999
        %v2071 = vrcp.pop %v2001
        %v2072 = vrcp.pop %v2003
        %v2073 = vrcp.pop %v2005
        %v2074 = vrcp.pop %v2007
        %v2075 = vrcp.pop %v2009
        %v2076 = vrcp.pop %v2011
        %v2077 = vrcp.pop %v2013
        %v2078 = vmul.f32 %v1759, %v2014
        %v2079 = vmul.f32 %v1761, %v2015
        %v2080 = vmul.f32 %v1763, %v2016
        %v2081 = vmul.f32 %v1765, %v2017
        %v2082 = vmul.f32 %v1767, %v2018
        %v2083 = vmul.f32 %v1769, %v2019
        %v2084 = vmul.f32 %v1771, %v2020
        %v2085 = vmul.f32 %v1773, %v2021
        %v2086 = vmul.f32 %v1775, %v2022
        %v2087 = vmul.f32 %v1777, %v2023
        %v2088 = vmul.f32 %v1779, %v2024
        %v2089 = vmul.f32 %v1781, %v2025
        %v2090 = vmul.f32 %v1783, %v2026
        %v2091 = vmul.f32 %v1785, %v2027
        %v2092 = vmul.f32 %v1787, %v2028
        %v2093 = vmul.f32 %v1789, %v2029
        %v2094 = vmul.f32 %v1791, %v2030
        %v2095 = vmul.f32 %v1793, %v2031
        %v2096 = vmul.f32 %v1795, %v2032
        %v2097 = vmul.f32 %v1797, %v2033
        %v2098 = vmul.f32 %v1799, %v2034
        %v2099 = vmul.f32 %v1801, %v2035
        %v2100 = vmul.f32 %v1803, %v2036
        %v2101 = vmul.f32 %v1805, %v2037
        %v2102 = vmul.f32 %v1807, %v2038
        %v2103 = vmul.f32 %v1809, %v2039
        %v2104 = vmul.f32 %v1811, %v2040
        %v2105 = vmul.f32 %v1813, %v2041
        %v2106 = vmul.f32 %v1815, %v2042
        %v2107 = vmul.f32 %v1817, %v2043
        %v2108 = vmul.f32 %v1819, %v2044
        %v2109 = vmul.f32 %v1821, %v2045
        %v2110 = vmul.f32 %v1823, %v2046
        %v2111 = vmul.f32 %v1825, %v2047
        %v2112 = vmul.f32 %v1827, %v2048
        %v2113 = vmul.f32 %v1829, %v2049
        %v2114 = vmul.f32 %v1831, %v2050
        %v2115 = vmul.f32 %v1833, %v2051
        %v2116 = vmul.f32 %v1835, %v2052
        %v2117 = vmul.f32 %v1837, %v2053
        %v2118 = vmul.f32 %v1839, %v2054
        %v2119 = vmul.f32 %v1841, %v2055
        %v2120 = vmul.f32 %v1843, %v2056
        %v2121 = vmul.f32 %v1845, %v2057
        %v2122 = vmul.f32 %v1847, %v2058
        %v2123 = vmul.f32 %v1849, %v2059
        %v2124 = vmul.f32 %v1851, %v2060
        %v2125 = vmul.f32 %v1853, %v2061
        %v2126 = vmul.f32 %v1855, %v2062
        %v2127 = vmul.f32 %v1857, %v2063
        %v2128 = vmul.f32 %v1859, %v2064
        %v2129 = vmul.f32 %v1861, %v2065
        %v2130 = vmul.f32 %v1863, %v2066
        %v2131 = vmul.f32 %v1865, %v2067
        %v2132 = vmul.f32 %v1867, %v2068
        %v2133 = vmul.f32 %v1869, %v2069
        %v2134 = vmul.f32 %v1871, %v2070
        %v2135 = vmul.f32 %v1873, %v2071
        %v2136 = vmul.f32 %v1875, %v2072
        %v2137 = vmul.f32 %v1877, %v2073
        %v2138 = vmul.f32 %v1879, %v2074
        %v2139 = vmul.f32 %v1881, %v2075
        %v2140 = vmul.f32 %v1883, %v2076
        %v2141 = vmul.f32 %v1885, %v2077
        %v2142 = vpack.c.bf16 %v2079, %v2078
        %v2143 = vpack.c.bf16 %v2081, %v2080
        %v2144 = vpack.c.bf16 %v2083, %v2082
        %v2145 = vpack.c.bf16 %v2085, %v2084
        %v2146 = vpack.c.bf16 %v2087, %v2086
        %v2147 = vpack.c.bf16 %v2089, %v2088
        %v2148 = vpack.c.bf16 %v2091, %v2090
        %v2149 = vpack.c.bf16 %v2093, %v2092
        %v2150 = vpack.c.bf16 %v2095, %v2094
        %v2151 = vpack.c.bf16 %v2097, %v2096
        %v2152 = vpack.c.bf16 %v2099, %v2098
        %v2153 = vpack.c.bf16 %v2101, %v2100
        %v2154 = vpack.c.bf16 %v2103, %v2102
        %v2155 = vpack.c.bf16 %v2105, %v2104
        %v2156 = vpack.c.bf16 %v2107, %v2106
        %v2157 = vpack.c.bf16 %v2109, %v2108
        %v2158 = vpack.c.bf16 %v2111, %v2110
        %v2159 = vpack.c.bf16 %v2113, %v2112
        %v2160 = vpack.c.bf16 %v2115, %v2114
        %v2161 = vpack.c.bf16 %v2117, %v2116
        %v2162 = vpack.c.bf16 %v2119, %v2118
        %v2163 = vpack.c.bf16 %v2121, %v2120
        %v2164 = vpack.c.bf16 %v2123, %v2122
        %v2165 = vpack.c.bf16 %v2125, %v2124
        %v2166 = vpack.c.bf16 %v2127, %v2126
        %v2167 = vpack.c.bf16 %v2129, %v2128
        %v2168 = vpack.c.bf16 %v2131, %v2130
        %v2169 = vpack.c.bf16 %v2133, %v2132
        %v2170 = vpack.c.bf16 %v2135, %v2134
        %v2171 = vpack.c.bf16 %v2137, %v2136
        %v2172 = vpack.c.bf16 %v2139, %v2138
        %v2173 = vpack.c.bf16 %v2141, %v2140
        %2174 = vrot.lane.b32.xlu0 %v711, 64
        %v2175 = vpop.permute.xlu0 %2174
        %2176 = vrot.lane.b32.xlu0 %v714, 64
        %v2177 = vpop.permute.xlu0 %2176
        %2178 = vrot.lane.b32.xlu0 %v717, 64
        %v2179 = vpop.permute.xlu0 %2178
        %2180 = vrot.lane.b32.xlu0 %v720, 64
        %v2181 = vpop.permute.xlu0 %2180
        %2182 = vrot.lane.b32.xlu0 %v723, 64
        %v2183 = vpop.permute.xlu0 %2182
        %2184 = vrot.lane.b32.xlu0 %v726, 64
        %v2185 = vpop.permute.xlu0 %2184
        %2186 = vrot.lane.b32.xlu0 %v729, 64
        %v2187 = vpop.permute.xlu0 %2186
        %2188 = vrot.lane.b32.xlu0 %v732, 64
        %v2189 = vpop.permute.xlu0 %2188
        %2198 = vmatprep.subr.bf16.mxu0 0
        %2199 = vmatpush1.bf16.msra.mxu0 %v2175
        %2200 = vmatprep.subr.bf16.mxu0 0
        %2201 = vmatpush1.bf16.msra.mxu0 %v2177
        %2202 = vmatprep.subr.bf16.mxu0 0
        %2203 = vmatpush1.bf16.msra.mxu0 %v2179
        %2204 = vmatprep.subr.bf16.mxu0 0
        %2205 = vmatpush1.bf16.msra.mxu0 %v2181
        %2206 = vmatprep.subr.bf16.mxu0 0
        %2207 = vmatpush1.bf16.msra.mxu0 %v2183
        %2208 = vmatprep.subr.bf16.mxu0 0
        %2209 = vmatpush1.bf16.msra.mxu0 %v2185
        %2210 = vmatprep.subr.bf16.mxu0 0
        %2211 = vmatpush1.bf16.msra.mxu0 %v2187
        %2212 = vmatprep.subr.bf16.mxu0 0
        %2213 = vmatpush1.bf16.msra.mxu0 %v2189
        %2214 = vmatprep.subr.bf16.mxu0 0
        %2215 = vmatpush1.bf16.msra.mxu0 0
        %2216 = vmatprep.subr.bf16.mxu0 0
        %2217 = vmatpush1.bf16.msra.mxu0 0
        %2218 = vmatprep.subr.bf16.mxu0 0
        %2219 = vmatpush1.bf16.msra.mxu0 0
        %2220 = vmatprep.subr.bf16.mxu0 0
        %2221 = vmatpush1.bf16.msra.mxu0 0
        %2222 = vmatprep.subr.bf16.mxu0 0
        %2223 = vmatpush1.bf16.msra.mxu0 0
        %2224 = vmatprep.subr.bf16.mxu0 0
        %2225 = vmatpush1.bf16.msra.mxu0 0
        %2226 = vmatprep.subr.bf16.mxu0 0
        %2227 = vmatpush1.bf16.msra.mxu0 0
        %2228 = vmatprep.subr.bf16.mxu0 0
        %2229 = vmatpush1.bf16.msra.mxu0 0
        %2230 = vmatprep.mubr.bf16.mxu0 0
        %2231 = vmatmul.mubr.bf16.gmra.mrb[0].mxu0 %v2142
        %v2232 = vpop.f32.mrb[0].mxu0
        %v2233 = vadd.f32 0.0, %v2232
        %v2234 = vpop.f32.mrb[0].mxu0
        %v2235 = vpop.f32.mrb[0].mxu0
        %v2236 = vadd.f32 0.0, %v2235
        %v2237 = vpop.f32.mrb[0].mxu0
        %2238 = vmatprep.mubr.bf16.mxu0 0
        %2239 = vmatmul.mubr.bf16.gmra.mrb[0].mxu0 %v2143
        %v2240 = vpop.f32.mrb[0].mxu0
        %v2241 = vadd.f32 0.0, %v2240
        %v2242 = vpop.f32.mrb[0].mxu0
        %v2243 = vpop.f32.mrb[0].mxu0
        %v2244 = vadd.f32 0.0, %v2243
        %v2245 = vpop.f32.mrb[0].mxu0
        %2246 = vmatprep.mubr.bf16.mxu0 0
        %2247 = vmatmul.mubr.bf16.gmra.mrb[0].mxu0 %v2144
        %v2248 = vpop.f32.mrb[0].mxu0
        %v2249 = vadd.f32 0.0, %v2248
        %v2250 = vpop.f32.mrb[0].mxu0
        %v2251 = vpop.f32.mrb[0].mxu0
        %v2252 = vadd.f32 0.0, %v2251
        %v2253 = vpop.f32.mrb[0].mxu0
        %2254 = vmatprep.mubr.bf16.mxu0 0
        %2255 = vmatmul.mubr.bf16.gmra.mrb[0].mxu0 %v2145
        %v2256 = vpop.f32.mrb[0].mxu0
        %v2257 = vadd.f32 0.0, %v2256
        %v2258 = vpop.f32.mrb[0].mxu0
        %v2259 = vpop.f32.mrb[0].mxu0
        %v2260 = vadd.f32 0.0, %v2259
        %v2261 = vpop.f32.mrb[0].mxu0
        %2262 = vmatprep.mubr.bf16.mxu0 0
        %2263 = vmatmul.mubr.bf16.gmra.mrb[0].mxu0 %v2146
        %v2264 = vpop.f32.mrb[0].mxu0
        %v2265 = vadd.f32 0.0, %v2264
        %v2266 = vpop.f32.mrb[0].mxu0
        %v2267 = vpop.f32.mrb[0].mxu0
        %v2268 = vadd.f32 0.0, %v2267
        %v2269 = vpop.f32.mrb[0].mxu0
        %2270 = vmatprep.mubr.bf16.mxu0 0
        %2271 = vmatmul.mubr.bf16.gmra.mrb[0].mxu0 %v2147
        %v2272 = vpop.f32.mrb[0].mxu0
        %v2273 = vadd.f32 0.0, %v2272
        %v2274 = vpop.f32.mrb[0].mxu0
        %v2275 = vpop.f32.mrb[0].mxu0
        %v2276 = vadd.f32 0.0, %v2275
        %v2277 = vpop.f32.mrb[0].mxu0
        %2278 = vmatprep.mubr.bf16.mxu0 0
        %2279 = vmatmul.mubr.bf16.gmra.mrb[0].mxu0 %v2148
        %v2280 = vpop.f32.mrb[0].mxu0
        %v2281 = vadd.f32 0.0, %v2280
        %v2282 = vpop.f32.mrb[0].mxu0
        %v2283 = vpop.f32.mrb[0].mxu0
        %v2284 = vadd.f32 0.0, %v2283
        %v2285 = vpop.f32.mrb[0].mxu0
        %2286 = vmatprep.mubr.bf16.mxu0 0
        %2287 = vmatmul.mubr.bf16.gmra.mrb[0].mxu0 %v2149
        %v2288 = vpop.f32.mrb[0].mxu0
        %v2289 = vadd.f32 0.0, %v2288
        %v2290 = vpop.f32.mrb[0].mxu0
        %v2291 = vpop.f32.mrb[0].mxu0
        %v2292 = vadd.f32 0.0, %v2291
        %v2293 = vpop.f32.mrb[0].mxu0
        %2294 = vdwg.mxu0
        %2295 = vrot.lane.b32.xlu0 %v784, 64
        %v2296 = vpop.permute.xlu0 %2295
        %2297 = vrot.lane.b32.xlu0 %v785, 64
        %v2298 = vpop.permute.xlu0 %2297
        %2299 = vrot.lane.b32.xlu0 %v786, 64
        %v2300 = vpop.permute.xlu0 %2299
        %2301 = vrot.lane.b32.xlu0 %v787, 64
        %v2302 = vpop.permute.xlu0 %2301
        %2303 = vrot.lane.b32.xlu0 %v788, 64
        %v2304 = vpop.permute.xlu0 %2303
        %2305 = vrot.lane.b32.xlu0 %v789, 64
        %v2306 = vpop.permute.xlu0 %2305
        %2307 = vrot.lane.b32.xlu0 %v790, 64
        %v2308 = vpop.permute.xlu0 %2307
        %2309 = vrot.lane.b32.xlu0 %v791, 64
        %v2310 = vpop.permute.xlu0 %2309
        %2319 = vmatprep.subr.bf16.mxu0 0
        %2320 = vmatpush1.bf16.msra.mxu0 %v2296
        %2321 = vmatprep.subr.bf16.mxu0 0
        %2322 = vmatpush1.bf16.msra.mxu0 %v2298
        %2323 = vmatprep.subr.bf16.mxu0 0
        %2324 = vmatpush1.bf16.msra.mxu0 %v2300
        %2325 = vmatprep.subr.bf16.mxu0 0
        %2326 = vmatpush1.bf16.msra.mxu0 %v2302
        %2327 = vmatprep.subr.bf16.mxu0 0
        %2328 = vmatpush1.bf16.msra.mxu0 %v2304
        %2329 = vmatprep.subr.bf16.mxu0 0
        %2330 = vmatpush1.bf16.msra.mxu0 %v2306
        %2331 = vmatprep.subr.bf16.mxu0 0
        %2332 = vmatpush1.bf16.msra.mxu0 %v2308
        %2333 = vmatprep.subr.bf16.mxu0 0
        %2334 = vmatpush1.bf16.msra.mxu0 %v2310
        %2335 = vmatprep.subr.bf16.mxu0 0
        %2336 = vmatpush1.bf16.msra.mxu0 0
        %2337 = vmatprep.subr.bf16.mxu0 0
        %2338 = vmatpush1.bf16.msra.mxu0 0
        %2339 = vmatprep.subr.bf16.mxu0 0
        %2340 = vmatpush1.bf16.msra.mxu0 0
        %2341 = vmatprep.subr.bf16.mxu0 0
        %2342 = vmatpush1.bf16.msra.mxu0 0
        %2343 = vmatprep.subr.bf16.mxu0 0
        %2344 = vmatpush1.bf16.msra.mxu0 0
        %2345 = vmatprep.subr.bf16.mxu0 0
        %2346 = vmatpush1.bf16.msra.mxu0 0
        %2347 = vmatprep.subr.bf16.mxu0 0
        %2348 = vmatpush1.bf16.msra.mxu0 0
        %2349 = vmatprep.subr.bf16.mxu0 0
        %2350 = vmatpush1.bf16.msra.mxu0 0
        %2351 = vmatprep.mubr.bf16.mxu0 0
        %2352 = vmatmul.mubr.bf16.gmra.mrb[0].mxu0 %v2150
        %v2353 = vpop.f32.mrb[0].mxu0
        %v2354 = vadd.f32 0.0, %v2353
        %v2355 = vpop.f32.mrb[0].mxu0
        %v2356 = vpop.f32.mrb[0].mxu0
        %v2357 = vadd.f32 0.0, %v2356
        %v2358 = vpop.f32.mrb[0].mxu0
        %2359 = vmatprep.mubr.bf16.mxu0 0
        %2360 = vmatmul.mubr.bf16.gmra.mrb[0].mxu0 %v2151
        %v2361 = vpop.f32.mrb[0].mxu0
        %v2362 = vadd.f32 0.0, %v2361
        %v2363 = vpop.f32.mrb[0].mxu0
        %v2364 = vpop.f32.mrb[0].mxu0
        %v2365 = vadd.f32 0.0, %v2364
        %v2366 = vpop.f32.mrb[0].mxu0
        %2367 = vmatprep.mubr.bf16.mxu0 0
        %2368 = vmatmul.mubr.bf16.gmra.mrb[0].mxu0 %v2152
        %v2369 = vpop.f32.mrb[0].mxu0
        %v2370 = vadd.f32 0.0, %v2369
        %v2371 = vpop.f32.mrb[0].mxu0
        %v2372 = vpop.f32.mrb[0].mxu0
        %v2373 = vadd.f32 0.0, %v2372
        %v2374 = vpop.f32.mrb[0].mxu0
        %2375 = vmatprep.mubr.bf16.mxu0 0
        %2376 = vmatmul.mubr.bf16.gmra.mrb[0].mxu0 %v2153
        %v2377 = vpop.f32.mrb[0].mxu0
        %v2378 = vadd.f32 0.0, %v2377
        %v2379 = vpop.f32.mrb[0].mxu0
        %v2380 = vpop.f32.mrb[0].mxu0
        %v2381 = vadd.f32 0.0, %v2380
        %v2382 = vpop.f32.mrb[0].mxu0
        %2383 = vmatprep.mubr.bf16.mxu0 0
        %2384 = vmatmul.mubr.bf16.gmra.mrb[0].mxu0 %v2154
        %v2385 = vpop.f32.mrb[0].mxu0
        %v2386 = vadd.f32 0.0, %v2385
        %v2387 = vpop.f32.mrb[0].mxu0
        %v2388 = vpop.f32.mrb[0].mxu0
        %v2389 = vadd.f32 0.0, %v2388
        %v2390 = vpop.f32.mrb[0].mxu0
        %2391 = vmatprep.mubr.bf16.mxu0 0
        %2392 = vmatmul.mubr.bf16.gmra.mrb[0].mxu0 %v2155
        %v2393 = vpop.f32.mrb[0].mxu0
        %v2394 = vadd.f32 0.0, %v2393
        %v2395 = vpop.f32.mrb[0].mxu0
        %v2396 = vpop.f32.mrb[0].mxu0
        %v2397 = vadd.f32 0.0, %v2396
        %v2398 = vpop.f32.mrb[0].mxu0
        %2399 = vmatprep.mubr.bf16.mxu0 0
        %2400 = vmatmul.mubr.bf16.gmra.mrb[0].mxu0 %v2156
        %v2401 = vpop.f32.mrb[0].mxu0
        %v2402 = vadd.f32 0.0, %v2401
        %v2403 = vpop.f32.mrb[0].mxu0
        %v2404 = vpop.f32.mrb[0].mxu0
        %v2405 = vadd.f32 0.0, %v2404
        %v2406 = vpop.f32.mrb[0].mxu0
        %2407 = vmatprep.mubr.bf16.mxu0 0
        %2408 = vmatmul.mubr.bf16.gmra.mrb[0].mxu0 %v2157
        %v2409 = vpop.f32.mrb[0].mxu0
        %v2410 = vadd.f32 0.0, %v2409
        %v2411 = vpop.f32.mrb[0].mxu0
        %v2412 = vpop.f32.mrb[0].mxu0
        %v2413 = vadd.f32 0.0, %v2412
        %v2414 = vpop.f32.mrb[0].mxu0
        %2415 = vdwg.mxu0
        %2416 = vrot.lane.b32.xlu0 %v833, 64
        %v2417 = vpop.permute.xlu0 %2416
        %2418 = vrot.lane.b32.xlu0 %v834, 64
        %v2419 = vpop.permute.xlu0 %2418
        %2420 = vrot.lane.b32.xlu0 %v835, 64
        %v2421 = vpop.permute.xlu0 %2420
        %2422 = vrot.lane.b32.xlu0 %v836, 64
        %v2423 = vpop.permute.xlu0 %2422
        %2424 = vrot.lane.b32.xlu0 %v837, 64
        %v2425 = vpop.permute.xlu0 %2424
        %2426 = vrot.lane.b32.xlu0 %v838, 64
        %v2427 = vpop.permute.xlu0 %2426
        %2428 = vrot.lane.b32.xlu0 %v839, 64
        %v2429 = vpop.permute.xlu0 %2428
        %2430 = vrot.lane.b32.xlu0 %v840, 64
        %v2431 = vpop.permute.xlu0 %2430
        %2440 = vmatprep.subr.bf16.mxu0 0
        %2441 = vmatpush1.bf16.msra.mxu0 %v2417
        %2442 = vmatprep.subr.bf16.mxu0 0
        %2443 = vmatpush1.bf16.msra.mxu0 %v2419
        %2444 = vmatprep.subr.bf16.mxu0 0
        %2445 = vmatpush1.bf16.msra.mxu0 %v2421
        %2446 = vmatprep.subr.bf16.mxu0 0
        %2447 = vmatpush1.bf16.msra.mxu0 %v2423
        %2448 = vmatprep.subr.bf16.mxu0 0
        %2449 = vmatpush1.bf16.msra.mxu0 %v2425
        %2450 = vmatprep.subr.bf16.mxu0 0
        %2451 = vmatpush1.bf16.msra.mxu0 %v2427
        %2452 = vmatprep.subr.bf16.mxu0 0
        %2453 = vmatpush1.bf16.msra.mxu0 %v2429
        %2454 = vmatprep.subr.bf16.mxu0 0
        %2455 = vmatpush1.bf16.msra.mxu0 %v2431
        %2456 = vmatprep.subr.bf16.mxu0 0
        %2457 = vmatpush1.bf16.msra.mxu0 0
        %2458 = vmatprep.subr.bf16.mxu0 0
        %2459 = vmatpush1.bf16.msra.mxu0 0
        %2460 = vmatprep.subr.bf16.mxu0 0
        %2461 = vmatpush1.bf16.msra.mxu0 0
        %2462 = vmatprep.subr.bf16.mxu0 0
        %2463 = vmatpush1.bf16.msra.mxu0 0
        %2464 = vmatprep.subr.bf16.mxu0 0
        %2465 = vmatpush1.bf16.msra.mxu0 0
        %2466 = vmatprep.subr.bf16.mxu0 0
        %2467 = vmatpush1.bf16.msra.mxu0 0
        %2468 = vmatprep.subr.bf16.mxu0 0
        %2469 = vmatpush1.bf16.msra.mxu0 0
        %2470 = vmatprep.subr.bf16.mxu0 0
        %2471 = vmatpush1.bf16.msra.mxu0 0
        %2472 = vmatprep.mubr.bf16.mxu0 0
        %2473 = vmatmul.mubr.bf16.gmra.mrb[0].mxu0 %v2158
        %v2474 = vpop.f32.mrb[0].mxu0
        %v2475 = vadd.f32 0.0, %v2474
        %v2476 = vpop.f32.mrb[0].mxu0
        %v2477 = vpop.f32.mrb[0].mxu0
        %v2478 = vadd.f32 0.0, %v2477
        %v2479 = vpop.f32.mrb[0].mxu0
        %2480 = vmatprep.mubr.bf16.mxu0 0
        %2481 = vmatmul.mubr.bf16.gmra.mrb[0].mxu0 %v2159
        %v2482 = vpop.f32.mrb[0].mxu0
        %v2483 = vadd.f32 0.0, %v2482
        %v2484 = vpop.f32.mrb[0].mxu0
        %v2485 = vpop.f32.mrb[0].mxu0
        %v2486 = vadd.f32 0.0, %v2485
        %v2487 = vpop.f32.mrb[0].mxu0
        %2488 = vmatprep.mubr.bf16.mxu0 0
        %2489 = vmatmul.mubr.bf16.gmra.mrb[0].mxu0 %v2160
        %v2490 = vpop.f32.mrb[0].mxu0
        %v2491 = vadd.f32 0.0, %v2490
        %v2492 = vpop.f32.mrb[0].mxu0
        %v2493 = vpop.f32.mrb[0].mxu0
        %v2494 = vadd.f32 0.0, %v2493
        %v2495 = vpop.f32.mrb[0].mxu0
        %2496 = vmatprep.mubr.bf16.mxu0 0
        %2497 = vmatmul.mubr.bf16.gmra.mrb[0].mxu0 %v2161
        %v2498 = vpop.f32.mrb[0].mxu0
        %v2499 = vadd.f32 0.0, %v2498
        %v2500 = vpop.f32.mrb[0].mxu0
        %v2501 = vpop.f32.mrb[0].mxu0
        %v2502 = vadd.f32 0.0, %v2501
        %v2503 = vpop.f32.mrb[0].mxu0
        %2504 = vmatprep.mubr.bf16.mxu0 0
        %2505 = vmatmul.mubr.bf16.gmra.mrb[0].mxu0 %v2162
        %v2506 = vpop.f32.mrb[0].mxu0
        %v2507 = vadd.f32 0.0, %v2506
        %v2508 = vpop.f32.mrb[0].mxu0
        %v2509 = vpop.f32.mrb[0].mxu0
        %v2510 = vadd.f32 0.0, %v2509
        %v2511 = vpop.f32.mrb[0].mxu0
        %2512 = vmatprep.mubr.bf16.mxu0 0
        %2513 = vmatmul.mubr.bf16.gmra.mrb[0].mxu0 %v2163
        %v2514 = vpop.f32.mrb[0].mxu0
        %v2515 = vadd.f32 0.0, %v2514
        %v2516 = vpop.f32.mrb[0].mxu0
        %v2517 = vpop.f32.mrb[0].mxu0
        %v2518 = vadd.f32 0.0, %v2517
        %v2519 = vpop.f32.mrb[0].mxu0
        %2520 = vmatprep.mubr.bf16.mxu0 0
        %2521 = vmatmul.mubr.bf16.gmra.mrb[0].mxu0 %v2164
        %v2522 = vpop.f32.mrb[0].mxu0
        %v2523 = vadd.f32 0.0, %v2522
        %v2524 = vpop.f32.mrb[0].mxu0
        %v2525 = vpop.f32.mrb[0].mxu0
        %v2526 = vadd.f32 0.0, %v2525
        %v2527 = vpop.f32.mrb[0].mxu0
        %2528 = vmatprep.mubr.bf16.mxu0 0
        %2529 = vmatmul.mubr.bf16.gmra.mrb[0].mxu0 %v2165
        %v2530 = vpop.f32.mrb[0].mxu0
        %v2531 = vadd.f32 0.0, %v2530
        %v2532 = vpop.f32.mrb[0].mxu0
        %v2533 = vpop.f32.mrb[0].mxu0
        %v2534 = vadd.f32 0.0, %v2533
        %v2535 = vpop.f32.mrb[0].mxu0
        %2536 = vdwg.mxu0
        %2537 = vrot.lane.b32.xlu0 %v842, 64
        %v2538 = vpop.permute.xlu0 %2537
        %2539 = vrot.lane.b32.xlu0 %v844, 64
        %v2540 = vpop.permute.xlu0 %2539
        %2541 = vrot.lane.b32.xlu0 %v846, 64
        %v2542 = vpop.permute.xlu0 %2541
        %2543 = vrot.lane.b32.xlu0 %v848, 64
        %v2544 = vpop.permute.xlu0 %2543
        %2545 = vrot.lane.b32.xlu0 %v850, 64
        %v2546 = vpop.permute.xlu0 %2545
        %2547 = vrot.lane.b32.xlu0 %v852, 64
        %v2548 = vpop.permute.xlu0 %2547
        %2549 = vrot.lane.b32.xlu0 %v854, 64
        %v2550 = vpop.permute.xlu0 %2549
        %2551 = vrot.lane.b32.xlu0 %v856, 64
        %v2552 = vpop.permute.xlu0 %2551
        %2561 = vmatprep.subr.bf16.mxu0 0
        %2562 = vmatpush1.bf16.msra.mxu0 %v2538
        %2563 = vmatprep.subr.bf16.mxu0 0
        %2564 = vmatpush1.bf16.msra.mxu0 %v2540
        %2565 = vmatprep.subr.bf16.mxu0 0
        %2566 = vmatpush1.bf16.msra.mxu0 %v2542
        %2567 = vmatprep.subr.bf16.mxu0 0
        %2568 = vmatpush1.bf16.msra.mxu0 %v2544
        %2569 = vmatprep.subr.bf16.mxu0 0
        %2570 = vmatpush1.bf16.msra.mxu0 %v2546
        %2571 = vmatprep.subr.bf16.mxu0 0
        %2572 = vmatpush1.bf16.msra.mxu0 %v2548
        %2573 = vmatprep.subr.bf16.mxu0 0
        %2574 = vmatpush1.bf16.msra.mxu0 %v2550
        %2575 = vmatprep.subr.bf16.mxu0 0
        %2576 = vmatpush1.bf16.msra.mxu0 %v2552
        %2577 = vmatprep.subr.bf16.mxu0 0
        %2578 = vmatpush1.bf16.msra.mxu0 0
        %2579 = vmatprep.subr.bf16.mxu0 0
        %2580 = vmatpush1.bf16.msra.mxu0 0
        %2581 = vmatprep.subr.bf16.mxu0 0
        %2582 = vmatpush1.bf16.msra.mxu0 0
        %2583 = vmatprep.subr.bf16.mxu0 0
        %2584 = vmatpush1.bf16.msra.mxu0 0
        %2585 = vmatprep.subr.bf16.mxu0 0
        %2586 = vmatpush1.bf16.msra.mxu0 0
        %2587 = vmatprep.subr.bf16.mxu0 0
        %2588 = vmatpush1.bf16.msra.mxu0 0
        %2589 = vmatprep.subr.bf16.mxu0 0
        %2590 = vmatpush1.bf16.msra.mxu0 0
        %2591 = vmatprep.subr.bf16.mxu0 0
        %2592 = vmatpush1.bf16.msra.mxu0 0
        %2593 = vmatprep.mubr.bf16.mxu0 0
        %2594 = vmatmul.mubr.bf16.gmra.mrb[0].mxu0 %v2166
        %v2595 = vpop.f32.mrb[0].mxu0
        %v2596 = vadd.f32 0.0, %v2595
        %v2597 = vpop.f32.mrb[0].mxu0
        %v2598 = vpop.f32.mrb[0].mxu0
        %v2599 = vadd.f32 0.0, %v2598
        %v2600 = vpop.f32.mrb[0].mxu0
        %2601 = vmatprep.mubr.bf16.mxu0 0
        %2602 = vmatmul.mubr.bf16.gmra.mrb[0].mxu0 %v2167
        %v2603 = vpop.f32.mrb[0].mxu0
        %v2604 = vadd.f32 0.0, %v2603
        %v2605 = vpop.f32.mrb[0].mxu0
        %v2606 = vpop.f32.mrb[0].mxu0
        %v2607 = vadd.f32 0.0, %v2606
        %v2608 = vpop.f32.mrb[0].mxu0
        %2609 = vmatprep.mubr.bf16.mxu0 0
        %2610 = vmatmul.mubr.bf16.gmra.mrb[0].mxu0 %v2168
        %v2611 = vpop.f32.mrb[0].mxu0
        %v2612 = vadd.f32 0.0, %v2611
        %v2613 = vpop.f32.mrb[0].mxu0
        %v2614 = vpop.f32.mrb[0].mxu0
        %v2615 = vadd.f32 0.0, %v2614
        %v2616 = vpop.f32.mrb[0].mxu0
        %2617 = vmatprep.mubr.bf16.mxu0 0
        %2618 = vmatmul.mubr.bf16.gmra.mrb[0].mxu0 %v2169
        %v2619 = vpop.f32.mrb[0].mxu0
        %v2620 = vadd.f32 0.0, %v2619
        %v2621 = vpop.f32.mrb[0].mxu0
        %v2622 = vpop.f32.mrb[0].mxu0
        %v2623 = vadd.f32 0.0, %v2622
        %v2624 = vpop.f32.mrb[0].mxu0
        %2625 = vmatprep.mubr.bf16.mxu0 0
        %2626 = vmatmul.mubr.bf16.gmra.mrb[0].mxu0 %v2170
        %v2627 = vpop.f32.mrb[0].mxu0
        %v2628 = vadd.f32 0.0, %v2627
        %v2629 = vpop.f32.mrb[0].mxu0
        %v2630 = vpop.f32.mrb[0].mxu0
        %v2631 = vadd.f32 0.0, %v2630
        %v2632 = vpop.f32.mrb[0].mxu0
        %2633 = vmatprep.mubr.bf16.mxu0 0
        %2634 = vmatmul.mubr.bf16.gmra.mrb[0].mxu0 %v2171
        %v2635 = vpop.f32.mrb[0].mxu0
        %v2636 = vadd.f32 0.0, %v2635
        %v2637 = vpop.f32.mrb[0].mxu0
        %v2638 = vpop.f32.mrb[0].mxu0
        %v2639 = vadd.f32 0.0, %v2638
        %v2640 = vpop.f32.mrb[0].mxu0
        %2641 = vmatprep.mubr.bf16.mxu0 0
        %2642 = vmatmul.mubr.bf16.gmra.mrb[0].mxu0 %v2172
        %v2643 = vpop.f32.mrb[0].mxu0
        %v2644 = vadd.f32 0.0, %v2643
        %v2645 = vpop.f32.mrb[0].mxu0
        %v2646 = vpop.f32.mrb[0].mxu0
        %v2647 = vadd.f32 0.0, %v2646
        %v2648 = vpop.f32.mrb[0].mxu0
        %2649 = vmatprep.mubr.bf16.mxu0 0
        %2650 = vmatmul.mubr.bf16.gmra.mrb[0].mxu0 %v2173
        %v2651 = vpop.f32.mrb[0].mxu0
        %v2652 = vadd.f32 0.0, %v2651
        %v2653 = vpop.f32.mrb[0].mxu0
        %v2654 = vpop.f32.mrb[0].mxu0
        %v2655 = vadd.f32 0.0, %v2654
        %v2656 = vpop.f32.mrb[0].mxu0
        %2657 = vdwg.mxu0
        %2674 = vrot.lane.b32.xlu0 %v2354, 32
        %v2675 = vpop.permute.xlu0 %2674
        %2676 = vrot.lane.b32.xlu0 %v2357, 32
        %v2677 = vpop.permute.xlu0 %2676
        %2678 = vrot.lane.b32.xlu0 %v2362, 32
        %v2679 = vpop.permute.xlu0 %2678
        %2680 = vrot.lane.b32.xlu0 %v2365, 32
        %v2681 = vpop.permute.xlu0 %2680
        %2682 = vrot.lane.b32.xlu0 %v2370, 32
        %v2683 = vpop.permute.xlu0 %2682
        %2684 = vrot.lane.b32.xlu0 %v2373, 32
        %v2685 = vpop.permute.xlu0 %2684
        %2686 = vrot.lane.b32.xlu0 %v2378, 32
        %v2687 = vpop.permute.xlu0 %2686
        %2688 = vrot.lane.b32.xlu0 %v2381, 32
        %v2689 = vpop.permute.xlu0 %2688
        %2690 = vrot.lane.b32.xlu0 %v2386, 32
        %v2691 = vpop.permute.xlu0 %2690
        %2692 = vrot.lane.b32.xlu0 %v2389, 32
        %v2693 = vpop.permute.xlu0 %2692
        %2694 = vrot.lane.b32.xlu0 %v2394, 32
        %v2695 = vpop.permute.xlu0 %2694
        %2696 = vrot.lane.b32.xlu0 %v2397, 32
        %v2697 = vpop.permute.xlu0 %2696
        %2698 = vrot.lane.b32.xlu0 %v2402, 32
        %v2699 = vpop.permute.xlu0 %2698
        %2700 = vrot.lane.b32.xlu0 %v2405, 32
        %v2701 = vpop.permute.xlu0 %2700
        %2702 = vrot.lane.b32.xlu0 %v2410, 32
        %v2703 = vpop.permute.xlu0 %2702
        %2704 = vrot.lane.b32.xlu0 %v2413, 32
        %v2705 = vpop.permute.xlu0 %2704
        %2738 = vrot.lane.b32.xlu0 %v2475, 64
        %v2739 = vpop.permute.xlu0 %2738
        %2740 = vrot.lane.b32.xlu0 %v2478, 64
        %v2741 = vpop.permute.xlu0 %2740
        %2742 = vrot.lane.b32.xlu0 %v2483, 64
        %v2743 = vpop.permute.xlu0 %2742
        %2744 = vrot.lane.b32.xlu0 %v2486, 64
        %v2745 = vpop.permute.xlu0 %2744
        %2746 = vrot.lane.b32.xlu0 %v2491, 64
        %v2747 = vpop.permute.xlu0 %2746
        %2748 = vrot.lane.b32.xlu0 %v2494, 64
        %v2749 = vpop.permute.xlu0 %2748
        %2750 = vrot.lane.b32.xlu0 %v2499, 64
        %v2751 = vpop.permute.xlu0 %2750
        %2752 = vrot.lane.b32.xlu0 %v2502, 64
        %v2753 = vpop.permute.xlu0 %2752
        %2754 = vrot.lane.b32.xlu0 %v2507, 64
        %v2755 = vpop.permute.xlu0 %2754
        %2756 = vrot.lane.b32.xlu0 %v2510, 64
        %v2757 = vpop.permute.xlu0 %2756
        %2758 = vrot.lane.b32.xlu0 %v2515, 64
        %v2759 = vpop.permute.xlu0 %2758
        %2760 = vrot.lane.b32.xlu0 %v2518, 64
        %v2761 = vpop.permute.xlu0 %2760
        %2762 = vrot.lane.b32.xlu0 %v2523, 64
        %v2763 = vpop.permute.xlu0 %2762
        %2764 = vrot.lane.b32.xlu0 %v2526, 64
        %v2765 = vpop.permute.xlu0 %2764
        %2766 = vrot.lane.b32.xlu0 %v2531, 64
        %v2767 = vpop.permute.xlu0 %2766
        %2768 = vrot.lane.b32.xlu0 %v2534, 64
        %v2769 = vpop.permute.xlu0 %2768
        %2802 = vrot.lane.b32.xlu0 %v2596, 96
        %v2803 = vpop.permute.xlu0 %2802
        %2804 = vrot.lane.b32.xlu0 %v2599, 96
        %v2805 = vpop.permute.xlu0 %2804
        %2806 = vrot.lane.b32.xlu0 %v2604, 96
        %v2807 = vpop.permute.xlu0 %2806
        %2808 = vrot.lane.b32.xlu0 %v2607, 96
        %v2809 = vpop.permute.xlu0 %2808
        %2810 = vrot.lane.b32.xlu0 %v2612, 96
        %v2811 = vpop.permute.xlu0 %2810
        %2812 = vrot.lane.b32.xlu0 %v2615, 96
        %v2813 = vpop.permute.xlu0 %2812
        %2814 = vrot.lane.b32.xlu0 %v2620, 96
        %v2815 = vpop.permute.xlu0 %2814
        %2816 = vrot.lane.b32.xlu0 %v2623, 96
        %v2817 = vpop.permute.xlu0 %2816
        %2818 = vrot.lane.b32.xlu0 %v2628, 96
        %v2819 = vpop.permute.xlu0 %2818
        %2820 = vrot.lane.b32.xlu0 %v2631, 96
        %v2821 = vpop.permute.xlu0 %2820
        %2822 = vrot.lane.b32.xlu0 %v2636, 96
        %v2823 = vpop.permute.xlu0 %2822
        %2824 = vrot.lane.b32.xlu0 %v2639, 96
        %v2825 = vpop.permute.xlu0 %2824
        %2826 = vrot.lane.b32.xlu0 %v2644, 96
        %v2827 = vpop.permute.xlu0 %2826
        %2828 = vrot.lane.b32.xlu0 %v2647, 96
        %v2829 = vpop.permute.xlu0 %2828
        %2830 = vrot.lane.b32.xlu0 %v2652, 96
        %v2831 = vpop.permute.xlu0 %2830
        %2832 = vrot.lane.b32.xlu0 %v2655, 96
        %v2833 = vpop.permute.xlu0 %2832
        %v2850 = vsel %vm937, %v2233, %v2675
        %v2851 = vsel %vm937, %v2236, %v2677
        %v2852 = vsel %vm937, %v2241, %v2679
        %v2853 = vsel %vm937, %v2244, %v2681
        %v2854 = vsel %vm937, %v2249, %v2683
        %v2855 = vsel %vm937, %v2252, %v2685
        %v2856 = vsel %vm937, %v2257, %v2687
        %v2857 = vsel %vm937, %v2260, %v2689
        %v2858 = vsel %vm937, %v2265, %v2691
        %v2859 = vsel %vm937, %v2268, %v2693
        %v2860 = vsel %vm937, %v2273, %v2695
        %v2861 = vsel %vm937, %v2276, %v2697
        %v2862 = vsel %vm937, %v2281, %v2699
        %v2863 = vsel %vm937, %v2284, %v2701
        %v2864 = vsel %vm937, %v2289, %v2703
        %v2865 = vsel %vm937, %v2292, %v2705
        %vm2866 = vcmask 523264
        %v2867 = vsel %vm2866, %v2850, %v2739
        %v2868 = vsel %vm2866, %v2851, %v2741
        %v2869 = vsel %vm2866, %v2852, %v2743
        %v2870 = vsel %vm2866, %v2853, %v2745
        %v2871 = vsel %vm2866, %v2854, %v2747
        %v2872 = vsel %vm2866, %v2855, %v2749
        %v2873 = vsel %vm2866, %v2856, %v2751
        %v2874 = vsel %vm2866, %v2857, %v2753
        %v2875 = vsel %vm2866, %v2858, %v2755
        %v2876 = vsel %vm2866, %v2859, %v2757
        %v2877 = vsel %vm2866, %v2860, %v2759
        %v2878 = vsel %vm2866, %v2861, %v2761
        %v2879 = vsel %vm2866, %v2862, %v2763
        %v2880 = vsel %vm2866, %v2863, %v2765
        %v2881 = vsel %vm2866, %v2864, %v2767
        %v2882 = vsel %vm2866, %v2865, %v2769
        %vm2883 = vcmask 785408
        %v2884 = vsel %vm2883, %v2867, %v2803
        %v2885 = vsel %vm2883, %v2868, %v2805
        %v2886 = vsel %vm2883, %v2869, %v2807
        %v2887 = vsel %vm2883, %v2870, %v2809
        %v2888 = vsel %vm2883, %v2871, %v2811
        %v2889 = vsel %vm2883, %v2872, %v2813
        %v2890 = vsel %vm2883, %v2873, %v2815
        %v2891 = vsel %vm2883, %v2874, %v2817
        %v2892 = vsel %vm2883, %v2875, %v2819
        %v2893 = vsel %vm2883, %v2876, %v2821
        %v2894 = vsel %vm2883, %v2877, %v2823
        %v2895 = vsel %vm2883, %v2878, %v2825
        %v2896 = vsel %vm2883, %v2879, %v2827
        %v2897 = vsel %vm2883, %v2880, %v2829
        %v2898 = vsel %vm2883, %v2881, %v2831
        %v2899 = vsel %vm2883, %v2882, %v2833
        %v2900 = vpack.c.bf16 %v2885, %v2884
        %v2901 = vpack.c.bf16 %v2887, %v2886
        %v2902 = vpack.c.bf16 %v2889, %v2888
        %v2903 = vpack.c.bf16 %v2891, %v2890
        %v2904 = vpack.c.bf16 %v2893, %v2892
        %v2905 = vpack.c.bf16 %v2895, %v2894
        %v2906 = vpack.c.bf16 %v2897, %v2896
        %v2907 = vpack.c.bf16 %v2899, %v2898
        %v2908 = vld [vmem:[%s2 + $0xc] sm:$0xf]
        %v2909 = vld [vmem:[%s2 + $0x24] sm:$0xf]
        %v2910 = vld [vmem:[%s2 + $0x3c] sm:$0xf]
        %v2911 = vld [vmem:[%s2 + $0x54] sm:$0xf]
        %v2912 = vld [vmem:[%s2 + $0x6c] sm:$0xf]
        %v2913 = vld [vmem:[%s2 + $0x84] sm:$0xf]
        %v2914 = vld [vmem:[%s2 + $0x9c] sm:$0xf]
        %v2915 = vld [vmem:[%s2 + $0xb4] sm:$0xf]
        %v2916 = vld [vmem:[%s2 + $0xcc] sm:$0xf]
        %v2917 = vld [vmem:[%s2 + $0xe4] sm:$0xf]
        %v2918 = vld [vmem:[%s2 + $0xfc] sm:$0xf]
        %v2919 = vld [vmem:[%s2 + $0x114] sm:$0xf]
        %v2920 = vld [vmem:[%s2 + $0x12c] sm:$0xf]
        %v2921 = vld [vmem:[%s2 + $0x144] sm:$0xf]
        %v2922 = vld [vmem:[%s2 + $0x15c] sm:$0xf]
        %v2923 = vld [vmem:[%s2 + $0x174] sm:$0xf]
        %v2924 = vld [vmem:[%s4 + $0x1] ss:$0 sm:$0xff]
        %v2941 = vunpack.c.l.b16 %v2908
        %v2942 = vunpack.c.l.b16 %v2909
        %v2943 = vunpack.c.l.b16 %v2910
        %v2944 = vunpack.c.l.b16 %v2911
        %v2945 = vunpack.c.l.b16 %v2912
        %v2946 = vunpack.c.l.b16 %v2913
        %v2947 = vunpack.c.l.b16 %v2914
        %v2948 = vunpack.c.l.b16 %v2915
        %v2949 = vunpack.c.l.b16 %v2916
        %v2950 = vunpack.c.l.b16 %v2917
        %v2951 = vunpack.c.l.b16 %v2918
        %v2952 = vunpack.c.l.b16 %v2919
        %v2953 = vunpack.c.l.b16 %v2920
        %v2954 = vunpack.c.l.b16 %v2921
        %v2955 = vunpack.c.l.b16 %v2922
        %v2956 = vunpack.c.l.b16 %v2923
        %v2957 = vpack.c.b16 %v2942, %v2941
        %v2958 = vpack.c.b16 %v2944, %v2943
        %v2959 = vpack.c.b16 %v2946, %v2945
        %v2960 = vpack.c.b16 %v2948, %v2947
        %v2961 = vpack.c.b16 %v2950, %v2949
        %v2962 = vpack.c.b16 %v2952, %v2951
        %v2963 = vpack.c.b16 %v2954, %v2953
        %v2964 = vpack.c.b16 %v2956, %v2955
        %2973 = vmatprep.subr.bf16.mxu0 0
        %2974 = vmatpush1.bf16.msra.mxu0 %v2957
        %2975 = vmatprep.subr.bf16.mxu0 0
        %2976 = vmatpush1.bf16.msra.mxu0 %v2958
        %2977 = vmatprep.subr.bf16.mxu0 0
        %2978 = vmatpush1.bf16.msra.mxu0 %v2959
        %2979 = vmatprep.subr.bf16.mxu0 0
        %2980 = vmatpush1.bf16.msra.mxu0 %v2960
        %2981 = vmatprep.subr.bf16.mxu0 0
        %2982 = vmatpush1.bf16.msra.mxu0 %v2961
        %2983 = vmatprep.subr.bf16.mxu0 0
        %2984 = vmatpush1.bf16.msra.mxu0 %v2962
        %2985 = vmatprep.subr.bf16.mxu0 0
        %2986 = vmatpush1.bf16.msra.mxu0 %v2963
        %2987 = vmatprep.subr.bf16.mxu0 0
        %2988 = vmatpush1.bf16.msra.mxu0 %v2964
        %2989 = vmatprep.subr.bf16.mxu0 0
        %2990 = vmatpush1.bf16.msra.mxu0 0
        %2991 = vmatprep.subr.bf16.mxu0 0
        %2992 = vmatpush1.bf16.msra.mxu0 0
        %2993 = vmatprep.subr.bf16.mxu0 0
        %2994 = vmatpush1.bf16.msra.mxu0 0
        %2995 = vmatprep.subr.bf16.mxu0 0
        %2996 = vmatpush1.bf16.msra.mxu0 0
        %2997 = vmatprep.subr.bf16.mxu0 0
        %2998 = vmatpush1.bf16.msra.mxu0 0
        %2999 = vmatprep.subr.bf16.mxu0 0
        %3000 = vmatpush1.bf16.msra.mxu0 0
        %3001 = vmatprep.subr.bf16.mxu0 0
        %3002 = vmatpush1.bf16.msra.mxu0 0
        %3003 = vmatprep.subr.bf16.mxu0 0
        %3004 = vmatpush1.bf16.msra.mxu0 0
        %3005 = vmatprep.mubr.bf16.mxu0 0
        %3006 = vmatmul.mubr.bf16.gmra.mrb[0].mxu0 %v2900
        %v3007 = vpop.f32.mrb[0].mxu0
        %v3008 = vadd.f32 %v2924, %v3007
        %v3009 = vpop.f32.mrb[0].mxu0
        %v3010 = vpop.f32.mrb[0].mxu0
        %v3011 = vadd.f32 %v2924, %v3010
        %v3012 = vpop.f32.mrb[0].mxu0
        %3013 = vmatprep.mubr.bf16.mxu0 0
        %3014 = vmatmul.mubr.bf16.gmra.mrb[0].mxu0 %v2901
        %v3015 = vpop.f32.mrb[0].mxu0
        %v3016 = vadd.f32 %v2924, %v3015
        %v3017 = vpop.f32.mrb[0].mxu0
        %v3018 = vpop.f32.mrb[0].mxu0
        %v3019 = vadd.f32 %v2924, %v3018
        %v3020 = vpop.f32.mrb[0].mxu0
        %3021 = vmatprep.mubr.bf16.mxu0 0
        %3022 = vmatmul.mubr.bf16.gmra.mrb[0].mxu0 %v2902
        %v3023 = vpop.f32.mrb[0].mxu0
        %v3024 = vadd.f32 %v2924, %v3023
        %v3025 = vpop.f32.mrb[0].mxu0
        %v3026 = vpop.f32.mrb[0].mxu0
        %v3027 = vadd.f32 %v2924, %v3026
        %v3028 = vpop.f32.mrb[0].mxu0
        %3029 = vmatprep.mubr.bf16.mxu0 0
        %3030 = vmatmul.mubr.bf16.gmra.mrb[0].mxu0 %v2903
        %v3031 = vpop.f32.mrb[0].mxu0
        %v3032 = vadd.f32 %v2924, %v3031
        %v3033 = vpop.f32.mrb[0].mxu0
        %v3034 = vpop.f32.mrb[0].mxu0
        %v3035 = vadd.f32 %v2924, %v3034
        %v3036 = vpop.f32.mrb[0].mxu0
        %3037 = vmatprep.mubr.bf16.mxu0 0
        %3038 = vmatmul.mubr.bf16.gmra.mrb[0].mxu0 %v2904
        %v3039 = vpop.f32.mrb[0].mxu0
        %v3040 = vadd.f32 %v2924, %v3039
        %v3041 = vpop.f32.mrb[0].mxu0
        %v3042 = vpop.f32.mrb[0].mxu0
        %v3043 = vadd.f32 %v2924, %v3042
        %v3044 = vpop.f32.mrb[0].mxu0
        %3045 = vmatprep.mubr.bf16.mxu0 0
        %3046 = vmatmul.mubr.bf16.gmra.mrb[0].mxu0 %v2905
        %v3047 = vpop.f32.mrb[0].mxu0
        %v3048 = vadd.f32 %v2924, %v3047
        %v3049 = vpop.f32.mrb[0].mxu0
        %v3050 = vpop.f32.mrb[0].mxu0
        %v3051 = vadd.f32 %v2924, %v3050
        %v3052 = vpop.f32.mrb[0].mxu0
        %3053 = vmatprep.mubr.bf16.mxu0 0
        %3054 = vmatmul.mubr.bf16.gmra.mrb[0].mxu0 %v2906
        %v3055 = vpop.f32.mrb[0].mxu0
        %v3056 = vadd.f32 %v2924, %v3055
        %v3057 = vpop.f32.mrb[0].mxu0
        %v3058 = vpop.f32.mrb[0].mxu0
        %v3059 = vadd.f32 %v2924, %v3058
        %v3060 = vpop.f32.mrb[0].mxu0
        %3061 = vmatprep.mubr.bf16.mxu0 0
        %3062 = vmatmul.mubr.bf16.gmra.mrb[0].mxu0 %v2907
        %v3063 = vpop.f32.mrb[0].mxu0
        %v3064 = vadd.f32 %v2924, %v3063
        %v3065 = vpop.f32.mrb[0].mxu0
        %v3066 = vpop.f32.mrb[0].mxu0
        %v3067 = vadd.f32 %v2924, %v3066
        %v3068 = vpop.f32.mrb[0].mxu0
        %3069 = vdwg.mxu0
        %v3070 = vadd.f32 %v260, %v3008
        %v3071 = vadd.f32 %v261, %v3011
        %v3072 = vadd.f32 %v262, %v3016
        %v3073 = vadd.f32 %v263, %v3019
        %v3074 = vadd.f32 %v264, %v3024
        %v3075 = vadd.f32 %v265, %v3027
        %v3076 = vadd.f32 %v266, %v3032
        %v3077 = vadd.f32 %v267, %v3035
        %v3078 = vadd.f32 %v268, %v3040
        %v3079 = vadd.f32 %v269, %v3043
        %v3080 = vadd.f32 %v270, %v3048
        %v3081 = vadd.f32 %v271, %v3051
        %v3082 = vadd.f32 %v272, %v3056
        %v3083 = vadd.f32 %v273, %v3059
        %v3084 = vadd.f32 %v274, %v3064
        %v3085 = vadd.f32 %v275, %v3067
        %3086 = vadd.xlane.f32.xlu0 %v3070
        %v3087 = vpop.xlane.xlu0 %3086
        %3088 = vadd.xlane.f32.xlu0 %v3071
        %v3089 = vpop.xlane.xlu0 %3088
        %3090 = vadd.xlane.f32.xlu0 %v3072
        %v3091 = vpop.xlane.xlu0 %3090
        %3092 = vadd.xlane.f32.xlu0 %v3073
        %v3093 = vpop.xlane.xlu0 %3092
        %3094 = vadd.xlane.f32.xlu0 %v3074
        %v3095 = vpop.xlane.xlu0 %3094
        %3096 = vadd.xlane.f32.xlu0 %v3075
        %v3097 = vpop.xlane.xlu0 %3096
        %3098 = vadd.xlane.f32.xlu0 %v3076
        %v3099 = vpop.xlane.xlu0 %3098
        %3100 = vadd.xlane.f32.xlu0 %v3077
        %v3101 = vpop.xlane.xlu0 %3100
        %3102 = vadd.xlane.f32.xlu0 %v3078
        %v3103 = vpop.xlane.xlu0 %3102
        %3104 = vadd.xlane.f32.xlu0 %v3079
        %v3105 = vpop.xlane.xlu0 %3104
        %3106 = vadd.xlane.f32.xlu0 %v3080
        %v3107 = vpop.xlane.xlu0 %3106
        %3108 = vadd.xlane.f32.xlu0 %v3081
        %v3109 = vpop.xlane.xlu0 %3108
        %3110 = vadd.xlane.f32.xlu0 %v3082
        %v3111 = vpop.xlane.xlu0 %3110
        %3112 = vadd.xlane.f32.xlu0 %v3083
        %v3113 = vpop.xlane.xlu0 %3112
        %3114 = vadd.xlane.f32.xlu0 %v3084
        %v3115 = vpop.xlane.xlu0 %3114
        %3116 = vadd.xlane.f32.xlu0 %v3085
        %v3117 = vpop.xlane.xlu0 %3116
        %v3118 = vrcp.pop 128.0
        %v3119 = vmul.f32 %v3087, %v3118
        %v3120 = vmul.f32 %v3089, %v3118
        %v3121 = vmul.f32 %v3091, %v3118
        %v3122 = vmul.f32 %v3093, %v3118
        %v3123 = vmul.f32 %v3095, %v3118
        %v3124 = vmul.f32 %v3097, %v3118
        %v3125 = vmul.f32 %v3099, %v3118
        %v3126 = vmul.f32 %v3101, %v3118
        %v3127 = vmul.f32 %v3103, %v3118
        %v3128 = vmul.f32 %v3105, %v3118
        %v3129 = vmul.f32 %v3107, %v3118
        %v3130 = vmul.f32 %v3109, %v3118
        %v3131 = vmul.f32 %v3111, %v3118
        %v3132 = vmul.f32 %v3113, %v3118
        %v3133 = vmul.f32 %v3115, %v3118
        %v3134 = vmul.f32 %v3117, %v3118
        %v3135 = vsub.f32 %v3070, %v3119
        %v3136 = vsub.f32 %v3071, %v3120
        %v3137 = vsub.f32 %v3072, %v3121
        %v3138 = vsub.f32 %v3073, %v3122
        %v3139 = vsub.f32 %v3074, %v3123
        %v3140 = vsub.f32 %v3075, %v3124
        %v3141 = vsub.f32 %v3076, %v3125
        %v3142 = vsub.f32 %v3077, %v3126
        %v3143 = vsub.f32 %v3078, %v3127
        %v3144 = vsub.f32 %v3079, %v3128
        %v3145 = vsub.f32 %v3080, %v3129
        %v3146 = vsub.f32 %v3081, %v3130
        %v3147 = vsub.f32 %v3082, %v3131
        %v3148 = vsub.f32 %v3083, %v3132
        %v3149 = vsub.f32 %v3084, %v3133
        %v3150 = vsub.f32 %v3085, %v3134
        %v3151 = vmul.f32 %v3135, %v3135
        %v3152 = vmul.f32 %v3136, %v3136
        %v3153 = vmul.f32 %v3137, %v3137
        %v3154 = vmul.f32 %v3138, %v3138
        %v3155 = vmul.f32 %v3139, %v3139
        %v3156 = vmul.f32 %v3140, %v3140
        %v3157 = vmul.f32 %v3141, %v3141
        %v3158 = vmul.f32 %v3142, %v3142
        %v3159 = vmul.f32 %v3143, %v3143
        %v3160 = vmul.f32 %v3144, %v3144
        %v3161 = vmul.f32 %v3145, %v3145
        %v3162 = vmul.f32 %v3146, %v3146
        %v3163 = vmul.f32 %v3147, %v3147
        %v3164 = vmul.f32 %v3148, %v3148
        %v3165 = vmul.f32 %v3149, %v3149
        %v3166 = vmul.f32 %v3150, %v3150
        %3167 = vadd.xlane.f32.xlu0 %v3151
        %v3168 = vpop.xlane.xlu0 %3167
        %3169 = vadd.xlane.f32.xlu0 %v3152
        %v3170 = vpop.xlane.xlu0 %3169
        %3171 = vadd.xlane.f32.xlu0 %v3153
        %v3172 = vpop.xlane.xlu0 %3171
        %3173 = vadd.xlane.f32.xlu0 %v3154
        %v3174 = vpop.xlane.xlu0 %3173
        %3175 = vadd.xlane.f32.xlu0 %v3155
        %v3176 = vpop.xlane.xlu0 %3175
        %3177 = vadd.xlane.f32.xlu0 %v3156
        %v3178 = vpop.xlane.xlu0 %3177
        %3179 = vadd.xlane.f32.xlu0 %v3157
        %v3180 = vpop.xlane.xlu0 %3179
        %3181 = vadd.xlane.f32.xlu0 %v3158
        %v3182 = vpop.xlane.xlu0 %3181
        %3183 = vadd.xlane.f32.xlu0 %v3159
        %v3184 = vpop.xlane.xlu0 %3183
        %3185 = vadd.xlane.f32.xlu0 %v3160
        %v3186 = vpop.xlane.xlu0 %3185
        %3187 = vadd.xlane.f32.xlu0 %v3161
        %v3188 = vpop.xlane.xlu0 %3187
        %3189 = vadd.xlane.f32.xlu0 %v3162
        %v3190 = vpop.xlane.xlu0 %3189
        %3191 = vadd.xlane.f32.xlu0 %v3163
        %v3192 = vpop.xlane.xlu0 %3191
        %3193 = vadd.xlane.f32.xlu0 %v3164
        %v3194 = vpop.xlane.xlu0 %3193
        %3195 = vadd.xlane.f32.xlu0 %v3165
        %v3196 = vpop.xlane.xlu0 %3195
        %3197 = vadd.xlane.f32.xlu0 %v3166
        %v3198 = vpop.xlane.xlu0 %3197
        %v3199 = vmul.f32 %v3168, %v3118
        %v3200 = vmul.f32 %v3170, %v3118
        %v3201 = vmul.f32 %v3172, %v3118
        %v3202 = vmul.f32 %v3174, %v3118
        %v3203 = vmul.f32 %v3176, %v3118
        %v3204 = vmul.f32 %v3178, %v3118
        %v3205 = vmul.f32 %v3180, %v3118
        %v3206 = vmul.f32 %v3182, %v3118
        %v3207 = vmul.f32 %v3184, %v3118
        %v3208 = vmul.f32 %v3186, %v3118
        %v3209 = vmul.f32 %v3188, %v3118
        %v3210 = vmul.f32 %v3190, %v3118
        %v3211 = vmul.f32 %v3192, %v3118
        %v3212 = vmul.f32 %v3194, %v3118
        %v3213 = vmul.f32 %v3196, %v3118
        %v3214 = vmul.f32 %v3198, %v3118
        %v3215 = vadd.f32 %v3199, 1e-05
        %v3216 = vadd.f32 %v3200, 1e-05
        %v3217 = vadd.f32 %v3201, 1e-05
        %v3218 = vadd.f32 %v3202, 1e-05
        %v3219 = vadd.f32 %v3203, 1e-05
        %v3220 = vadd.f32 %v3204, 1e-05
        %v3221 = vadd.f32 %v3205, 1e-05
        %v3222 = vadd.f32 %v3206, 1e-05
        %v3223 = vadd.f32 %v3207, 1e-05
        %v3224 = vadd.f32 %v3208, 1e-05
        %v3225 = vadd.f32 %v3209, 1e-05
        %v3226 = vadd.f32 %v3210, 1e-05
        %v3227 = vadd.f32 %v3211, 1e-05
        %v3228 = vadd.f32 %v3212, 1e-05
        %v3229 = vadd.f32 %v3213, 1e-05
        %v3230 = vadd.f32 %v3214, 1e-05
        %v3231 = vrsqrt.pop %v3215
        %v3232 = vrsqrt.pop %v3216
        %v3233 = vrsqrt.pop %v3217
        %v3234 = vrsqrt.pop %v3218
        %v3235 = vrsqrt.pop %v3219
        %v3236 = vrsqrt.pop %v3220
        %v3237 = vrsqrt.pop %v3221
        %v3238 = vrsqrt.pop %v3222
        %v3239 = vrsqrt.pop %v3223
        %v3240 = vrsqrt.pop %v3224
        %v3241 = vrsqrt.pop %v3225
        %v3242 = vrsqrt.pop %v3226
        %v3243 = vrsqrt.pop %v3227
        %v3244 = vrsqrt.pop %v3228
        %v3245 = vrsqrt.pop %v3229
        %v3246 = vrsqrt.pop %v3230
        %v3247 = vmul.f32 %v3135, %v3231
        %v3248 = vmul.f32 %v3136, %v3232
        %v3249 = vmul.f32 %v3137, %v3233
        %v3250 = vmul.f32 %v3138, %v3234
        %v3251 = vmul.f32 %v3139, %v3235
        %v3252 = vmul.f32 %v3140, %v3236
        %v3253 = vmul.f32 %v3141, %v3237
        %v3254 = vmul.f32 %v3142, %v3238
        %v3255 = vmul.f32 %v3143, %v3239
        %v3256 = vmul.f32 %v3144, %v3240
        %v3257 = vmul.f32 %v3145, %v3241
        %v3258 = vmul.f32 %v3146, %v3242
        %v3259 = vmul.f32 %v3147, %v3243
        %v3260 = vmul.f32 %v3148, %v3244
        %v3261 = vmul.f32 %v3149, %v3245
        %v3262 = vmul.f32 %v3150, %v3246
        %v3263 = vld [vmem:[%s4 + $0x4] ss:$0 sm:$0xff]
        %v3264 = vmul.f32 %v3247, %v3263
        %v3265 = vmul.f32 %v3248, %v3263
        %v3266 = vmul.f32 %v3249, %v3263
        %v3267 = vmul.f32 %v3250, %v3263
        %v3268 = vmul.f32 %v3251, %v3263
        %v3269 = vmul.f32 %v3252, %v3263
        %v3270 = vmul.f32 %v3253, %v3263
        %v3271 = vmul.f32 %v3254, %v3263
        %v3272 = vmul.f32 %v3255, %v3263
        %v3273 = vmul.f32 %v3256, %v3263
        %v3274 = vmul.f32 %v3257, %v3263
        %v3275 = vmul.f32 %v3258, %v3263
        %v3276 = vmul.f32 %v3259, %v3263
        %v3277 = vmul.f32 %v3260, %v3263
        %v3278 = vmul.f32 %v3261, %v3263
        %v3279 = vmul.f32 %v3262, %v3263
        %v3280 = vld [vmem:[%s4 + $0x5] ss:$0 sm:$0xff]
        %v3281 = vadd.f32 %v3264, %v3280
        %v3282 = vadd.f32 %v3265, %v3280
        %v3283 = vadd.f32 %v3266, %v3280
        %v3284 = vadd.f32 %v3267, %v3280
        %v3285 = vadd.f32 %v3268, %v3280
        %v3286 = vadd.f32 %v3269, %v3280
        %v3287 = vadd.f32 %v3270, %v3280
        %v3288 = vadd.f32 %v3271, %v3280
        %v3289 = vadd.f32 %v3272, %v3280
        %v3290 = vadd.f32 %v3273, %v3280
        %v3291 = vadd.f32 %v3274, %v3280
        %v3292 = vadd.f32 %v3275, %v3280
        %v3293 = vadd.f32 %v3276, %v3280
        %v3294 = vadd.f32 %v3277, %v3280
        %v3295 = vadd.f32 %v3278, %v3280
        %v3296 = vadd.f32 %v3279, %v3280
        %v3297 = vpack.c.bf16 %v3282, %v3281
        %v3298 = vpack.c.bf16 %v3284, %v3283
        %v3299 = vpack.c.bf16 %v3286, %v3285
        %v3300 = vpack.c.bf16 %v3288, %v3287
        %v3301 = vpack.c.bf16 %v3290, %v3289
        %v3302 = vpack.c.bf16 %v3292, %v3291
        %v3303 = vpack.c.bf16 %v3294, %v3293
        %v3304 = vpack.c.bf16 %v3296, %v3295
        %v3305 = vld [vmem:[%s2 + $0x10] sm:$0xff]
        %v3306 = vld [vmem:[%s2 + $0x28] sm:$0xff]
        %v3307 = vld [vmem:[%s2 + $0x40] sm:$0xff]
        %v3308 = vld [vmem:[%s2 + $0x58] sm:$0xff]
        %v3309 = vld [vmem:[%s2 + $0x70] sm:$0xff]
        %v3310 = vld [vmem:[%s2 + $0x88] sm:$0xff]
        %v3311 = vld [vmem:[%s2 + $0xa0] sm:$0xff]
        %v3312 = vld [vmem:[%s2 + $0xb8] sm:$0xff]
        %v3313 = vld [vmem:[%s2 + $0xd0] sm:$0xff]
        %v3314 = vld [vmem:[%s2 + $0xe8] sm:$0xff]
        %v3315 = vld [vmem:[%s2 + $0x100] sm:$0xff]
        %v3316 = vld [vmem:[%s2 + $0x118] sm:$0xff]
        %v3317 = vld [vmem:[%s2 + $0x130] sm:$0xff]
        %v3318 = vld [vmem:[%s2 + $0x148] sm:$0xff]
        %v3319 = vld [vmem:[%s2 + $0x160] sm:$0xff]
        %v3320 = vld [vmem:[%s2 + $0x178] sm:$0xff]
        %s3321 = scalar_lea.vmem %s4, 2
        %v3322 = vld [vmem:[%s3321] ss:$8 sm:$0x3]
        %v3324 = vlaneseq
        %v3325 = vshrl.u32 %v3324, 7
        %v3326 = vsub.s32 0, %v3325
        %v3327 = vrot.slane %v3322, %v3326
        %v3328 = vlaneseq
        %v3329 = vshrl.u32 %v3328, 7
        %v3330 = vsub.s32 1, %v3329
        %v3331 = vrot.slane %v3322, %v3330
        %v3350 = vunpack.c.l.b16 %v3305
        %v3351 = vunpack.c.h.b16 %v3305
        %v3352 = vunpack.c.l.b16 %v3306
        %v3353 = vunpack.c.h.b16 %v3306
        %v3354 = vunpack.c.l.b16 %v3307
        %v3355 = vunpack.c.h.b16 %v3307
        %v3356 = vunpack.c.l.b16 %v3308
        %v3357 = vunpack.c.h.b16 %v3308
        %v3358 = vunpack.c.l.b16 %v3309
        %v3359 = vunpack.c.h.b16 %v3309
        %v3360 = vunpack.c.l.b16 %v3310
        %v3361 = vunpack.c.h.b16 %v3310
        %v3362 = vunpack.c.l.b16 %v3311
        %v3363 = vunpack.c.h.b16 %v3311
        %v3364 = vunpack.c.l.b16 %v3312
        %v3365 = vunpack.c.h.b16 %v3312
        %v3366 = vunpack.c.l.b16 %v3313
        %v3367 = vunpack.c.h.b16 %v3313
        %v3368 = vunpack.c.l.b16 %v3314
        %v3369 = vunpack.c.h.b16 %v3314
        %v3370 = vunpack.c.l.b16 %v3315
        %v3371 = vunpack.c.h.b16 %v3315
        %v3372 = vunpack.c.l.b16 %v3316
        %v3373 = vunpack.c.h.b16 %v3316
        %v3374 = vunpack.c.l.b16 %v3317
        %v3375 = vunpack.c.h.b16 %v3317
        %v3376 = vunpack.c.l.b16 %v3318
        %v3377 = vunpack.c.h.b16 %v3318
        %v3378 = vunpack.c.l.b16 %v3319
        %v3379 = vunpack.c.h.b16 %v3319
        %v3380 = vunpack.c.l.b16 %v3320
        %v3381 = vunpack.c.h.b16 %v3320
        %v3382 = vpack.c.b16 %v3352, %v3350
        %v3383 = vpack.c.b16 %v3353, %v3351
        %v3384 = vpack.c.b16 %v3356, %v3354
        %v3385 = vpack.c.b16 %v3357, %v3355
        %v3386 = vpack.c.b16 %v3360, %v3358
        %v3387 = vpack.c.b16 %v3361, %v3359
        %v3388 = vpack.c.b16 %v3364, %v3362
        %v3389 = vpack.c.b16 %v3365, %v3363
        %v3390 = vpack.c.b16 %v3368, %v3366
        %v3391 = vpack.c.b16 %v3369, %v3367
        %v3392 = vpack.c.b16 %v3372, %v3370
        %v3393 = vpack.c.b16 %v3373, %v3371
        %v3394 = vpack.c.b16 %v3376, %v3374
        %v3395 = vpack.c.b16 %v3377, %v3375
        %v3396 = vpack.c.b16 %v3380, %v3378
        %v3397 = vpack.c.b16 %v3381, %v3379
        %3414 = vmatprep.subr.bf16.mxu0 %v3383
        %3415 = vmatpush1.bf16.msra.mxu0 %v3382
        %3416 = vmatprep.subr.bf16.mxu0 %v3385
        %3417 = vmatpush1.bf16.msra.mxu0 %v3384
        %3418 = vmatprep.subr.bf16.mxu0 %v3387
        %3419 = vmatpush1.bf16.msra.mxu0 %v3386
        %3420 = vmatprep.subr.bf16.mxu0 %v3389
        %3421 = vmatpush1.bf16.msra.mxu0 %v3388
        %3422 = vmatprep.subr.bf16.mxu0 %v3391
        %3423 = vmatpush1.bf16.msra.mxu0 %v3390
        %3424 = vmatprep.subr.bf16.mxu0 %v3393
        %3425 = vmatpush1.bf16.msra.mxu0 %v3392
        %3426 = vmatprep.subr.bf16.mxu0 %v3395
        %3427 = vmatpush1.bf16.msra.mxu0 %v3394
        %3428 = vmatprep.subr.bf16.mxu0 %v3397
        %3429 = vmatpush1.bf16.msra.mxu0 %v3396
        %3430 = vmatprep.subr.bf16.mxu0 0
        %3431 = vmatpush1.bf16.msra.mxu0 0
        %3432 = vmatprep.subr.bf16.mxu0 0
        %3433 = vmatpush1.bf16.msra.mxu0 0
        %3434 = vmatprep.subr.bf16.mxu0 0
        %3435 = vmatpush1.bf16.msra.mxu0 0
        %3436 = vmatprep.subr.bf16.mxu0 0
        %3437 = vmatpush1.bf16.msra.mxu0 0
        %3438 = vmatprep.subr.bf16.mxu0 0
        %3439 = vmatpush1.bf16.msra.mxu0 0
        %3440 = vmatprep.subr.bf16.mxu0 0
        %3441 = vmatpush1.bf16.msra.mxu0 0
        %3442 = vmatprep.subr.bf16.mxu0 0
        %3443 = vmatpush1.bf16.msra.mxu0 0
        %3444 = vmatprep.subr.bf16.mxu0 0
        %3445 = vmatpush1.bf16.msra.mxu0 0
        %3446 = vmatprep.mubr.bf16.mxu0 0
        %3447 = vmatmul.mubr.bf16.gmra.mrb[0].mxu0 %v3297
        %v3448 = vpop.f32.mrb[0].mxu0
        %v3449 = vadd.f32 %v3327, %v3448
        %v3450 = vpop.f32.mrb[0].mxu0
        %v3451 = vadd.f32 %v3331, %v3450
        %v3452 = vpop.f32.mrb[0].mxu0
        %v3453 = vadd.f32 %v3327, %v3452
        %v3454 = vpop.f32.mrb[0].mxu0
        %v3455 = vadd.f32 %v3331, %v3454
        %3456 = vmatprep.mubr.bf16.mxu0 0
        %3457 = vmatmul.mubr.bf16.gmra.mrb[0].mxu0 %v3298
        %v3458 = vpop.f32.mrb[0].mxu0
        %v3459 = vadd.f32 %v3327, %v3458
        %v3460 = vpop.f32.mrb[0].mxu0
        %v3461 = vadd.f32 %v3331, %v3460
        %v3462 = vpop.f32.mrb[0].mxu0
        %v3463 = vadd.f32 %v3327, %v3462
        %v3464 = vpop.f32.mrb[0].mxu0
        %v3465 = vadd.f32 %v3331, %v3464
        %3466 = vmatprep.mubr.bf16.mxu0 0
        %3467 = vmatmul.mubr.bf16.gmra.mrb[0].mxu0 %v3299
        %v3468 = vpop.f32.mrb[0].mxu0
        %v3469 = vadd.f32 %v3327, %v3468
        %v3470 = vpop.f32.mrb[0].mxu0
        %v3471 = vadd.f32 %v3331, %v3470
        %v3472 = vpop.f32.mrb[0].mxu0
        %v3473 = vadd.f32 %v3327, %v3472
        %v3474 = vpop.f32.mrb[0].mxu0
        %v3475 = vadd.f32 %v3331, %v3474
        %3476 = vmatprep.mubr.bf16.mxu0 0
        %3477 = vmatmul.mubr.bf16.gmra.mrb[0].mxu0 %v3300
        %v3478 = vpop.f32.mrb[0].mxu0
        %v3479 = vadd.f32 %v3327, %v3478
        %v3480 = vpop.f32.mrb[0].mxu0
        %v3481 = vadd.f32 %v3331, %v3480
        %v3482 = vpop.f32.mrb[0].mxu0
        %v3483 = vadd.f32 %v3327, %v3482
        %v3484 = vpop.f32.mrb[0].mxu0
        %v3485 = vadd.f32 %v3331, %v3484
        %3486 = vmatprep.mubr.bf16.mxu0 0
        %3487 = vmatmul.mubr.bf16.gmra.mrb[0].mxu0 %v3301
        %v3488 = vpop.f32.mrb[0].mxu0
        %v3489 = vadd.f32 %v3327, %v3488
        %v3490 = vpop.f32.mrb[0].mxu0
        %v3491 = vadd.f32 %v3331, %v3490
        %v3492 = vpop.f32.mrb[0].mxu0
        %v3493 = vadd.f32 %v3327, %v3492
        %v3494 = vpop.f32.mrb[0].mxu0
        %v3495 = vadd.f32 %v3331, %v3494
        %3496 = vmatprep.mubr.bf16.mxu0 0
        %3497 = vmatmul.mubr.bf16.gmra.mrb[0].mxu0 %v3302
        %v3498 = vpop.f32.mrb[0].mxu0
        %v3499 = vadd.f32 %v3327, %v3498
        %v3500 = vpop.f32.mrb[0].mxu0
        %v3501 = vadd.f32 %v3331, %v3500
        %v3502 = vpop.f32.mrb[0].mxu0
        %v3503 = vadd.f32 %v3327, %v3502
        %v3504 = vpop.f32.mrb[0].mxu0
        %v3505 = vadd.f32 %v3331, %v3504
        %3506 = vmatprep.mubr.bf16.mxu0 0
        %3507 = vmatmul.mubr.bf16.gmra.mrb[0].mxu0 %v3303
        %v3508 = vpop.f32.mrb[0].mxu0
        %v3509 = vadd.f32 %v3327, %v3508
        %v3510 = vpop.f32.mrb[0].mxu0
        %v3511 = vadd.f32 %v3331, %v3510
        %v3512 = vpop.f32.mrb[0].mxu0
        %v3513 = vadd.f32 %v3327, %v3512
        %v3514 = vpop.f32.mrb[0].mxu0
        %v3515 = vadd.f32 %v3331, %v3514
        %3516 = vmatprep.mubr.bf16.mxu0 0
        %3517 = vmatmul.mubr.bf16.gmra.mrb[0].mxu0 %v3304
        %v3518 = vpop.f32.mrb[0].mxu0
        %v3519 = vadd.f32 %v3327, %v3518
        %v3520 = vpop.f32.mrb[0].mxu0
        %v3521 = vadd.f32 %v3331, %v3520
        %v3522 = vpop.f32.mrb[0].mxu0
        %v3523 = vadd.f32 %v3327, %v3522
        %v3524 = vpop.f32.mrb[0].mxu0
        %v3525 = vadd.f32 %v3331, %v3524
        %3526 = vdwg.mxu0
        %v3527 = vmax.f32 %v3449, 0.0
        %v3528 = vmax.f32 %v3451, 0.0
        %v3529 = vmax.f32 %v3453, 0.0
        %v3530 = vmax.f32 %v3455, 0.0
        %v3531 = vmax.f32 %v3459, 0.0
        %v3532 = vmax.f32 %v3461, 0.0
        %v3533 = vmax.f32 %v3463, 0.0
        %v3534 = vmax.f32 %v3465, 0.0
        %v3535 = vmax.f32 %v3469, 0.0
        %v3536 = vmax.f32 %v3471, 0.0
        %v3537 = vmax.f32 %v3473, 0.0
        %v3538 = vmax.f32 %v3475, 0.0
        %v3539 = vmax.f32 %v3479, 0.0
        %v3540 = vmax.f32 %v3481, 0.0
        %v3541 = vmax.f32 %v3483, 0.0
        %v3542 = vmax.f32 %v3485, 0.0
        %v3543 = vmax.f32 %v3489, 0.0
        %v3544 = vmax.f32 %v3491, 0.0
        %v3545 = vmax.f32 %v3493, 0.0
        %v3546 = vmax.f32 %v3495, 0.0
        %v3547 = vmax.f32 %v3499, 0.0
        %v3548 = vmax.f32 %v3501, 0.0
        %v3549 = vmax.f32 %v3503, 0.0
        %v3550 = vmax.f32 %v3505, 0.0
        %v3551 = vmax.f32 %v3509, 0.0
        %v3552 = vmax.f32 %v3511, 0.0
        %v3553 = vmax.f32 %v3513, 0.0
        %v3554 = vmax.f32 %v3515, 0.0
        %v3555 = vmax.f32 %v3519, 0.0
        %v3556 = vmax.f32 %v3521, 0.0
        %v3557 = vmax.f32 %v3523, 0.0
        %v3558 = vmax.f32 %v3525, 0.0
        %v3559 = vpack.c.bf16 %v3529, %v3527
        %v3560 = vpack.c.bf16 %v3530, %v3528
        %v3561 = vpack.c.bf16 %v3533, %v3531
        %v3562 = vpack.c.bf16 %v3534, %v3532
        %v3563 = vpack.c.bf16 %v3537, %v3535
        %v3564 = vpack.c.bf16 %v3538, %v3536
        %v3565 = vpack.c.bf16 %v3541, %v3539
        %v3566 = vpack.c.bf16 %v3542, %v3540
        %v3567 = vpack.c.bf16 %v3545, %v3543
        %v3568 = vpack.c.bf16 %v3546, %v3544
        %v3569 = vpack.c.bf16 %v3549, %v3547
        %v3570 = vpack.c.bf16 %v3550, %v3548
        %v3571 = vpack.c.bf16 %v3553, %v3551
        %v3572 = vpack.c.bf16 %v3554, %v3552
        %v3573 = vpack.c.bf16 %v3557, %v3555
        %v3574 = vpack.c.bf16 %v3558, %v3556
        %v3575 = vld [vmem:[%s3] sm:$0xf]
        %v3576 = vld [vmem:[%s3 + $0x4] sm:$0xf]
        %v3577 = vld [vmem:[%s3 + $0x8] sm:$0xf]
        %v3578 = vld [vmem:[%s3 + $0xc] sm:$0xf]
        %v3579 = vld [vmem:[%s3 + $0x10] sm:$0xf]
        %v3580 = vld [vmem:[%s3 + $0x14] sm:$0xf]
        %v3581 = vld [vmem:[%s3 + $0x18] sm:$0xf]
        %v3582 = vld [vmem:[%s3 + $0x1c] sm:$0xf]
        %v3583 = vld [vmem:[%s3 + $0x20] sm:$0xf]
        %v3584 = vld [vmem:[%s3 + $0x24] sm:$0xf]
        %v3585 = vld [vmem:[%s3 + $0x28] sm:$0xf]
        %v3586 = vld [vmem:[%s3 + $0x2c] sm:$0xf]
        %v3587 = vld [vmem:[%s3 + $0x30] sm:$0xf]
        %v3588 = vld [vmem:[%s3 + $0x34] sm:$0xf]
        %v3589 = vld [vmem:[%s3 + $0x38] sm:$0xf]
        %v3590 = vld [vmem:[%s3 + $0x3c] sm:$0xf]
        %v3591 = vld [vmem:[%s3 + $0x40] sm:$0xf]
        %v3592 = vld [vmem:[%s3 + $0x44] sm:$0xf]
        %v3593 = vld [vmem:[%s3 + $0x48] sm:$0xf]
        %v3594 = vld [vmem:[%s3 + $0x4c] sm:$0xf]
        %v3595 = vld [vmem:[%s3 + $0x50] sm:$0xf]
        %v3596 = vld [vmem:[%s3 + $0x54] sm:$0xf]
        %v3597 = vld [vmem:[%s3 + $0x58] sm:$0xf]
        %v3598 = vld [vmem:[%s3 + $0x5c] sm:$0xf]
        %v3599 = vld [vmem:[%s3 + $0x60] sm:$0xf]
        %v3600 = vld [vmem:[%s3 + $0x64] sm:$0xf]
        %v3601 = vld [vmem:[%s3 + $0x68] sm:$0xf]
        %v3602 = vld [vmem:[%s3 + $0x6c] sm:$0xf]
        %v3603 = vld [vmem:[%s3 + $0x70] sm:$0xf]
        %v3604 = vld [vmem:[%s3 + $0x74] sm:$0xf]
        %v3605 = vld [vmem:[%s3 + $0x78] sm:$0xf]
        %v3606 = vld [vmem:[%s3 + $0x7c] sm:$0xf]
        %v3607 = vld [vmem:[%s4 + $0x3] ss:$0 sm:$0xff]
        %v3640 = vunpack.c.l.b16 %v3575
        %v3641 = vunpack.c.l.b16 %v3576
        %v3642 = vunpack.c.l.b16 %v3577
        %v3643 = vunpack.c.l.b16 %v3578
        %v3644 = vunpack.c.l.b16 %v3579
        %v3645 = vunpack.c.l.b16 %v3580
        %v3646 = vunpack.c.l.b16 %v3581
        %v3647 = vunpack.c.l.b16 %v3582
        %v3648 = vunpack.c.l.b16 %v3583
        %v3649 = vunpack.c.l.b16 %v3584
        %v3650 = vunpack.c.l.b16 %v3585
        %v3651 = vunpack.c.l.b16 %v3586
        %v3652 = vunpack.c.l.b16 %v3587
        %v3653 = vunpack.c.l.b16 %v3588
        %v3654 = vunpack.c.l.b16 %v3589
        %v3655 = vunpack.c.l.b16 %v3590
        %v3656 = vunpack.c.l.b16 %v3591
        %v3657 = vunpack.c.l.b16 %v3592
        %v3658 = vunpack.c.l.b16 %v3593
        %v3659 = vunpack.c.l.b16 %v3594
        %v3660 = vunpack.c.l.b16 %v3595
        %v3661 = vunpack.c.l.b16 %v3596
        %v3662 = vunpack.c.l.b16 %v3597
        %v3663 = vunpack.c.l.b16 %v3598
        %v3664 = vunpack.c.l.b16 %v3599
        %v3665 = vunpack.c.l.b16 %v3600
        %v3666 = vunpack.c.l.b16 %v3601
        %v3667 = vunpack.c.l.b16 %v3602
        %v3668 = vunpack.c.l.b16 %v3603
        %v3669 = vunpack.c.l.b16 %v3604
        %v3670 = vunpack.c.l.b16 %v3605
        %v3671 = vunpack.c.l.b16 %v3606
        %v3672 = vpack.c.b16 %v3641, %v3640
        %v3673 = vpack.c.b16 %v3643, %v3642
        %v3674 = vpack.c.b16 %v3645, %v3644
        %v3675 = vpack.c.b16 %v3647, %v3646
        %v3676 = vpack.c.b16 %v3649, %v3648
        %v3677 = vpack.c.b16 %v3651, %v3650
        %v3678 = vpack.c.b16 %v3653, %v3652
        %v3679 = vpack.c.b16 %v3655, %v3654
        %v3680 = vpack.c.b16 %v3657, %v3656
        %v3681 = vpack.c.b16 %v3659, %v3658
        %v3682 = vpack.c.b16 %v3661, %v3660
        %v3683 = vpack.c.b16 %v3663, %v3662
        %v3684 = vpack.c.b16 %v3665, %v3664
        %v3685 = vpack.c.b16 %v3667, %v3666
        %v3686 = vpack.c.b16 %v3669, %v3668
        %v3687 = vpack.c.b16 %v3671, %v3670
        %3704 = vmatprep.subr.bf16.mxu0 0
        %3705 = vmatpush1.bf16.msra.mxu0 %v3672
        %3706 = vmatprep.subr.bf16.mxu0 0
        %3707 = vmatpush1.bf16.msra.mxu0 %v3673
        %3708 = vmatprep.subr.bf16.mxu0 0
        %3709 = vmatpush1.bf16.msra.mxu0 %v3674
        %3710 = vmatprep.subr.bf16.mxu0 0
        %3711 = vmatpush1.bf16.msra.mxu0 %v3675
        %3712 = vmatprep.subr.bf16.mxu0 0
        %3713 = vmatpush1.bf16.msra.mxu0 %v3676
        %3714 = vmatprep.subr.bf16.mxu0 0
        %3715 = vmatpush1.bf16.msra.mxu0 %v3677
        %3716 = vmatprep.subr.bf16.mxu0 0
        %3717 = vmatpush1.bf16.msra.mxu0 %v3678
        %3718 = vmatprep.subr.bf16.mxu0 0
        %3719 = vmatpush1.bf16.msra.mxu0 %v3679
        %3720 = vmatprep.subr.bf16.mxu0 0
        %3721 = vmatpush1.bf16.msra.mxu0 %v3680
        %3722 = vmatprep.subr.bf16.mxu0 0
        %3723 = vmatpush1.bf16.msra.mxu0 %v3681
        %3724 = vmatprep.subr.bf16.mxu0 0
        %3725 = vmatpush1.bf16.msra.mxu0 %v3682
        %3726 = vmatprep.subr.bf16.mxu0 0
        %3727 = vmatpush1.bf16.msra.mxu0 %v3683
        %3728 = vmatprep.subr.bf16.mxu0 0
        %3729 = vmatpush1.bf16.msra.mxu0 %v3684
        %3730 = vmatprep.subr.bf16.mxu0 0
        %3731 = vmatpush1.bf16.msra.mxu0 %v3685
        %3732 = vmatprep.subr.bf16.mxu0 0
        %3733 = vmatpush1.bf16.msra.mxu0 %v3686
        %3734 = vmatprep.subr.bf16.mxu0 0
        %3735 = vmatpush1.bf16.msra.mxu0 %v3687
        %3736 = vmatprep.mubr.bf16.mxu0 %v3560
        %3737 = vmatmul.mubr.bf16.gmra.mrb[0].mxu0 %v3559
        %v3738 = vpop.f32.mrb[0].mxu0
        %v3739 = vadd.f32 %v3607, %v3738
        %v3740 = vpop.f32.mrb[0].mxu0
        %v3741 = vpop.f32.mrb[0].mxu0
        %v3742 = vadd.f32 %v3607, %v3741
        %v3743 = vpop.f32.mrb[0].mxu0
        %3744 = vmatprep.mubr.bf16.mxu0 %v3562
        %3745 = vmatmul.mubr.bf16.gmra.mrb[0].mxu0 %v3561
        %v3746 = vpop.f32.mrb[0].mxu0
        %v3747 = vadd.f32 %v3607, %v3746
        %v3748 = vpop.f32.mrb[0].mxu0
        %v3749 = vpop.f32.mrb[0].mxu0
        %v3750 = vadd.f32 %v3607, %v3749
        %v3751 = vpop.f32.mrb[0].mxu0
        %3752 = vmatprep.mubr.bf16.mxu0 %v3564
        %3753 = vmatmul.mubr.bf16.gmra.mrb[0].mxu0 %v3563
        %v3754 = vpop.f32.mrb[0].mxu0
        %v3755 = vadd.f32 %v3607, %v3754
        %v3756 = vpop.f32.mrb[0].mxu0
        %v3757 = vpop.f32.mrb[0].mxu0
        %v3758 = vadd.f32 %v3607, %v3757
        %v3759 = vpop.f32.mrb[0].mxu0
        %3760 = vmatprep.mubr.bf16.mxu0 %v3566
        %3761 = vmatmul.mubr.bf16.gmra.mrb[0].mxu0 %v3565
        %v3762 = vpop.f32.mrb[0].mxu0
        %v3763 = vadd.f32 %v3607, %v3762
        %v3764 = vpop.f32.mrb[0].mxu0
        %v3765 = vpop.f32.mrb[0].mxu0
        %v3766 = vadd.f32 %v3607, %v3765
        %v3767 = vpop.f32.mrb[0].mxu0
        %3768 = vmatprep.mubr.bf16.mxu0 %v3568
        %3769 = vmatmul.mubr.bf16.gmra.mrb[0].mxu0 %v3567
        %v3770 = vpop.f32.mrb[0].mxu0
        %v3771 = vadd.f32 %v3607, %v3770
        %v3772 = vpop.f32.mrb[0].mxu0
        %v3773 = vpop.f32.mrb[0].mxu0
        %v3774 = vadd.f32 %v3607, %v3773
        %v3775 = vpop.f32.mrb[0].mxu0
        %3776 = vmatprep.mubr.bf16.mxu0 %v3570
        %3777 = vmatmul.mubr.bf16.gmra.mrb[0].mxu0 %v3569
        %v3778 = vpop.f32.mrb[0].mxu0
        %v3779 = vadd.f32 %v3607, %v3778
        %v3780 = vpop.f32.mrb[0].mxu0
        %v3781 = vpop.f32.mrb[0].mxu0
        %v3782 = vadd.f32 %v3607, %v3781
        %v3783 = vpop.f32.mrb[0].mxu0
        %3784 = vmatprep.mubr.bf16.mxu0 %v3572
        %3785 = vmatmul.mubr.bf16.gmra.mrb[0].mxu0 %v3571
        %v3786 = vpop.f32.mrb[0].mxu0
        %v3787 = vadd.f32 %v3607, %v3786
        %v3788 = vpop.f32.mrb[0].mxu0
        %v3789 = vpop.f32.mrb[0].mxu0
        %v3790 = vadd.f32 %v3607, %v3789
        %v3791 = vpop.f32.mrb[0].mxu0
        %3792 = vmatprep.mubr.bf16.mxu0 %v3574
        %3793 = vmatmul.mubr.bf16.gmra.mrb[0].mxu0 %v3573
        %v3794 = vpop.f32.mrb[0].mxu0
        %v3795 = vadd.f32 %v3607, %v3794
        %v3796 = vpop.f32.mrb[0].mxu0
        %v3797 = vpop.f32.mrb[0].mxu0
        %v3798 = vadd.f32 %v3607, %v3797
        %v3799 = vpop.f32.mrb[0].mxu0
        %3800 = vdwg.mxu0
        %v3801 = vadd.f32 %v3281, %v3739
        %v3802 = vadd.f32 %v3282, %v3742
        %v3803 = vadd.f32 %v3283, %v3747
        %v3804 = vadd.f32 %v3284, %v3750
        %v3805 = vadd.f32 %v3285, %v3755
        %v3806 = vadd.f32 %v3286, %v3758
        %v3807 = vadd.f32 %v3287, %v3763
        %v3808 = vadd.f32 %v3288, %v3766
        %v3809 = vadd.f32 %v3289, %v3771
        %v3810 = vadd.f32 %v3290, %v3774
        %v3811 = vadd.f32 %v3291, %v3779
        %v3812 = vadd.f32 %v3292, %v3782
        %v3813 = vadd.f32 %v3293, %v3787
        %v3814 = vadd.f32 %v3294, %v3790
        %v3815 = vadd.f32 %v3295, %v3795
        %v3816 = vadd.f32 %v3296, %v3798
        %3817 = vadd.xlane.f32.xlu0 %v3801
        %v3818 = vpop.xlane.xlu0 %3817
        %3819 = vadd.xlane.f32.xlu0 %v3802
        %v3820 = vpop.xlane.xlu0 %3819
        %3821 = vadd.xlane.f32.xlu0 %v3803
        %v3822 = vpop.xlane.xlu0 %3821
        %3823 = vadd.xlane.f32.xlu0 %v3804
        %v3824 = vpop.xlane.xlu0 %3823
        %3825 = vadd.xlane.f32.xlu0 %v3805
        %v3826 = vpop.xlane.xlu0 %3825
        %3827 = vadd.xlane.f32.xlu0 %v3806
        %v3828 = vpop.xlane.xlu0 %3827
        %3829 = vadd.xlane.f32.xlu0 %v3807
        %v3830 = vpop.xlane.xlu0 %3829
        %3831 = vadd.xlane.f32.xlu0 %v3808
        %v3832 = vpop.xlane.xlu0 %3831
        %3833 = vadd.xlane.f32.xlu0 %v3809
        %v3834 = vpop.xlane.xlu0 %3833
        %3835 = vadd.xlane.f32.xlu0 %v3810
        %v3836 = vpop.xlane.xlu0 %3835
        %3837 = vadd.xlane.f32.xlu0 %v3811
        %v3838 = vpop.xlane.xlu0 %3837
        %3839 = vadd.xlane.f32.xlu0 %v3812
        %v3840 = vpop.xlane.xlu0 %3839
        %3841 = vadd.xlane.f32.xlu0 %v3813
        %v3842 = vpop.xlane.xlu0 %3841
        %3843 = vadd.xlane.f32.xlu0 %v3814
        %v3844 = vpop.xlane.xlu0 %3843
        %3845 = vadd.xlane.f32.xlu0 %v3815
        %v3846 = vpop.xlane.xlu0 %3845
        %3847 = vadd.xlane.f32.xlu0 %v3816
        %v3848 = vpop.xlane.xlu0 %3847
        %v3849 = vmul.f32 %v3818, %v3118
        %v3850 = vmul.f32 %v3820, %v3118
        %v3851 = vmul.f32 %v3822, %v3118
        %v3852 = vmul.f32 %v3824, %v3118
        %v3853 = vmul.f32 %v3826, %v3118
        %v3854 = vmul.f32 %v3828, %v3118
        %v3855 = vmul.f32 %v3830, %v3118
        %v3856 = vmul.f32 %v3832, %v3118
        %v3857 = vmul.f32 %v3834, %v3118
        %v3858 = vmul.f32 %v3836, %v3118
        %v3859 = vmul.f32 %v3838, %v3118
        %v3860 = vmul.f32 %v3840, %v3118
        %v3861 = vmul.f32 %v3842, %v3118
        %v3862 = vmul.f32 %v3844, %v3118
        %v3863 = vmul.f32 %v3846, %v3118
        %v3864 = vmul.f32 %v3848, %v3118
        %v3865 = vsub.f32 %v3801, %v3849
        %v3866 = vsub.f32 %v3802, %v3850
        %v3867 = vsub.f32 %v3803, %v3851
        %v3868 = vsub.f32 %v3804, %v3852
        %v3869 = vsub.f32 %v3805, %v3853
        %v3870 = vsub.f32 %v3806, %v3854
        %v3871 = vsub.f32 %v3807, %v3855
        %v3872 = vsub.f32 %v3808, %v3856
        %v3873 = vsub.f32 %v3809, %v3857
        %v3874 = vsub.f32 %v3810, %v3858
        %v3875 = vsub.f32 %v3811, %v3859
        %v3876 = vsub.f32 %v3812, %v3860
        %v3877 = vsub.f32 %v3813, %v3861
        %v3878 = vsub.f32 %v3814, %v3862
        %v3879 = vsub.f32 %v3815, %v3863
        %v3880 = vsub.f32 %v3816, %v3864
        %v3881 = vmul.f32 %v3865, %v3865
        %v3882 = vmul.f32 %v3866, %v3866
        %v3883 = vmul.f32 %v3867, %v3867
        %v3884 = vmul.f32 %v3868, %v3868
        %v3885 = vmul.f32 %v3869, %v3869
        %v3886 = vmul.f32 %v3870, %v3870
        %v3887 = vmul.f32 %v3871, %v3871
        %v3888 = vmul.f32 %v3872, %v3872
        %v3889 = vmul.f32 %v3873, %v3873
        %v3890 = vmul.f32 %v3874, %v3874
        %v3891 = vmul.f32 %v3875, %v3875
        %v3892 = vmul.f32 %v3876, %v3876
        %v3893 = vmul.f32 %v3877, %v3877
        %v3894 = vmul.f32 %v3878, %v3878
        %v3895 = vmul.f32 %v3879, %v3879
        %v3896 = vmul.f32 %v3880, %v3880
        %3897 = vadd.xlane.f32.xlu0 %v3881
        %v3898 = vpop.xlane.xlu0 %3897
        %3899 = vadd.xlane.f32.xlu0 %v3882
        %v3900 = vpop.xlane.xlu0 %3899
        %3901 = vadd.xlane.f32.xlu0 %v3883
        %v3902 = vpop.xlane.xlu0 %3901
        %3903 = vadd.xlane.f32.xlu0 %v3884
        %v3904 = vpop.xlane.xlu0 %3903
        %3905 = vadd.xlane.f32.xlu0 %v3885
        %v3906 = vpop.xlane.xlu0 %3905
        %3907 = vadd.xlane.f32.xlu0 %v3886
        %v3908 = vpop.xlane.xlu0 %3907
        %3909 = vadd.xlane.f32.xlu0 %v3887
        %v3910 = vpop.xlane.xlu0 %3909
        %3911 = vadd.xlane.f32.xlu0 %v3888
        %v3912 = vpop.xlane.xlu0 %3911
        %3913 = vadd.xlane.f32.xlu0 %v3889
        %v3914 = vpop.xlane.xlu0 %3913
        %3915 = vadd.xlane.f32.xlu0 %v3890
        %v3916 = vpop.xlane.xlu0 %3915
        %3917 = vadd.xlane.f32.xlu0 %v3891
        %v3918 = vpop.xlane.xlu0 %3917
        %3919 = vadd.xlane.f32.xlu0 %v3892
        %v3920 = vpop.xlane.xlu0 %3919
        %3921 = vadd.xlane.f32.xlu0 %v3893
        %v3922 = vpop.xlane.xlu0 %3921
        %3923 = vadd.xlane.f32.xlu0 %v3894
        %v3924 = vpop.xlane.xlu0 %3923
        %3925 = vadd.xlane.f32.xlu0 %v3895
        %v3926 = vpop.xlane.xlu0 %3925
        %3927 = vadd.xlane.f32.xlu0 %v3896
        %v3928 = vpop.xlane.xlu0 %3927
        %v3929 = vmul.f32 %v3898, %v3118
        %v3930 = vmul.f32 %v3900, %v3118
        %v3931 = vmul.f32 %v3902, %v3118
        %v3932 = vmul.f32 %v3904, %v3118
        %v3933 = vmul.f32 %v3906, %v3118
        %v3934 = vmul.f32 %v3908, %v3118
        %v3935 = vmul.f32 %v3910, %v3118
        %v3936 = vmul.f32 %v3912, %v3118
        %v3937 = vmul.f32 %v3914, %v3118
        %v3938 = vmul.f32 %v3916, %v3118
        %v3939 = vmul.f32 %v3918, %v3118
        %v3940 = vmul.f32 %v3920, %v3118
        %v3941 = vmul.f32 %v3922, %v3118
        %v3942 = vmul.f32 %v3924, %v3118
        %v3943 = vmul.f32 %v3926, %v3118
        %v3944 = vmul.f32 %v3928, %v3118
        %v3945 = vadd.f32 %v3929, 1e-05
        %v3946 = vadd.f32 %v3930, 1e-05
        %v3947 = vadd.f32 %v3931, 1e-05
        %v3948 = vadd.f32 %v3932, 1e-05
        %v3949 = vadd.f32 %v3933, 1e-05
        %v3950 = vadd.f32 %v3934, 1e-05
        %v3951 = vadd.f32 %v3935, 1e-05
        %v3952 = vadd.f32 %v3936, 1e-05
        %v3953 = vadd.f32 %v3937, 1e-05
        %v3954 = vadd.f32 %v3938, 1e-05
        %v3955 = vadd.f32 %v3939, 1e-05
        %v3956 = vadd.f32 %v3940, 1e-05
        %v3957 = vadd.f32 %v3941, 1e-05
        %v3958 = vadd.f32 %v3942, 1e-05
        %v3959 = vadd.f32 %v3943, 1e-05
        %v3960 = vadd.f32 %v3944, 1e-05
        %v3961 = vrsqrt.pop %v3945
        %v3962 = vrsqrt.pop %v3946
        %v3963 = vrsqrt.pop %v3947
        %v3964 = vrsqrt.pop %v3948
        %v3965 = vrsqrt.pop %v3949
        %v3966 = vrsqrt.pop %v3950
        %v3967 = vrsqrt.pop %v3951
        %v3968 = vrsqrt.pop %v3952
        %v3969 = vrsqrt.pop %v3953
        %v3970 = vrsqrt.pop %v3954
        %v3971 = vrsqrt.pop %v3955
        %v3972 = vrsqrt.pop %v3956
        %v3973 = vrsqrt.pop %v3957
        %v3974 = vrsqrt.pop %v3958
        %v3975 = vrsqrt.pop %v3959
        %v3976 = vrsqrt.pop %v3960
        %v3977 = vmul.f32 %v3865, %v3961
        %v3978 = vmul.f32 %v3866, %v3962
        %v3979 = vmul.f32 %v3867, %v3963
        %v3980 = vmul.f32 %v3868, %v3964
        %v3981 = vmul.f32 %v3869, %v3965
        %v3982 = vmul.f32 %v3870, %v3966
        %v3983 = vmul.f32 %v3871, %v3967
        %v3984 = vmul.f32 %v3872, %v3968
        %v3985 = vmul.f32 %v3873, %v3969
        %v3986 = vmul.f32 %v3874, %v3970
        %v3987 = vmul.f32 %v3875, %v3971
        %v3988 = vmul.f32 %v3876, %v3972
        %v3989 = vmul.f32 %v3877, %v3973
        %v3990 = vmul.f32 %v3878, %v3974
        %v3991 = vmul.f32 %v3879, %v3975
        %v3992 = vmul.f32 %v3880, %v3976
        %v3993 = vld [vmem:[%s4 + $0x6] ss:$0 sm:$0xff]
        %v3994 = vmul.f32 %v3977, %v3993
        %v3995 = vmul.f32 %v3978, %v3993
        %v3996 = vmul.f32 %v3979, %v3993
        %v3997 = vmul.f32 %v3980, %v3993
        %v3998 = vmul.f32 %v3981, %v3993
        %v3999 = vmul.f32 %v3982, %v3993
        %v4000 = vmul.f32 %v3983, %v3993
        %v4001 = vmul.f32 %v3984, %v3993
        %v4002 = vmul.f32 %v3985, %v3993
        %v4003 = vmul.f32 %v3986, %v3993
        %v4004 = vmul.f32 %v3987, %v3993
        %v4005 = vmul.f32 %v3988, %v3993
        %v4006 = vmul.f32 %v3989, %v3993
        %v4007 = vmul.f32 %v3990, %v3993
        %v4008 = vmul.f32 %v3991, %v3993
        %v4009 = vmul.f32 %v3992, %v3993
        %v4010 = vld [vmem:[%s4 + $0x7] ss:$0 sm:$0xff]
        %v4011 = vadd.f32 %v3994, %v4010
        %v4012 = vadd.f32 %v3995, %v4010
        %v4013 = vadd.f32 %v3996, %v4010
        %v4014 = vadd.f32 %v3997, %v4010
        %v4015 = vadd.f32 %v3998, %v4010
        %v4016 = vadd.f32 %v3999, %v4010
        %v4017 = vadd.f32 %v4000, %v4010
        %v4018 = vadd.f32 %v4001, %v4010
        %v4019 = vadd.f32 %v4002, %v4010
        %v4020 = vadd.f32 %v4003, %v4010
        %v4021 = vadd.f32 %v4004, %v4010
        %v4022 = vadd.f32 %v4005, %v4010
        %v4023 = vadd.f32 %v4006, %v4010
        %v4024 = vadd.f32 %v4007, %v4010
        %v4025 = vadd.f32 %v4008, %v4010
        %v4026 = vadd.f32 %v4009, %v4010
        %4027 = vst [vmem:[%s232] sm:$0xff] %v4011
        %4028 = vst [vmem:[%s232 + $0x8] sm:$0xff] %v4012
        %4029 = vst [vmem:[%s232 + $0x10] sm:$0xff] %v4013
        %4030 = vst [vmem:[%s232 + $0x18] sm:$0xff] %v4014
        %4031 = vst [vmem:[%s232 + $0x20] sm:$0xff] %v4015
        %4032 = vst [vmem:[%s232 + $0x28] sm:$0xff] %v4016
        %4033 = vst [vmem:[%s232 + $0x30] sm:$0xff] %v4017
        %4034 = vst [vmem:[%s232 + $0x38] sm:$0xff] %v4018
        %4035 = vst [vmem:[%s232 + $0x40] sm:$0xff] %v4019
        %4036 = vst [vmem:[%s232 + $0x48] sm:$0xff] %v4020
        %4037 = vst [vmem:[%s232 + $0x50] sm:$0xff] %v4021
        %4038 = vst [vmem:[%s232 + $0x58] sm:$0xff] %v4022
        %4039 = vst [vmem:[%s232 + $0x60] sm:$0xff] %v4023
        %4040 = vst [vmem:[%s232 + $0x68] sm:$0xff] %v4024
        %4041 = vst [vmem:[%s232 + $0x70] sm:$0xff] %v4025
        %4042 = vst [vmem:[%s232 + $0x78] sm:$0xff] %v4026
        %s4043 = sand.u32 %s142, 1
        %s4044 = scalar_lea.sflag [#allocation3], %s4043
        %s4045 = sand.u32 %s142, 1
        %s4046 = smul.addr %s4045, 128
        %s4047 = scalar_lea.vmem [#allocation2], %s4046
        // Predicated region
        $region41: #{apply.1} parent=39 // pred_check
          %p4048 = pneg %p152
        $region42: #{apply.1} parent=39 // pred_check_branch
          %4050 = sbr.rel (%p4048) target = $region44
        $region43: #{apply.1} parent=39 // pred_region
          %s4052 = ssub.s32 2048, 2048
          %4053 = vsyncadd %s4044, %s4052
          %s4054 = smul.addr %s19, 16
          %s4055 = smul.addr %s4054, 128
          %s4056 = scalar_lea.hbm %s5, %s4055
          %s4057 = sshll.u32 %s4047, 4
          %s4058 = int_to_ptr.vmem [resolvable:$true] %s4057
          %4063 = dma.vmem_to_hbm [thread:$0]  %s4058, 2048, %s4056, %s4044, 128, 128, 8
        $region44: #{apply.1} parent=39 // pred_fallthru
          _
      $region40: #{apply.1} parent=5 // pred_fallthru
        _
      %p4064 = scmp.le.s32.totalorder 2, %s14
      // Predicated region
      $region45: #{apply.1} parent=5 // pred_check
        %p4065 = pneg %p4064
      $region46: #{apply.1} parent=5 // pred_check_branch
        %4067 = sbr.rel (%p4065) target = $region48
      $region47: #{apply.1} parent=5 // pred_region
        %s4068 = ssub.s32 %s14, 2
        // Predicated region
        $region49: #{apply.1} parent=47 // pred_check
          %p4069 = pneg %p158
        $region50: #{apply.1} parent=47 // pred_check_branch
          %4071 = sbr.rel (%p4069) target = $region52
        $region51: #{apply.1} parent=47 // pred_region
          %s4072 = sand.u32 %s143, 1
          %s4073 = scalar_lea.sflag [#allocation3], %s4072
          %s4074 = sand.u32 %s143, 1
          %s4075 = smul.addr %s4074, 128
          %s4076 = scalar_lea.vmem [#allocation2], %s4075
          %4077 = dma.done %s4073, 2048
        $region52: #{apply.1} parent=47 // pred_fallthru
          _
      $region48: #{apply.1} parent=5 // pred_fallthru
        _
    $region6: #{apply.1} parent=1 // loop_footer
      %s18 = sadd.s32 1, %s14
    $region7: #{apply.1} parent=1 // loop_footer_branch
      %13 = sbr.rel target = $region3
    $region8: #{apply.1} parent=1 // loop_exit
      _
    %4078 = vsyncpa [#allocation3], 1
    %s4079 = scalar_lea.sflag [#allocation3], 1
    %4080 = vsyncpa %s4079, 1

</llo_original>
